<compile_context>
chip_gen: v7x
topology: tpu7x:2x2x1
jax: 0.10.0
libtpu: 0.0.40
codegen_flags: <defaults>
</compile_context>

<pallas_src>
import jax
import jax.numpy as jnp
from jax.experimental import pallas as pl
from jax.experimental.pallas import tpu as pltpu


def _relu6(x):
    return jnp.minimum(jnp.maximum(x, 0.0), 6.0)


def mobilev1_residual_kernel(
    x_ref,
    dw1_ref, b1a_ref, pw1_ref, b1b_ref,
    dw2_ref, b2a_ref, pw2_ref, b2b_ref,
    o_ref,
    pad_ref,
):
    nb, H, W, C = x_ref.shape
    M = nb * H * W

    # Zero only the 1-wide halo border of the scratch, once per grid step (the interior is fully
    # overwritten by each block).  Done every step — not under program_id()==0 — so correctness
    # never depends on which TensorCore ran step 0 when the "parallel" batch axis is split (v7x).
    zrow = jnp.zeros((nb, 1, W + 2, C), jnp.float32)
    zcol = jnp.zeros((nb, H, 1, C), jnp.float32)
    pad_ref[:, 0:1, :, :] = zrow
    pad_ref[:, H + 1:H + 2, :, :] = zrow
    pad_ref[:, 1:H + 1, 0:1, :] = zcol
    pad_ref[:, 1:H + 1, W + 1:W + 2, :] = zcol

    x = x_ref[...].astype(jnp.float32)                        # (nb, H, W, C)

    def dws_block(inp_4d, dw_ref, ba_ref, pw_ref, bb_ref, second_relu):
        # ---- depthwise 3x3, stride 1, pad 1 --------------------------------------------------
        # Write the interior once, then read only the THREE dx-shifted slabs (full padded height)
        # and reuse each across its three dy taps via leading-dim slices of the loaded value.
        # 3 relayout reads per block instead of 9 (review item 2).
        pad_ref[:, 1:H + 1, 1:W + 1, :] = inp_4d
        dw = dw_ref[...]                                      # (9, C), BN scale pre-folded
        acc = None
        for dx in range(3):                                   # static unroll
            a = pad_ref[:, :, dx:dx + W, :]                   # (nb, H+2, W, C): one shifted read
            contrib = (a[:, 0:H] * dw[0 + dx]                 # tap (dy=-1, dx-1)
                       + a[:, 1:H + 1] * dw[3 + dx]           # tap (dy= 0, dx-1)
                       + a[:, 2:H + 2] * dw[6 + dx])          # tap (dy=+1, dx-1)
            acc = contrib if acc is None else acc + contrib
        # ---- BN (scale already folded into dw) -> bias -> ReLU6 ------------------------------
        # (M, C) view only merges leading dims (W % 8 == 0), so the reshape is layout-preserving.
        y = _relu6(acc.reshape(M, C) + ba_ref[0])
        # ---- pointwise 1x1 conv == one (M, C) x (C, C) MXU matmul; BN scale pre-folded -------
        # NOTE(MXU): at C=32 this uses only ~1-6% of the MXU; that is fine — the kernel is bound
        # by VPU work and masked stores at this channel count, so the MXU path stays untouched.
        z = jnp.dot(y, pw_ref[...], preferred_element_type=jnp.float32) + bb_ref[0]
        if second_relu:
            z = _relu6(z)
        return z                                              # (M, C), f32

    h1 = dws_block(x, dw1_ref, b1a_ref, pw1_ref, b1b_ref, True)
    h2 = dws_block(h1.reshape(nb, H, W, C), dw2_ref, b2a_ref, pw2_ref, b2b_ref, False)
    out = h2 + x.reshape(M, C)                                # residual add (downsample=None)

    # NOTE(lane density): C=32 < 128 -> masked stores / 32 of 128 lanes used by elementwise work.
    # Kept deliberately: the lane-dense (nb, H, W*C) alternative needs a minor-dim relayout around
    # the matmuls that Mosaic does not reliably lower; at C >= 128 this concern disappears.
    o_ref[...] = out.reshape(nb, H, W, C).astype(o_ref.dtype)


def _round_up(v, m):
    return -(-v // m) * m


def _tpu_budget():
    """Per-generation (budget_bytes, vmem_limit_bytes_or_None, prefer_even_steps)."""
    try:
        kind = jax.devices()[0].device_kind.lower()
    except Exception:
        kind = ""
    if "v7" in kind:                                   # 64 MiB VMEM part, 2 TensorCores
        return 16 << 20, 32 << 20, True
    if ("v6" in kind) or ("trillium" in kind) or ("v5 lite" in kind) or ("v5e" in kind) \
            or ("v5lite" in kind):                     # 128 MiB physical VMEM, single TC
        return 32 << 20, 64 << 20, False
    return 8 << 20, None, False                        # unknown part: stay conservative


def _pick_batch_block(N, H, W, C, *, budget_bytes, prefer_even_steps):
    """Largest divisor of N whose per-step VMEM footprint fits budget_bytes.

    Footprint is honest about what actually lives in VMEM per step: lane/sublane-padded
    double-buffered in+out blocks, the halo scratch, and ~6 full-size f32 live temporaries
    (x, current dx-slab, acc, y/z, h1).  On v7x an even number of grid steps is preferred so the
    two TensorCores get balanced halves of the "parallel" batch axis; on single-TC v5e/v6e the
    largest block wins even if that means a 1-step grid.
    """
    lanes = _round_up(C, 128)
    per_img_io = H * _round_up(W, 8) * lanes * 4
    per_img_halo = (H + 2) * _round_up(W + 2, 8) * lanes * 4
    per_img_tmp = 6 * per_img_io

    def footprint(d):
        return 2 * 2 * d * per_img_io + d * per_img_halo + d * per_img_tmp

    cands = [d for d in range(1, N + 1) if N % d == 0 and footprint(d) <= budget_bytes]
    if not cands:
        return 1
    if prefer_even_steps:
        even = [d for d in cands if (N // d) % 2 == 0]
        if even:
            return max(even)
    return max(cands)


def mobilev1_residual(x, params, batch_block=None):
    """MobileV1_Residual forward (stride=1, pad=1, dilation=1, downsample=None), NHWC, eval-mode BN."""
    N, H, W, C = x.shape
    (dw1, s1a, b1a, pw1, s1b, b1b, dw2, s2a, b2a, pw2, s2b, b2b) = params

    # Fold the BatchNorm *scales* into the conv weights host-side (review item 1); the kernel then
    # applies only a per-channel bias after each conv.
    dw1f = dw1 * s1a            # (9, C)  * (1, C)
    pw1f = pw1 * s1b            # (C, C)  * (1, C)   -> scales output channels
    dw2f = dw2 * s2a
    pw2f = pw2 * s2b

    budget, vmem_limit, prefer_even = _tpu_budget()
    nb = batch_block if batch_block is not None else _pick_batch_block(
        N, H, W, C, budget_bytes=budget, prefer_even_steps=prefer_even)
    assert N % nb == 0, "batch_block must divide the batch size"

    def const_spec(shape):
        return pl.BlockSpec(shape, lambda b, _n=len(shape): (0,) * _n)

    io_spec = pl.BlockSpec((nb, H, W, C), lambda b: (b, 0, 0, 0))

    return pl.pallas_call(
        mobilev1_residual_kernel,
        out_shape=jax.ShapeDtypeStruct((N, H, W, C), x.dtype),
        grid_spec=pltpu.PrefetchScalarGridSpec(
            num_scalar_prefetch=0,
            grid=(N // nb,),
            in_specs=[
                io_spec,
                const_spec(dw1f.shape), const_spec(b1a.shape),
                const_spec(pw1f.shape), const_spec(b1b.shape),
                const_spec(dw2f.shape), const_spec(b2a.shape),
                const_spec(pw2f.shape), const_spec(b2b.shape),
            ],
            out_specs=io_spec,
            scratch_shapes=[pltpu.VMEM((nb, H + 2, W + 2, C), jnp.float32)],
        ),
        compiler_params=pltpu.CompilerParams(
            dimension_semantics=("parallel",),   # batch blocks independent -> v7x megacore
            vmem_limit_bytes=vmem_limit,
        ),
    )(x, dw1f, b1a, pw1f, b1b, dw2f, b2a, pw2f, b2b)


def init_params(key, inplanes, planes, eps=1e-5):
    assert inplanes == planes, "residual path with downsample=None requires inplanes == planes"
    ks = jax.random.split(key, 20)

    def bn_fold(kg, kb, km, kv, c):
        gamma = 1.0 + 0.1 * jax.random.normal(kg, (c,), jnp.float32)
        beta = 0.1 * jax.random.normal(kb, (c,), jnp.float32)
        mean = 0.1 * jax.random.normal(km, (c,), jnp.float32)
        var = jnp.abs(jax.random.normal(kv, (c,), jnp.float32)) + 0.5
        scale = gamma / jnp.sqrt(var + eps)
        bias = beta - mean * scale
        return scale.reshape(1, c), bias.reshape(1, c)

    dw1 = 0.2 * jax.random.normal(ks[0], (9, inplanes), jnp.float32)   # depthwise 3x3 taps
    pw1 = 0.2 * jax.random.normal(ks[1], (inplanes, planes), jnp.float32)
    dw2 = 0.2 * jax.random.normal(ks[2], (9, planes), jnp.float32)
    pw2 = 0.2 * jax.random.normal(ks[3], (planes, planes), jnp.float32)
    s1a, b1a = bn_fold(ks[4], ks[5], ks[6], ks[7], inplanes)
    s1b, b1b = bn_fold(ks[8], ks[9], ks[10], ks[11], planes)
    s2a, b2a = bn_fold(ks[12], ks[13], ks[14], ks[15], planes)
    s2b, b2b = bn_fold(ks[16], ks[17], ks[18], ks[19], planes)
    return (dw1, s1a, b1a, pw1, s1b, b1b, dw2, s2a, b2a, pw2, s2b, b2b)


def reference(x, params):
    """Pure-JAX reference of the same forward pass (NHWC), using the UNFUSED scale/bias."""
    dw1, s1a, b1a, pw1, s1b, b1b, dw2, s2a, b2a, pw2, s2b, b2b = params

    def dws(x, dw9, sa, ba, pw, sb, bb, second_relu):
        c = x.shape[-1]
        dw = dw9.reshape(3, 3, 1, c)
        y = jax.lax.conv_general_dilated(
            x, dw, window_strides=(1, 1), padding=((1, 1), (1, 1)),
            dimension_numbers=("NHWC", "HWIO", "NHWC"),
            feature_group_count=c)
        y = _relu6(y * sa.reshape(1, 1, 1, c) + ba.reshape(1, 1, 1, c))
        y = jnp.einsum("nhwc,cd->nhwd", y, pw)
        y = y * sb.reshape(1, 1, 1, -1) + bb.reshape(1, 1, 1, -1)
        if second_relu:
            y = _relu6(y)
        return y

    out = dws(x, dw1, s1a, b1a, pw1, s1b, b1b, True)
    out = dws(out, dw2, s2a, b2a, pw2, s2b, b2b, False)
    return out + x


if __name__ == "__main__":
    N, H, W = 2, 16, 16
    inplanes = planes = 32

    key = jax.random.PRNGKey(0)
    kx, kp = jax.random.split(key)
    x = jax.random.normal(kx, (N, H, W, inplanes), jnp.float32)
    params = init_params(kp, inplanes, planes)

    out = jax.block_until_ready(mobilev1_residual(x, params))
    ref = reference(x, params)

    assert out.shape == ref.shape == (N, H, W, planes)
    max_err = float(jnp.max(jnp.abs(out - ref)))
    assert max_err < 1e-3, f"max abs error {max_err}"
    print("KERNEL_OK")
</pallas_src>

<mosaic_0001>
module attributes {stable_mosaic.version = 11 : i64} {
  func.func @mobilev1_residual_kernel(%arg0: i32, %arg1: memref<2x16x16x32xf32, #tpu.memory_space<vmem>>, %arg2: memref<9x32xf32, #tpu.memory_space<vmem>>, %arg3: memref<1x32xf32, #tpu.memory_space<vmem>>, %arg4: memref<32x32xf32, #tpu.memory_space<vmem>>, %arg5: memref<1x32xf32, #tpu.memory_space<vmem>>, %arg6: memref<9x32xf32, #tpu.memory_space<vmem>>, %arg7: memref<1x32xf32, #tpu.memory_space<vmem>>, %arg8: memref<32x32xf32, #tpu.memory_space<vmem>>, %arg9: memref<1x32xf32, #tpu.memory_space<vmem>>, %arg10: memref<2x16x16x32xf32, #tpu.memory_space<vmem>>, %arg11: memref<2x18x18x32xf32, #tpu.memory_space<vmem>>) attributes {dimension_semantics = [#tpu.dimension_semantics<parallel>], iteration_bounds = array<i64: 1>, scalar_prefetch = 0 : i64, scratch_operands = 1 : i64, tpu.core_type = #tpu.core_type<tc>, window_params = [{transform_indices = @transform_0, window_bounds = array<i64: 2, 16, 16, 32>}, {pipeline_mode = #tpu.pipeline_mode<synchronous>, transform_indices = @transform_1, window_bounds = array<i64: 9, 32>}, {pipeline_mode = #tpu.pipeline_mode<synchronous>, transform_indices = @transform_2, window_bounds = array<i64: 1, 32>}, {pipeline_mode = #tpu.pipeline_mode<synchronous>, transform_indices = @transform_3, window_bounds = array<i64: 32, 32>}, {pipeline_mode = #tpu.pipeline_mode<synchronous>, transform_indices = @transform_4, window_bounds = array<i64: 1, 32>}, {pipeline_mode = #tpu.pipeline_mode<synchronous>, transform_indices = @transform_5, window_bounds = array<i64: 9, 32>}, {pipeline_mode = #tpu.pipeline_mode<synchronous>, transform_indices = @transform_6, window_bounds = array<i64: 1, 32>}, {pipeline_mode = #tpu.pipeline_mode<synchronous>, transform_indices = @transform_7, window_bounds = array<i64: 32, 32>}, {pipeline_mode = #tpu.pipeline_mode<synchronous>, transform_indices = @transform_8, window_bounds = array<i64: 1, 32>}, {transform_indices = @transform_9, window_bounds = array<i64: 2, 16, 16, 32>}]} {
    %cst = arith.constant 0.000000e+00 : f32
    %0 = vector.broadcast %cst : f32 to vector<2x1x18x32xf32>
    %cst_0 = arith.constant 0.000000e+00 : f32
    %1 = vector.broadcast %cst_0 : f32 to vector<2x16x1x32xf32>
    %c0 = arith.constant 0 : index
    %c0_1 = arith.constant 0 : index
    %c0_2 = arith.constant 0 : index
    %c0_3 = arith.constant 0 : index
    %2 = vector.load %arg11[%c0, %c0_1, %c0_2, %c0_3] : memref<2x18x18x32xf32, #tpu.memory_space<vmem>>, vector<2x1x18x32xf32>
    tpu.vector_store %arg11[%c0, %c0_1, %c0_2, %c0_3], %0 {strides = array<i32>} : memref<2x18x18x32xf32, #tpu.memory_space<vmem>>, vector<2x1x18x32xf32>,
    %c0_4 = arith.constant 0 : index
    %c17 = arith.constant 17 : index
    %c0_5 = arith.constant 0 : index
    %c0_6 = arith.constant 0 : index
    %3 = vector.load %arg11[%c0_4, %c17, %c0_5, %c0_6] : memref<2x18x18x32xf32, #tpu.memory_space<vmem>>, vector<2x1x18x32xf32>
    tpu.vector_store %arg11[%c0_4, %c17, %c0_5, %c0_6], %0 {strides = array<i32>} : memref<2x18x18x32xf32, #tpu.memory_space<vmem>>, vector<2x1x18x32xf32>,
    %c0_7 = arith.constant 0 : index
    %c1 = arith.constant 1 : index
    %c0_8 = arith.constant 0 : index
    %c0_9 = arith.constant 0 : index
    %4 = vector.load %arg11[%c0_7, %c1, %c0_8, %c0_9] : memref<2x18x18x32xf32, #tpu.memory_space<vmem>>, vector<2x16x1x32xf32>
    tpu.vector_store %arg11[%c0_7, %c1, %c0_8, %c0_9], %1 {strides = array<i32>} : memref<2x18x18x32xf32, #tpu.memory_space<vmem>>, vector<2x16x1x32xf32>,
    %c0_10 = arith.constant 0 : index
    %c1_11 = arith.constant 1 : index
    %c17_12 = arith.constant 17 : index
    %c0_13 = arith.constant 0 : index
    %5 = vector.load %arg11[%c0_10, %c1_11, %c17_12, %c0_13] : memref<2x18x18x32xf32, #tpu.memory_space<vmem>>, vector<2x16x1x32xf32>
    tpu.vector_store %arg11[%c0_10, %c1_11, %c17_12, %c0_13], %1 {strides = array<i32>} : memref<2x18x18x32xf32, #tpu.memory_space<vmem>>, vector<2x16x1x32xf32>,
    %c0_14 = arith.constant 0 : index
    %c0_15 = arith.constant 0 : index
    %c0_16 = arith.constant 0 : index
    %c0_17 = arith.constant 0 : index
    %6 = vector.load %arg1[%c0_14, %c0_15, %c0_16, %c0_17] : memref<2x16x16x32xf32, #tpu.memory_space<vmem>>, vector<2x16x16x32xf32>
    %c0_18 = arith.constant 0 : index
    %c1_19 = arith.constant 1 : index
    %c1_20 = arith.constant 1 : index
    %c0_21 = arith.constant 0 : index
    %7 = vector.load %arg11[%c0_18, %c1_19, %c1_20, %c0_21] : memref<2x18x18x32xf32, #tpu.memory_space<vmem>>, vector<2x16x16x32xf32>
    tpu.vector_store %arg11[%c0_18, %c1_19, %c1_20, %c0_21], %6 {strides = array<i32>} : memref<2x18x18x32xf32, #tpu.memory_space<vmem>>, vector<2x16x16x32xf32>,
    %c0_22 = arith.constant 0 : index
    %c0_23 = arith.constant 0 : index
    %8 = vector.load %arg2[%c0_22, %c0_23] : memref<9x32xf32, #tpu.memory_space<vmem>>, vector<9x32xf32>
    %c0_24 = arith.constant 0 : index
    %c0_25 = arith.constant 0 : index
    %c0_26 = arith.constant 0 : index
    %c0_27 = arith.constant 0 : index
    %9 = vector.load %arg11[%c0_24, %c0_25, %c0_26, %c0_27] : memref<2x18x18x32xf32, #tpu.memory_space<vmem>>, vector<2x18x16x32xf32>
    %10 = vector.extract_strided_slice %9 {offsets = [0, 0, 0, 0], sizes = [2, 16, 16, 32], strides = [1, 1, 1, 1]} : vector<2x18x16x32xf32> to vector<2x16x16x32xf32>
    %11 = vector.extract_strided_slice %8 {offsets = [0, 0], sizes = [1, 32], strides = [1, 1]} : vector<9x32xf32> to vector<1x32xf32>
    %12 = vector.shape_cast %11 : vector<1x32xf32> to vector<32xf32>
    %13 = vector.shape_cast %12 : vector<32xf32> to vector<1x1x1x32xf32>
    %14 = vector.broadcast %13 : vector<1x1x1x32xf32> to vector<2x16x16x32xf32>
    %15 = arith.mulf %10, %14 : vector<2x16x16x32xf32>
    %16 = vector.extract_strided_slice %9 {offsets = [0, 1, 0, 0], sizes = [2, 16, 16, 32], strides = [1, 1, 1, 1]} : vector<2x18x16x32xf32> to vector<2x16x16x32xf32>
    %17 = vector.extract_strided_slice %8 {offsets = [3, 0], sizes = [1, 32], strides = [1, 1]} : vector<9x32xf32> to vector<1x32xf32>
    %18 = vector.shape_cast %17 : vector<1x32xf32> to vector<32xf32>
    %19 = vector.shape_cast %18 : vector<32xf32> to vector<1x1x1x32xf32>
    %20 = vector.broadcast %19 : vector<1x1x1x32xf32> to vector<2x16x16x32xf32>
    %21 = arith.mulf %16, %20 : vector<2x16x16x32xf32>
    %22 = arith.addf %15, %21 : vector<2x16x16x32xf32>
    %23 = vector.extract_strided_slice %9 {offsets = [0, 2, 0, 0], sizes = [2, 16, 16, 32], strides = [1, 1, 1, 1]} : vector<2x18x16x32xf32> to vector<2x16x16x32xf32>
    %24 = vector.extract_strided_slice %8 {offsets = [6, 0], sizes = [1, 32], strides = [1, 1]} : vector<9x32xf32> to vector<1x32xf32>
    %25 = vector.shape_cast %24 : vector<1x32xf32> to vector<32xf32>
    %26 = vector.shape_cast %25 : vector<32xf32> to vector<1x1x1x32xf32>
    %27 = vector.broadcast %26 : vector<1x1x1x32xf32> to vector<2x16x16x32xf32>
    %28 = arith.mulf %23, %27 : vector<2x16x16x32xf32>
    %29 = arith.addf %22, %28 : vector<2x16x16x32xf32>
    %c0_28 = arith.constant 0 : index
    %c0_29 = arith.constant 0 : index
    %c1_30 = arith.constant 1 : index
    %c0_31 = arith.constant 0 : index
    %30 = vector.load %arg11[%c0_28, %c0_29, %c1_30, %c0_31] : memref<2x18x18x32xf32, #tpu.memory_space<vmem>>, vector<2x18x16x32xf32>
    %31 = vector.extract_strided_slice %30 {offsets = [0, 0, 0, 0], sizes = [2, 16, 16, 32], strides = [1, 1, 1, 1]} : vector<2x18x16x32xf32> to vector<2x16x16x32xf32>
    %32 = vector.extract_strided_slice %8 {offsets = [1, 0], sizes = [1, 32], strides = [1, 1]} : vector<9x32xf32> to vector<1x32xf32>
    %33 = vector.shape_cast %32 : vector<1x32xf32> to vector<32xf32>
    %34 = vector.shape_cast %33 : vector<32xf32> to vector<1x1x1x32xf32>
    %35 = vector.broadcast %34 : vector<1x1x1x32xf32> to vector<2x16x16x32xf32>
    %36 = arith.mulf %31, %35 : vector<2x16x16x32xf32>
    %37 = vector.extract_strided_slice %30 {offsets = [0, 1, 0, 0], sizes = [2, 16, 16, 32], strides = [1, 1, 1, 1]} : vector<2x18x16x32xf32> to vector<2x16x16x32xf32>
    %38 = vector.extract_strided_slice %8 {offsets = [4, 0], sizes = [1, 32], strides = [1, 1]} : vector<9x32xf32> to vector<1x32xf32>
    %39 = vector.shape_cast %38 : vector<1x32xf32> to vector<32xf32>
    %40 = vector.shape_cast %39 : vector<32xf32> to vector<1x1x1x32xf32>
    %41 = vector.broadcast %40 : vector<1x1x1x32xf32> to vector<2x16x16x32xf32>
    %42 = arith.mulf %37, %41 : vector<2x16x16x32xf32>
    %43 = arith.addf %36, %42 : vector<2x16x16x32xf32>
    %44 = vector.extract_strided_slice %30 {offsets = [0, 2, 0, 0], sizes = [2, 16, 16, 32], strides = [1, 1, 1, 1]} : vector<2x18x16x32xf32> to vector<2x16x16x32xf32>
    %45 = vector.extract_strided_slice %8 {offsets = [7, 0], sizes = [1, 32], strides = [1, 1]} : vector<9x32xf32> to vector<1x32xf32>
    %46 = vector.shape_cast %45 : vector<1x32xf32> to vector<32xf32>
    %47 = vector.shape_cast %46 : vector<32xf32> to vector<1x1x1x32xf32>
    %48 = vector.broadcast %47 : vector<1x1x1x32xf32> to vector<2x16x16x32xf32>
    %49 = arith.mulf %44, %48 : vector<2x16x16x32xf32>
    %50 = arith.addf %43, %49 : vector<2x16x16x32xf32>
    %51 = arith.addf %29, %50 : vector<2x16x16x32xf32>
    %c0_32 = arith.constant 0 : index
    %c0_33 = arith.constant 0 : index
    %c2 = arith.constant 2 : index
    %c0_34 = arith.constant 0 : index
    %52 = vector.load %arg11[%c0_32, %c0_33, %c2, %c0_34] : memref<2x18x18x32xf32, #tpu.memory_space<vmem>>, vector<2x18x16x32xf32>
    %53 = vector.extract_strided_slice %52 {offsets = [0, 0, 0, 0], sizes = [2, 16, 16, 32], strides = [1, 1, 1, 1]} : vector<2x18x16x32xf32> to vector<2x16x16x32xf32>
    %54 = vector.extract_strided_slice %8 {offsets = [2, 0], sizes = [1, 32], strides = [1, 1]} : vector<9x32xf32> to vector<1x32xf32>
    %55 = vector.shape_cast %54 : vector<1x32xf32> to vector<32xf32>
    %56 = vector.shape_cast %55 : vector<32xf32> to vector<1x1x1x32xf32>
    %57 = vector.broadcast %56 : vector<1x1x1x32xf32> to vector<2x16x16x32xf32>
    %58 = arith.mulf %53, %57 : vector<2x16x16x32xf32>
    %59 = vector.extract_strided_slice %52 {offsets = [0, 1, 0, 0], sizes = [2, 16, 16, 32], strides = [1, 1, 1, 1]} : vector<2x18x16x32xf32> to vector<2x16x16x32xf32>
    %60 = vector.extract_strided_slice %8 {offsets = [5, 0], sizes = [1, 32], strides = [1, 1]} : vector<9x32xf32> to vector<1x32xf32>
    %61 = vector.shape_cast %60 : vector<1x32xf32> to vector<32xf32>
    %62 = vector.shape_cast %61 : vector<32xf32> to vector<1x1x1x32xf32>
    %63 = vector.broadcast %62 : vector<1x1x1x32xf32> to vector<2x16x16x32xf32>
    %64 = arith.mulf %59, %63 : vector<2x16x16x32xf32>
    %65 = arith.addf %58, %64 : vector<2x16x16x32xf32>
    %66 = vector.extract_strided_slice %52 {offsets = [0, 2, 0, 0], sizes = [2, 16, 16, 32], strides = [1, 1, 1, 1]} : vector<2x18x16x32xf32> to vector<2x16x16x32xf32>
    %67 = vector.extract_strided_slice %8 {offsets = [8, 0], sizes = [1, 32], strides = [1, 1]} : vector<9x32xf32> to vector<1x32xf32>
    %68 = vector.shape_cast %67 : vector<1x32xf32> to vector<32xf32>
    %69 = vector.shape_cast %68 : vector<32xf32> to vector<1x1x1x32xf32>
    %70 = vector.broadcast %69 : vector<1x1x1x32xf32> to vector<2x16x16x32xf32>
    %71 = arith.mulf %66, %70 : vector<2x16x16x32xf32>
    %72 = arith.addf %65, %71 : vector<2x16x16x32xf32>
    %73 = arith.addf %51, %72 : vector<2x16x16x32xf32>
    %74 = vector.shape_cast %73 : vector<2x16x16x32xf32> to vector<512x32xf32>
    %c0_35 = arith.constant 0 : index
    %c0_36 = arith.constant 0 : index
    %75 = vector.load %arg3[%c0_35, %c0_36] : memref<1x32xf32, #tpu.memory_space<vmem>>, vector<1x32xf32>
    %76 = vector.shape_cast %75 : vector<1x32xf32> to vector<32xf32>
    %77 = vector.shape_cast %76 : vector<32xf32> to vector<1x32xf32>
    %78 = vector.broadcast %77 : vector<1x32xf32> to vector<512x32xf32>
    %79 = arith.addf %74, %78 : vector<512x32xf32>
    %cst_37 = arith.constant 0.000000e+00 : f32
    %80 = vector.broadcast %cst_37 : f32 to vector<512x32xf32>
    %81 = arith.maximumf %79, %80 : vector<512x32xf32>
    %cst_38 = arith.constant 6.000000e+00 : f32
    %82 = vector.broadcast %cst_38 : f32 to vector<512x32xf32>
    %83 = arith.minimumf %81, %82 : vector<512x32xf32>
    %c0_39 = arith.constant 0 : index
    %c0_40 = arith.constant 0 : index
    %84 = vector.load %arg4[%c0_39, %c0_40] : memref<32x32xf32, #tpu.memory_space<vmem>>, vector<32x32xf32>
    %cst_41 = arith.constant dense<0.000000e+00> : vector<512x32xf32>
    %85 = tpu.matmul %83, %84, %cst_41 {dimension_numbers = #tpu.dot_dimension_numbers<[1], [0], [0], [1], [0, 0, 1, 1], [], []>} : vector<512x32xf32>, vector<32x32xf32>, vector<512x32xf32> -> vector<512x32xf32>
    %c0_42 = arith.constant 0 : index
    %c0_43 = arith.constant 0 : index
    %86 = vector.load %arg5[%c0_42, %c0_43] : memref<1x32xf32, #tpu.memory_space<vmem>>, vector<1x32xf32>
    %87 = vector.shape_cast %86 : vector<1x32xf32> to vector<32xf32>
    %88 = vector.shape_cast %87 : vector<32xf32> to vector<1x32xf32>
    %89 = vector.broadcast %88 : vector<1x32xf32> to vector<512x32xf32>
    %90 = arith.addf %85, %89 : vector<512x32xf32>
    %cst_44 = arith.constant 0.000000e+00 : f32
    %91 = vector.broadcast %cst_44 : f32 to vector<512x32xf32>
    %92 = arith.maximumf %90, %91 : vector<512x32xf32>
    %cst_45 = arith.constant 6.000000e+00 : f32
    %93 = vector.broadcast %cst_45 : f32 to vector<512x32xf32>
    %94 = arith.minimumf %92, %93 : vector<512x32xf32>
    %95 = vector.shape_cast %94 : vector<512x32xf32> to vector<2x16x16x32xf32>
    %c0_46 = arith.constant 0 : index
    %c1_47 = arith.constant 1 : index
    %c1_48 = arith.constant 1 : index
    %c0_49 = arith.constant 0 : index
    %96 = vector.load %arg11[%c0_46, %c1_47, %c1_48, %c0_49] : memref<2x18x18x32xf32, #tpu.memory_space<vmem>>, vector<2x16x16x32xf32>
    tpu.vector_store %arg11[%c0_46, %c1_47, %c1_48, %c0_49], %95 {strides = array<i32>} : memref<2x18x18x32xf32, #tpu.memory_space<vmem>>, vector<2x16x16x32xf32>,
    %c0_50 = arith.constant 0 : index
    %c0_51 = arith.constant 0 : index
    %97 = vector.load %arg6[%c0_50, %c0_51] : memref<9x32xf32, #tpu.memory_space<vmem>>, vector<9x32xf32>
    %c0_52 = arith.constant 0 : index
    %c0_53 = arith.constant 0 : index
    %c0_54 = arith.constant 0 : index
    %c0_55 = arith.constant 0 : index
    %98 = vector.load %arg11[%c0_52, %c0_53, %c0_54, %c0_55] : memref<2x18x18x32xf32, #tpu.memory_space<vmem>>, vector<2x18x16x32xf32>
    %99 = vector.extract_strided_slice %98 {offsets = [0, 0, 0, 0], sizes = [2, 16, 16, 32], strides = [1, 1, 1, 1]} : vector<2x18x16x32xf32> to vector<2x16x16x32xf32>
    %100 = vector.extract_strided_slice %97 {offsets = [0, 0], sizes = [1, 32], strides = [1, 1]} : vector<9x32xf32> to vector<1x32xf32>
    %101 = vector.shape_cast %100 : vector<1x32xf32> to vector<32xf32>
    %102 = vector.shape_cast %101 : vector<32xf32> to vector<1x1x1x32xf32>
    %103 = vector.broadcast %102 : vector<1x1x1x32xf32> to vector<2x16x16x32xf32>
    %104 = arith.mulf %99, %103 : vector<2x16x16x32xf32>
    %105 = vector.extract_strided_slice %98 {offsets = [0, 1, 0, 0], sizes = [2, 16, 16, 32], strides = [1, 1, 1, 1]} : vector<2x18x16x32xf32> to vector<2x16x16x32xf32>
    %106 = vector.extract_strided_slice %97 {offsets = [3, 0], sizes = [1, 32], strides = [1, 1]} : vector<9x32xf32> to vector<1x32xf32>
    %107 = vector.shape_cast %106 : vector<1x32xf32> to vector<32xf32>
    %108 = vector.shape_cast %107 : vector<32xf32> to vector<1x1x1x32xf32>
    %109 = vector.broadcast %108 : vector<1x1x1x32xf32> to vector<2x16x16x32xf32>
    %110 = arith.mulf %105, %109 : vector<2x16x16x32xf32>
    %111 = arith.addf %104, %110 : vector<2x16x16x32xf32>
    %112 = vector.extract_strided_slice %98 {offsets = [0, 2, 0, 0], sizes = [2, 16, 16, 32], strides = [1, 1, 1, 1]} : vector<2x18x16x32xf32> to vector<2x16x16x32xf32>
    %113 = vector.extract_strided_slice %97 {offsets = [6, 0], sizes = [1, 32], strides = [1, 1]} : vector<9x32xf32> to vector<1x32xf32>
    %114 = vector.shape_cast %113 : vector<1x32xf32> to vector<32xf32>
    %115 = vector.shape_cast %114 : vector<32xf32> to vector<1x1x1x32xf32>
    %116 = vector.broadcast %115 : vector<1x1x1x32xf32> to vector<2x16x16x32xf32>
    %117 = arith.mulf %112, %116 : vector<2x16x16x32xf32>
    %118 = arith.addf %111, %117 : vector<2x16x16x32xf32>
    %c0_56 = arith.constant 0 : index
    %c0_57 = arith.constant 0 : index
    %c1_58 = arith.constant 1 : index
    %c0_59 = arith.constant 0 : index
    %119 = vector.load %arg11[%c0_56, %c0_57, %c1_58, %c0_59] : memref<2x18x18x32xf32, #tpu.memory_space<vmem>>, vector<2x18x16x32xf32>
    %120 = vector.extract_strided_slice %119 {offsets = [0, 0, 0, 0], sizes = [2, 16, 16, 32], strides = [1, 1, 1, 1]} : vector<2x18x16x32xf32> to vector<2x16x16x32xf32>
    %121 = vector.extract_strided_slice %97 {offsets = [1, 0], sizes = [1, 32], strides = [1, 1]} : vector<9x32xf32> to vector<1x32xf32>
    %122 = vector.shape_cast %121 : vector<1x32xf32> to vector<32xf32>
    %123 = vector.shape_cast %122 : vector<32xf32> to vector<1x1x1x32xf32>
    %124 = vector.broadcast %123 : vector<1x1x1x32xf32> to vector<2x16x16x32xf32>
    %125 = arith.mulf %120, %124 : vector<2x16x16x32xf32>
    %126 = vector.extract_strided_slice %119 {offsets = [0, 1, 0, 0], sizes = [2, 16, 16, 32], strides = [1, 1, 1, 1]} : vector<2x18x16x32xf32> to vector<2x16x16x32xf32>
    %127 = vector.extract_strided_slice %97 {offsets = [4, 0], sizes = [1, 32], strides = [1, 1]} : vector<9x32xf32> to vector<1x32xf32>
    %128 = vector.shape_cast %127 : vector<1x32xf32> to vector<32xf32>
    %129 = vector.shape_cast %128 : vector<32xf32> to vector<1x1x1x32xf32>
    %130 = vector.broadcast %129 : vector<1x1x1x32xf32> to vector<2x16x16x32xf32>
    %131 = arith.mulf %126, %130 : vector<2x16x16x32xf32>
    %132 = arith.addf %125, %131 : vector<2x16x16x32xf32>
    %133 = vector.extract_strided_slice %119 {offsets = [0, 2, 0, 0], sizes = [2, 16, 16, 32], strides = [1, 1, 1, 1]} : vector<2x18x16x32xf32> to vector<2x16x16x32xf32>
    %134 = vector.extract_strided_slice %97 {offsets = [7, 0], sizes = [1, 32], strides = [1, 1]} : vector<9x32xf32> to vector<1x32xf32>
    %135 = vector.shape_cast %134 : vector<1x32xf32> to vector<32xf32>
    %136 = vector.shape_cast %135 : vector<32xf32> to vector<1x1x1x32xf32>
    %137 = vector.broadcast %136 : vector<1x1x1x32xf32> to vector<2x16x16x32xf32>
    %138 = arith.mulf %133, %137 : vector<2x16x16x32xf32>
    %139 = arith.addf %132, %138 : vector<2x16x16x32xf32>
    %140 = arith.addf %118, %139 : vector<2x16x16x32xf32>
    %c0_60 = arith.constant 0 : index
    %c0_61 = arith.constant 0 : index
    %c2_62 = arith.constant 2 : index
    %c0_63 = arith.constant 0 : index
    %141 = vector.load %arg11[%c0_60, %c0_61, %c2_62, %c0_63] : memref<2x18x18x32xf32, #tpu.memory_space<vmem>>, vector<2x18x16x32xf32>
    %142 = vector.extract_strided_slice %141 {offsets = [0, 0, 0, 0], sizes = [2, 16, 16, 32], strides = [1, 1, 1, 1]} : vector<2x18x16x32xf32> to vector<2x16x16x32xf32>
    %143 = vector.extract_strided_slice %97 {offsets = [2, 0], sizes = [1, 32], strides = [1, 1]} : vector<9x32xf32> to vector<1x32xf32>
    %144 = vector.shape_cast %143 : vector<1x32xf32> to vector<32xf32>
    %145 = vector.shape_cast %144 : vector<32xf32> to vector<1x1x1x32xf32>
    %146 = vector.broadcast %145 : vector<1x1x1x32xf32> to vector<2x16x16x32xf32>
    %147 = arith.mulf %142, %146 : vector<2x16x16x32xf32>
    %148 = vector.extract_strided_slice %141 {offsets = [0, 1, 0, 0], sizes = [2, 16, 16, 32], strides = [1, 1, 1, 1]} : vector<2x18x16x32xf32> to vector<2x16x16x32xf32>
    %149 = vector.extract_strided_slice %97 {offsets = [5, 0], sizes = [1, 32], strides = [1, 1]} : vector<9x32xf32> to vector<1x32xf32>
    %150 = vector.shape_cast %149 : vector<1x32xf32> to vector<32xf32>
    %151 = vector.shape_cast %150 : vector<32xf32> to vector<1x1x1x32xf32>
    %152 = vector.broadcast %151 : vector<1x1x1x32xf32> to vector<2x16x16x32xf32>
    %153 = arith.mulf %148, %152 : vector<2x16x16x32xf32>
    %154 = arith.addf %147, %153 : vector<2x16x16x32xf32>
    %155 = vector.extract_strided_slice %141 {offsets = [0, 2, 0, 0], sizes = [2, 16, 16, 32], strides = [1, 1, 1, 1]} : vector<2x18x16x32xf32> to vector<2x16x16x32xf32>
    %156 = vector.extract_strided_slice %97 {offsets = [8, 0], sizes = [1, 32], strides = [1, 1]} : vector<9x32xf32> to vector<1x32xf32>
    %157 = vector.shape_cast %156 : vector<1x32xf32> to vector<32xf32>
    %158 = vector.shape_cast %157 : vector<32xf32> to vector<1x1x1x32xf32>
    %159 = vector.broadcast %158 : vector<1x1x1x32xf32> to vector<2x16x16x32xf32>
    %160 = arith.mulf %155, %159 : vector<2x16x16x32xf32>
    %161 = arith.addf %154, %160 : vector<2x16x16x32xf32>
    %162 = arith.addf %140, %161 : vector<2x16x16x32xf32>
    %163 = vector.shape_cast %162 : vector<2x16x16x32xf32> to vector<512x32xf32>
    %c0_64 = arith.constant 0 : index
    %c0_65 = arith.constant 0 : index
    %164 = vector.load %arg7[%c0_64, %c0_65] : memref<1x32xf32, #tpu.memory_space<vmem>>, vector<1x32xf32>
    %165 = vector.shape_cast %164 : vector<1x32xf32> to vector<32xf32>
    %166 = vector.shape_cast %165 : vector<32xf32> to vector<1x32xf32>
    %167 = vector.broadcast %166 : vector<1x32xf32> to vector<512x32xf32>
    %168 = arith.addf %163, %167 : vector<512x32xf32>
    %cst_66 = arith.constant 0.000000e+00 : f32
    %169 = vector.broadcast %cst_66 : f32 to vector<512x32xf32>
    %170 = arith.maximumf %168, %169 : vector<512x32xf32>
    %cst_67 = arith.constant 6.000000e+00 : f32
    %171 = vector.broadcast %cst_67 : f32 to vector<512x32xf32>
    %172 = arith.minimumf %170, %171 : vector<512x32xf32>
    %c0_68 = arith.constant 0 : index
    %c0_69 = arith.constant 0 : index
    %173 = vector.load %arg8[%c0_68, %c0_69] : memref<32x32xf32, #tpu.memory_space<vmem>>, vector<32x32xf32>
    %cst_70 = arith.constant dense<0.000000e+00> : vector<512x32xf32>
    %174 = tpu.matmul %172, %173, %cst_70 {dimension_numbers = #tpu.dot_dimension_numbers<[1], [0], [0], [1], [0, 0, 1, 1], [], []>} : vector<512x32xf32>, vector<32x32xf32>, vector<512x32xf32> -> vector<512x32xf32>
    %c0_71 = arith.constant 0 : index
    %c0_72 = arith.constant 0 : index
    %175 = vector.load %arg9[%c0_71, %c0_72] : memref<1x32xf32, #tpu.memory_space<vmem>>, vector<1x32xf32>
    %176 = vector.shape_cast %175 : vector<1x32xf32> to vector<32xf32>
    %177 = vector.shape_cast %176 : vector<32xf32> to vector<1x32xf32>
    %178 = vector.broadcast %177 : vector<1x32xf32> to vector<512x32xf32>
    %179 = arith.addf %174, %178 : vector<512x32xf32>
    %180 = vector.shape_cast %6 : vector<2x16x16x32xf32> to vector<512x32xf32>
    %181 = arith.addf %179, %180 : vector<512x32xf32>
    %182 = vector.shape_cast %181 : vector<512x32xf32> to vector<2x16x16x32xf32>
    %c0_73 = arith.constant 0 : index
    %c0_74 = arith.constant 0 : index
    %c0_75 = arith.constant 0 : index
    %c0_76 = arith.constant 0 : index
    %183 = vector.load %arg10[%c0_73, %c0_74, %c0_75, %c0_76] : memref<2x16x16x32xf32, #tpu.memory_space<vmem>>, vector<2x16x16x32xf32>
    tpu.vector_store %arg10[%c0_73, %c0_74, %c0_75, %c0_76], %182 {strides = array<i32>} : memref<2x16x16x32xf32, #tpu.memory_space<vmem>>, vector<2x16x16x32xf32>,
    return
  }
  func.func @transform_0(%arg0: i32) -> (i32, i32, i32, i32) {
    %c0_i32 = arith.constant 0 : i32
    %c0_i32_0 = arith.constant 0 : i32
    %c0_i32_1 = arith.constant 0 : i32
    %c0_i32_2 = arith.constant 0 : i32
    return %arg0, %c0_i32, %c0_i32_0, %c0_i32_1 : i32, i32, i32, i32
  }
  func.func @transform_1(%arg0: i32) -> (i32, i32) {
    %c0_i32 = arith.constant 0 : i32
    %c0_i32_0 = arith.constant 0 : i32
    %c0_i32_1 = arith.constant 0 : i32
    return %c0_i32, %c0_i32_0 : i32, i32
  }
  func.func @transform_2(%arg0: i32) -> (i32, i32) {
    %c0_i32 = arith.constant 0 : i32
    %c0_i32_0 = arith.constant 0 : i32
    %c0_i32_1 = arith.constant 0 : i32
    return %c0_i32, %c0_i32_0 : i32, i32
  }
  func.func @transform_3(%arg0: i32) -> (i32, i32) {
    %c0_i32 = arith.constant 0 : i32
    %c0_i32_0 = arith.constant 0 : i32
    %c0_i32_1 = arith.constant 0 : i32
    return %c0_i32, %c0_i32_0 : i32, i32
  }
  func.func @transform_4(%arg0: i32) -> (i32, i32) {
    %c0_i32 = arith.constant 0 : i32
    %c0_i32_0 = arith.constant 0 : i32
    %c0_i32_1 = arith.constant 0 : i32
    return %c0_i32, %c0_i32_0 : i32, i32
  }
  func.func @transform_5(%arg0: i32) -> (i32, i32) {
    %c0_i32 = arith.constant 0 : i32
    %c0_i32_0 = arith.constant 0 : i32
    %c0_i32_1 = arith.constant 0 : i32
    return %c0_i32, %c0_i32_0 : i32, i32
  }
  func.func @transform_6(%arg0: i32) -> (i32, i32) {
    %c0_i32 = arith.constant 0 : i32
    %c0_i32_0 = arith.constant 0 : i32
    %c0_i32_1 = arith.constant 0 : i32
    return %c0_i32, %c0_i32_0 : i32, i32
  }
  func.func @transform_7(%arg0: i32) -> (i32, i32) {
    %c0_i32 = arith.constant 0 : i32
    %c0_i32_0 = arith.constant 0 : i32
    %c0_i32_1 = arith.constant 0 : i32
    return %c0_i32, %c0_i32_0 : i32, i32
  }
  func.func @transform_8(%arg0: i32) -> (i32, i32) {
    %c0_i32 = arith.constant 0 : i32
    %c0_i32_0 = arith.constant 0 : i32
    %c0_i32_1 = arith.constant 0 : i32
    return %c0_i32, %c0_i32_0 : i32, i32
  }
  func.func @transform_9(%arg0: i32) -> (i32, i32, i32, i32) {
    %c0_i32 = arith.constant 0 : i32
    %c0_i32_0 = arith.constant 0 : i32
    %c0_i32_1 = arith.constant 0 : i32
    %c0_i32_2 = arith.constant 0 : i32
    return %arg0, %c0_i32, %c0_i32_0, %c0_i32_1 : i32, i32, i32, i32
  }
}

</mosaic_0001>

<llo_original>
// kernel: tpu_custom_call.1
$region0: #{tpu_custom_call.1}
  #allocation0 [shape = 'u32[]', space=smem, size = 0x4, offset = 0x4, fixed_abs, tag = 'smem constant byte address 0x4 - core index']
  #allocation1 [shape = 'u32[144,128]{1,0:T(1,128)}', space=vmem, size = 0x12000, scoped, tag = 'internal scratch']
  #allocation2 [shape = 'f32[2,18,18,32]{3,2,1,0:T(8,128)}', space=vmem, size = 0x6c000, scoped, tag = 'scratch operand']
  %s0 = inlined_call_operand.hbm [shape: f32[2,16,16,32], index: 0, kind: input, shape index: {}]
  %s1 = inlined_call_operand.hbm [shape: f32[9,32], index: 1, kind: input, shape index: {}]
  %s2 = inlined_call_operand.vmem [shape: f32[1,32], index: 2, kind: input, shape index: {}]
  %s3 = inlined_call_operand.hbm [shape: f32[32,32], index: 3, kind: input, shape index: {}]
  %s4 = inlined_call_operand.vmem [shape: f32[1,32], index: 4, kind: input, shape index: {}]
  %s5 = inlined_call_operand.vmem [shape: f32[9,32], index: 5, kind: input, shape index: {}]
  %s6 = inlined_call_operand.vmem [shape: f32[1,32], index: 6, kind: input, shape index: {}]
  %s7 = inlined_call_operand.hbm [shape: f32[32,32], index: 7, kind: input, shape index: {}]
  %s8 = inlined_call_operand.vmem [shape: f32[1,32], index: 8, kind: input, shape index: {}]
  %s9 = inlined_call_operand.hbm [shape: f32[2,16,16,32], index: 9, kind: output, shape index: {}]
  %s10 = sld [smem:[#allocation0]]
  $region62: #{tpu_custom_call.1} parent=0
    _
  %s12 = ssub.s32 1, %s10
  %s13 = scalar_select 0, %s12, %s10
  $region1: #{tpu_custom_call.1} parent=0
    #allocation3 [shape = 'u8[262144]{0}', space=vmem, size = 0x40000, scoped, tag = 'input window, operand 0, single buffered']
    #allocation4 [shape = 's32[1]{0}', space=sflag, size = 0x4, scoped, tag = 'scoped memory for tpu_custom_call.1']
    #allocation5 [shape = 's32[1]{0}', space=sflag, size = 0x4, scoped, tag = 'scoped memory for tpu_custom_call.1']
    #allocation6 [shape = 'u8[8192]{0}', space=vmem, size = 0x2000, scoped, tag = 'input window, operand 1, single buffered']
    #allocation7 [shape = 's32[1]{0}', space=sflag, size = 0x4, scoped, tag = 'scoped memory for tpu_custom_call.1']
    #allocation8 [shape = 'u8[16384]{0}', space=vmem, size = 0x4000, scoped, tag = 'input window, operand 3, single buffered']
    #allocation9 [shape = 'u8[16384]{0}', space=vmem, size = 0x4000, scoped, tag = 'input window, operand 7, single buffered']
    #allocation10 [shape = 's32[1]{0}', space=sflag, size = 0x4, scoped, tag = 'scoped memory for tpu_custom_call.1']
    #allocation11 [shape = 'u8[262144]{0}', space=vmem, size = 0x40000, scoped, tag = 'output window, operand 0, single buffered']
    %14 = vsyncpa [#allocation4], 0
    %15 = vsyncpa [#allocation7], 0
    %16 = vsyncpa [#allocation10], 0
    %17 = vsyncpa [#allocation5], 0
    // Predicated region
    $region2: #{tpu_custom_call.1} parent=1 // pred_check
      _
    $region3: #{tpu_custom_call.1} parent=1 // pred_check_branch
      %19 = sbr.rel (0) target = $region5
    $region4: #{tpu_custom_call.1} parent=1 // pred_region
      %s21 = ssub.s32 8192, 8192
      %22 = vsyncadd [#allocation4], %s21
      %s23 = sshll.u32 [#allocation3], 4
      %s24 = int_to_ptr.vmem [resolvable:$true] %s23
      %29 = dma.hbm_to_vmem [thread:$0]  %s0, 8192, %s24, [#allocation4], 128, 128, 8
    $region5: #{tpu_custom_call.1} parent=1 // pred_fallthru
      _
    // Predicated region
    $region6: #{tpu_custom_call.1} parent=1 // pred_check
      _
    $region7: #{tpu_custom_call.1} parent=1 // pred_check_branch
      %31 = sbr.rel (0) target = $region9
    $region8: #{tpu_custom_call.1} parent=1 // pred_region
      %s33 = ssub.s32 256, 256
      %34 = vsyncadd [#allocation7], %s33
      %s35 = sshll.u32 [#allocation6], 4
      %s36 = int_to_ptr.vmem [resolvable:$true] %s35
      %41 = dma.hbm_to_vmem [thread:$0]  %s1, 256, %s36, [#allocation7], 128, 128, 8
    $region9: #{tpu_custom_call.1} parent=1 // pred_fallthru
      _
    // Predicated region
    $region10: #{tpu_custom_call.1} parent=1 // pred_check
      _
    $region11: #{tpu_custom_call.1} parent=1 // pred_check_branch
      %43 = sbr.rel (0) target = $region13
    $region12: #{tpu_custom_call.1} parent=1 // pred_region
      _
    $region13: #{tpu_custom_call.1} parent=1 // pred_fallthru
      _
    // Predicated region
    $region14: #{tpu_custom_call.1} parent=1 // pred_check
      _
    $region15: #{tpu_custom_call.1} parent=1 // pred_check_branch
      %45 = sbr.rel (0) target = $region17
    $region16: #{tpu_custom_call.1} parent=1 // pred_region
      %s47 = ssub.s32 512, 512
      %48 = vsyncadd [#allocation7], %s47
      %s49 = sshll.u32 [#allocation8], 4
      %s50 = int_to_ptr.vmem [resolvable:$true] %s49
      %55 = dma.hbm_to_vmem [thread:$0]  %s3, 512, %s50, [#allocation7], 128, 128, 8
    $region17: #{tpu_custom_call.1} parent=1 // pred_fallthru
      _
    // Predicated region
    $region18: #{tpu_custom_call.1} parent=1 // pred_check
      _
    $region19: #{tpu_custom_call.1} parent=1 // pred_check_branch
      %57 = sbr.rel (0) target = $region21
    $region20: #{tpu_custom_call.1} parent=1 // pred_region
      _
    $region21: #{tpu_custom_call.1} parent=1 // pred_fallthru
      _
    // Predicated region
    $region22: #{tpu_custom_call.1} parent=1 // pred_check
      _
    $region23: #{tpu_custom_call.1} parent=1 // pred_check_branch
      %59 = sbr.rel (0) target = $region25
    $region24: #{tpu_custom_call.1} parent=1 // pred_region
      _
    $region25: #{tpu_custom_call.1} parent=1 // pred_fallthru
      _
    // Predicated region
    $region26: #{tpu_custom_call.1} parent=1 // pred_check
      _
    $region27: #{tpu_custom_call.1} parent=1 // pred_check_branch
      %61 = sbr.rel (0) target = $region29
    $region28: #{tpu_custom_call.1} parent=1 // pred_region
      _
    $region29: #{tpu_custom_call.1} parent=1 // pred_fallthru
      _
    // Predicated region
    $region30: #{tpu_custom_call.1} parent=1 // pred_check
      _
    $region31: #{tpu_custom_call.1} parent=1 // pred_check_branch
      %63 = sbr.rel (0) target = $region33
    $region32: #{tpu_custom_call.1} parent=1 // pred_region
      %s65 = ssub.s32 512, 512
      %66 = vsyncadd [#allocation10], %s65
      %s67 = sshll.u32 [#allocation9], 4
      %s68 = int_to_ptr.vmem [resolvable:$true] %s67
      %73 = dma.hbm_to_vmem [thread:$0]  %s7, 512, %s68, [#allocation10], 128, 128, 8
    $region33: #{tpu_custom_call.1} parent=1 // pred_fallthru
      _
    // Predicated region
    $region34: #{tpu_custom_call.1} parent=1 // pred_check
      _
    $region35: #{tpu_custom_call.1} parent=1 // pred_check_branch
      %75 = sbr.rel (0) target = $region37
    $region36: #{tpu_custom_call.1} parent=1 // pred_region
      _
    $region37: #{tpu_custom_call.1} parent=1 // pred_fallthru
      _
    // Predicated region
    $region38: #{tpu_custom_call.1} parent=1 // pred_check
      _
    $region39: #{tpu_custom_call.1} parent=1 // pred_check_branch
      %77 = sbr.rel (0) target = $region41
    $region40: #{tpu_custom_call.1} parent=1 // pred_region
      %78 = dma.done [#allocation4], 8192
    $region41: #{tpu_custom_call.1} parent=1 // pred_fallthru
      _
    // Predicated region
    $region42: #{tpu_custom_call.1} parent=1 // pred_check
      _
    $region43: #{tpu_custom_call.1} parent=1 // pred_check_branch
      %80 = sbr.rel (0) target = $region45
    $region44: #{tpu_custom_call.1} parent=1 // pred_region
      %81 = dma.done [#allocation7], 256
    $region45: #{tpu_custom_call.1} parent=1 // pred_fallthru
      _
    // Predicated region
    $region46: #{tpu_custom_call.1} parent=1 // pred_check
      _
    $region47: #{tpu_custom_call.1} parent=1 // pred_check_branch
      %83 = sbr.rel (0) target = $region49
    $region48: #{tpu_custom_call.1} parent=1 // pred_region
      %84 = dma.done [#allocation7], 512
    $region49: #{tpu_custom_call.1} parent=1 // pred_fallthru
      _
    // Predicated region
    $region50: #{tpu_custom_call.1} parent=1 // pred_check
      _
    $region51: #{tpu_custom_call.1} parent=1 // pred_check_branch
      %86 = sbr.rel (0) target = $region53
    $region52: #{tpu_custom_call.1} parent=1 // pred_region
      %87 = dma.done [#allocation10], 512
    $region53: #{tpu_custom_call.1} parent=1 // pred_fallthru
      _
    %vm88 = vcmask 261120
    %89 = vst.msk [vmem:[#allocation2] sm:$0xff] %vm88, 0.0
    %90 = vst.msk [vmem:[#allocation2 + $0x8] sm:$0xff] %vm88, 0.0
    %vm91 = vcmask 254976
    %92 = vst.msk [vmem:[#allocation2 + $0x10] sm:$0x3] %vm91, 0.0
    %93 = vst.msk [vmem:[#allocation2 + $0x1b0] sm:$0xff] %vm88, 0.0
    %94 = vst.msk [vmem:[#allocation2 + $0x1b8] sm:$0xff] %vm88, 0.0
    %95 = vst.msk [vmem:[#allocation2 + $0x1c0] sm:$0x3] %vm91, 0.0
    %s96 = scalar_lea.vmem [#allocation2], 408
    %97 = vst.msk [vmem:[%s96] sm:$0xff] %vm88, 0.0
    %98 = vst.msk [vmem:[%s96 + $0x8] sm:$0xff] %vm88, 0.0
    %99 = vst.msk [vmem:[%s96 + $0x10] sm:$0x3] %vm91, 0.0
    %100 = vst.msk [vmem:[%s96 + $0x1b0] sm:$0xff] %vm88, 0.0
    %101 = vst.msk [vmem:[%s96 + $0x1b8] sm:$0xff] %vm88, 0.0
    %102 = vst.msk [vmem:[%s96 + $0x1c0] sm:$0x3] %vm91, 0.0
    %s103 = scalar_lea.vmem [#allocation2], 24
    %vm104 = vcmask 253952
    %105 = vst.msk [vmem:[%s103] sm:$0x1] %vm104, 0.0
    %106 = vst.msk [vmem:[%s103 + $0x18] sm:$0x1] %vm104, 0.0
    %107 = vst.msk [vmem:[%s103 + $0x30] sm:$0x1] %vm104, 0.0
    %108 = vst.msk [vmem:[%s103 + $0x48] sm:$0x1] %vm104, 0.0
    %109 = vst.msk [vmem:[%s103 + $0x60] sm:$0x1] %vm104, 0.0
    %110 = vst.msk [vmem:[%s103 + $0x78] sm:$0x1] %vm104, 0.0
    %111 = vst.msk [vmem:[%s103 + $0x90] sm:$0x1] %vm104, 0.0
    %112 = vst.msk [vmem:[%s103 + $0xa8] sm:$0x1] %vm104, 0.0
    %113 = vst.msk [vmem:[%s103 + $0xc0] sm:$0x1] %vm104, 0.0
    %114 = vst.msk [vmem:[%s103 + $0xd8] sm:$0x1] %vm104, 0.0
    %115 = vst.msk [vmem:[%s103 + $0xf0] sm:$0x1] %vm104, 0.0
    %116 = vst.msk [vmem:[%s103 + $0x108] sm:$0x1] %vm104, 0.0
    %117 = vst.msk [vmem:[%s103 + $0x120] sm:$0x1] %vm104, 0.0
    %118 = vst.msk [vmem:[%s103 + $0x138] sm:$0x1] %vm104, 0.0
    %119 = vst.msk [vmem:[%s103 + $0x150] sm:$0x1] %vm104, 0.0
    %120 = vst.msk [vmem:[%s103 + $0x168] sm:$0x1] %vm104, 0.0
    %121 = vst.msk [vmem:[%s103 + $0x1b0] sm:$0x1] %vm104, 0.0
    %122 = vst.msk [vmem:[%s103 + $0x1c8] sm:$0x1] %vm104, 0.0
    %123 = vst.msk [vmem:[%s103 + $0x1e0] sm:$0x1] %vm104, 0.0
    %124 = vst.msk [vmem:[%s103 + $0x1f8] sm:$0x1] %vm104, 0.0
    %125 = vst.msk [vmem:[%s103 + $0x210] sm:$0x1] %vm104, 0.0
    %126 = vst.msk [vmem:[%s103 + $0x228] sm:$0x1] %vm104, 0.0
    %127 = vst.msk [vmem:[%s103 + $0x240] sm:$0x1] %vm104, 0.0
    %128 = vst.msk [vmem:[%s103 + $0x258] sm:$0x1] %vm104, 0.0
    %129 = vst.msk [vmem:[%s103 + $0x270] sm:$0x1] %vm104, 0.0
    %130 = vst.msk [vmem:[%s103 + $0x288] sm:$0x1] %vm104, 0.0
    %131 = vst.msk [vmem:[%s103 + $0x2a0] sm:$0x1] %vm104, 0.0
    %132 = vst.msk [vmem:[%s103 + $0x2b8] sm:$0x1] %vm104, 0.0
    %133 = vst.msk [vmem:[%s103 + $0x2d0] sm:$0x1] %vm104, 0.0
    %134 = vst.msk [vmem:[%s103 + $0x2e8] sm:$0x1] %vm104, 0.0
    %135 = vst.msk [vmem:[%s103 + $0x300] sm:$0x1] %vm104, 0.0
    %136 = vst.msk [vmem:[%s103 + $0x318] sm:$0x1] %vm104, 0.0
    %137 = vst.msk [vmem:[%s103 + $0x11] sm:$0x1] %vm104, 0.0
    %138 = vst.msk [vmem:[%s103 + $0x29] sm:$0x1] %vm104, 0.0
    %139 = vst.msk [vmem:[%s103 + $0x41] sm:$0x1] %vm104, 0.0
    %140 = vst.msk [vmem:[%s103 + $0x59] sm:$0x1] %vm104, 0.0
    %141 = vst.msk [vmem:[%s103 + $0x71] sm:$0x1] %vm104, 0.0
    %142 = vst.msk [vmem:[%s103 + $0x89] sm:$0x1] %vm104, 0.0
    %143 = vst.msk [vmem:[%s103 + $0xa1] sm:$0x1] %vm104, 0.0
    %144 = vst.msk [vmem:[%s103 + $0xb9] sm:$0x1] %vm104, 0.0
    %145 = vst.msk [vmem:[%s103 + $0xd1] sm:$0x1] %vm104, 0.0
    %146 = vst.msk [vmem:[%s103 + $0xe9] sm:$0x1] %vm104, 0.0
    %147 = vst.msk [vmem:[%s103 + $0x101] sm:$0x1] %vm104, 0.0
    %148 = vst.msk [vmem:[%s103 + $0x119] sm:$0x1] %vm104, 0.0
    %149 = vst.msk [vmem:[%s103 + $0x131] sm:$0x1] %vm104, 0.0
    %150 = vst.msk [vmem:[%s103 + $0x149] sm:$0x1] %vm104, 0.0
    %151 = vst.msk [vmem:[%s103 + $0x161] sm:$0x1] %vm104, 0.0
    %152 = vst.msk [vmem:[%s103 + $0x179] sm:$0x1] %vm104, 0.0
    %153 = vst.msk [vmem:[%s103 + $0x1c1] sm:$0x1] %vm104, 0.0
    %154 = vst.msk [vmem:[%s103 + $0x1d9] sm:$0x1] %vm104, 0.0
    %155 = vst.msk [vmem:[%s103 + $0x1f1] sm:$0x1] %vm104, 0.0
    %156 = vst.msk [vmem:[%s103 + $0x209] sm:$0x1] %vm104, 0.0
    %157 = vst.msk [vmem:[%s103 + $0x221] sm:$0x1] %vm104, 0.0
    %158 = vst.msk [vmem:[%s103 + $0x239] sm:$0x1] %vm104, 0.0
    %159 = vst.msk [vmem:[%s103 + $0x251] sm:$0x1] %vm104, 0.0
    %160 = vst.msk [vmem:[%s103 + $0x269] sm:$0x1] %vm104, 0.0
    %161 = vst.msk [vmem:[%s103 + $0x281] sm:$0x1] %vm104, 0.0
    %162 = vst.msk [vmem:[%s103 + $0x299] sm:$0x1] %vm104, 0.0
    %163 = vst.msk [vmem:[%s103 + $0x2b1] sm:$0x1] %vm104, 0.0
    %164 = vst.msk [vmem:[%s103 + $0x2c9] sm:$0x1] %vm104, 0.0
    %165 = vst.msk [vmem:[%s103 + $0x2e1] sm:$0x1] %vm104, 0.0
    %166 = vst.msk [vmem:[%s103 + $0x2f9] sm:$0x1] %vm104, 0.0
    %167 = vst.msk [vmem:[%s103 + $0x311] sm:$0x1] %vm104, 0.0
    %168 = vst.msk [vmem:[%s103 + $0x329] sm:$0x1] %vm104, 0.0
    %v169 = vld [vmem:[#allocation3] sm:$0xff]
    %v170 = vld [vmem:[#allocation3 + $0x8] sm:$0xff]
    %v171 = vld [vmem:[#allocation3 + $0x10] sm:$0xff]
    %v172 = vld [vmem:[#allocation3 + $0x18] sm:$0xff]
    %v173 = vld [vmem:[#allocation3 + $0x20] sm:$0xff]
    %v174 = vld [vmem:[#allocation3 + $0x28] sm:$0xff]
    %v175 = vld [vmem:[#allocation3 + $0x30] sm:$0xff]
    %v176 = vld [vmem:[#allocation3 + $0x38] sm:$0xff]
    %v177 = vld [vmem:[#allocation3 + $0x40] sm:$0xff]
    %v178 = vld [vmem:[#allocation3 + $0x48] sm:$0xff]
    %v179 = vld [vmem:[#allocation3 + $0x50] sm:$0xff]
    %v180 = vld [vmem:[#allocation3 + $0x58] sm:$0xff]
    %v181 = vld [vmem:[#allocation3 + $0x60] sm:$0xff]
    %v182 = vld [vmem:[#allocation3 + $0x68] sm:$0xff]
    %v183 = vld [vmem:[#allocation3 + $0x70] sm:$0xff]
    %v184 = vld [vmem:[#allocation3 + $0x78] sm:$0xff]
    %v185 = vld [vmem:[#allocation3 + $0x80] sm:$0xff]
    %v186 = vld [vmem:[#allocation3 + $0x88] sm:$0xff]
    %v187 = vld [vmem:[#allocation3 + $0x90] sm:$0xff]
    %v188 = vld [vmem:[#allocation3 + $0x98] sm:$0xff]
    %v189 = vld [vmem:[#allocation3 + $0xa0] sm:$0xff]
    %v190 = vld [vmem:[#allocation3 + $0xa8] sm:$0xff]
    %v191 = vld [vmem:[#allocation3 + $0xb0] sm:$0xff]
    %v192 = vld [vmem:[#allocation3 + $0xb8] sm:$0xff]
    %v193 = vld [vmem:[#allocation3 + $0xc0] sm:$0xff]
    %v194 = vld [vmem:[#allocation3 + $0xc8] sm:$0xff]
    %v195 = vld [vmem:[#allocation3 + $0xd0] sm:$0xff]
    %v196 = vld [vmem:[#allocation3 + $0xd8] sm:$0xff]
    %v197 = vld [vmem:[#allocation3 + $0xe0] sm:$0xff]
    %v198 = vld [vmem:[#allocation3 + $0xe8] sm:$0xff]
    %v199 = vld [vmem:[#allocation3 + $0xf0] sm:$0xff]
    %v200 = vld [vmem:[#allocation3 + $0xf8] sm:$0xff]
    %v201 = vld [vmem:[#allocation3 + $0x100] sm:$0xff]
    %v202 = vld [vmem:[#allocation3 + $0x108] sm:$0xff]
    %v203 = vld [vmem:[#allocation3 + $0x110] sm:$0xff]
    %v204 = vld [vmem:[#allocation3 + $0x118] sm:$0xff]
    %v205 = vld [vmem:[#allocation3 + $0x120] sm:$0xff]
    %v206 = vld [vmem:[#allocation3 + $0x128] sm:$0xff]
    %v207 = vld [vmem:[#allocation3 + $0x130] sm:$0xff]
    %v208 = vld [vmem:[#allocation3 + $0x138] sm:$0xff]
    %v209 = vld [vmem:[#allocation3 + $0x140] sm:$0xff]
    %v210 = vld [vmem:[#allocation3 + $0x148] sm:$0xff]
    %v211 = vld [vmem:[#allocation3 + $0x150] sm:$0xff]
    %v212 = vld [vmem:[#allocation3 + $0x158] sm:$0xff]
    %v213 = vld [vmem:[#allocation3 + $0x160] sm:$0xff]
    %v214 = vld [vmem:[#allocation3 + $0x168] sm:$0xff]
    %v215 = vld [vmem:[#allocation3 + $0x170] sm:$0xff]
    %v216 = vld [vmem:[#allocation3 + $0x178] sm:$0xff]
    %v217 = vld [vmem:[#allocation3 + $0x180] sm:$0xff]
    %v218 = vld [vmem:[#allocation3 + $0x188] sm:$0xff]
    %v219 = vld [vmem:[#allocation3 + $0x190] sm:$0xff]
    %v220 = vld [vmem:[#allocation3 + $0x198] sm:$0xff]
    %v221 = vld [vmem:[#allocation3 + $0x1a0] sm:$0xff]
    %v222 = vld [vmem:[#allocation3 + $0x1a8] sm:$0xff]
    %v223 = vld [vmem:[#allocation3 + $0x1b0] sm:$0xff]
    %v224 = vld [vmem:[#allocation3 + $0x1b8] sm:$0xff]
    %v225 = vld [vmem:[#allocation3 + $0x1c0] sm:$0xff]
    %v226 = vld [vmem:[#allocation3 + $0x1c8] sm:$0xff]
    %v227 = vld [vmem:[#allocation3 + $0x1d0] sm:$0xff]
    %v228 = vld [vmem:[#allocation3 + $0x1d8] sm:$0xff]
    %v229 = vld [vmem:[#allocation3 + $0x1e0] sm:$0xff]
    %v230 = vld [vmem:[#allocation3 + $0x1e8] sm:$0xff]
    %v231 = vld [vmem:[#allocation3 + $0x1f0] sm:$0xff]
    %v232 = vld [vmem:[#allocation3 + $0x1f8] sm:$0xff]
    %233 = vst.msk [vmem:[%s103 + $0x1] sm:$0xff] %vm88, %v169
    %234 = vst.msk [vmem:[%s103 + $0x9] sm:$0xff] %vm88, %v170
    %235 = vst.msk [vmem:[%s103 + $0x19] sm:$0xff] %vm88, %v171
    %236 = vst.msk [vmem:[%s103 + $0x21] sm:$0xff] %vm88, %v172
    %237 = vst.msk [vmem:[%s103 + $0x31] sm:$0xff] %vm88, %v173
    %238 = vst.msk [vmem:[%s103 + $0x39] sm:$0xff] %vm88, %v174
    %239 = vst.msk [vmem:[%s103 + $0x49] sm:$0xff] %vm88, %v175
    %240 = vst.msk [vmem:[%s103 + $0x51] sm:$0xff] %vm88, %v176
    %241 = vst.msk [vmem:[%s103 + $0x61] sm:$0xff] %vm88, %v177
    %242 = vst.msk [vmem:[%s103 + $0x69] sm:$0xff] %vm88, %v178
    %243 = vst.msk [vmem:[%s103 + $0x79] sm:$0xff] %vm88, %v179
    %244 = vst.msk [vmem:[%s103 + $0x81] sm:$0xff] %vm88, %v180
    %245 = vst.msk [vmem:[%s103 + $0x91] sm:$0xff] %vm88, %v181
    %246 = vst.msk [vmem:[%s103 + $0x99] sm:$0xff] %vm88, %v182
    %247 = vst.msk [vmem:[%s103 + $0xa9] sm:$0xff] %vm88, %v183
    %248 = vst.msk [vmem:[%s103 + $0xb1] sm:$0xff] %vm88, %v184
    %249 = vst.msk [vmem:[%s103 + $0xc1] sm:$0xff] %vm88, %v185
    %250 = vst.msk [vmem:[%s103 + $0xc9] sm:$0xff] %vm88, %v186
    %251 = vst.msk [vmem:[%s103 + $0xd9] sm:$0xff] %vm88, %v187
    %252 = vst.msk [vmem:[%s103 + $0xe1] sm:$0xff] %vm88, %v188
    %253 = vst.msk [vmem:[%s103 + $0xf1] sm:$0xff] %vm88, %v189
    %254 = vst.msk [vmem:[%s103 + $0xf9] sm:$0xff] %vm88, %v190
    %255 = vst.msk [vmem:[%s103 + $0x109] sm:$0xff] %vm88, %v191
    %256 = vst.msk [vmem:[%s103 + $0x111] sm:$0xff] %vm88, %v192
    %257 = vst.msk [vmem:[%s103 + $0x121] sm:$0xff] %vm88, %v193
    %258 = vst.msk [vmem:[%s103 + $0x129] sm:$0xff] %vm88, %v194
    %259 = vst.msk [vmem:[%s103 + $0x139] sm:$0xff] %vm88, %v195
    %260 = vst.msk [vmem:[%s103 + $0x141] sm:$0xff] %vm88, %v196
    %261 = vst.msk [vmem:[%s103 + $0x151] sm:$0xff] %vm88, %v197
    %262 = vst.msk [vmem:[%s103 + $0x159] sm:$0xff] %vm88, %v198
    %263 = vst.msk [vmem:[%s103 + $0x169] sm:$0xff] %vm88, %v199
    %264 = vst.msk [vmem:[%s103 + $0x171] sm:$0xff] %vm88, %v200
    %265 = vst.msk [vmem:[%s103 + $0x1b1] sm:$0xff] %vm88, %v201
    %266 = vst.msk [vmem:[%s103 + $0x1b9] sm:$0xff] %vm88, %v202
    %267 = vst.msk [vmem:[%s103 + $0x1c9] sm:$0xff] %vm88, %v203
    %268 = vst.msk [vmem:[%s103 + $0x1d1] sm:$0xff] %vm88, %v204
    %269 = vst.msk [vmem:[%s103 + $0x1e1] sm:$0xff] %vm88, %v205
    %270 = vst.msk [vmem:[%s103 + $0x1e9] sm:$0xff] %vm88, %v206
    %271 = vst.msk [vmem:[%s103 + $0x1f9] sm:$0xff] %vm88, %v207
    %272 = vst.msk [vmem:[%s103 + $0x201] sm:$0xff] %vm88, %v208
    %273 = vst.msk [vmem:[%s103 + $0x211] sm:$0xff] %vm88, %v209
    %274 = vst.msk [vmem:[%s103 + $0x219] sm:$0xff] %vm88, %v210
    %275 = vst.msk [vmem:[%s103 + $0x229] sm:$0xff] %vm88, %v211
    %276 = vst.msk [vmem:[%s103 + $0x231] sm:$0xff] %vm88, %v212
    %277 = vst.msk [vmem:[%s103 + $0x241] sm:$0xff] %vm88, %v213
    %278 = vst.msk [vmem:[%s103 + $0x249] sm:$0xff] %vm88, %v214
    %279 = vst.msk [vmem:[%s103 + $0x259] sm:$0xff] %vm88, %v215
    %280 = vst.msk [vmem:[%s103 + $0x261] sm:$0xff] %vm88, %v216
    %281 = vst.msk [vmem:[%s103 + $0x271] sm:$0xff] %vm88, %v217
    %282 = vst.msk [vmem:[%s103 + $0x279] sm:$0xff] %vm88, %v218
    %283 = vst.msk [vmem:[%s103 + $0x289] sm:$0xff] %vm88, %v219
    %284 = vst.msk [vmem:[%s103 + $0x291] sm:$0xff] %vm88, %v220
    %285 = vst.msk [vmem:[%s103 + $0x2a1] sm:$0xff] %vm88, %v221
    %286 = vst.msk [vmem:[%s103 + $0x2a9] sm:$0xff] %vm88, %v222
    %287 = vst.msk [vmem:[%s103 + $0x2b9] sm:$0xff] %vm88, %v223
    %288 = vst.msk [vmem:[%s103 + $0x2c1] sm:$0xff] %vm88, %v224
    %289 = vst.msk [vmem:[%s103 + $0x2d1] sm:$0xff] %vm88, %v225
    %290 = vst.msk [vmem:[%s103 + $0x2d9] sm:$0xff] %vm88, %v226
    %291 = vst.msk [vmem:[%s103 + $0x2e9] sm:$0xff] %vm88, %v227
    %292 = vst.msk [vmem:[%s103 + $0x2f1] sm:$0xff] %vm88, %v228
    %293 = vst.msk [vmem:[%s103 + $0x301] sm:$0xff] %vm88, %v229
    %294 = vst.msk [vmem:[%s103 + $0x309] sm:$0xff] %vm88, %v230
    %295 = vst.msk [vmem:[%s103 + $0x319] sm:$0xff] %vm88, %v231
    %296 = vst.msk [vmem:[%s103 + $0x321] sm:$0xff] %vm88, %v232
    %v297 = vld [vmem:[#allocation6] sm:$0xff]
    %v298 = vld [vmem:[#allocation6 + $0x8] sm:$0x1]
    %v299 = vld [vmem:[#allocation2] sm:$0xff]
    %v300 = vld [vmem:[#allocation2 + $0x8] sm:$0xff]
    %v301 = vld [vmem:[#allocation2 + $0x18] sm:$0xff]
    %v302 = vld [vmem:[#allocation2 + $0x20] sm:$0xff]
    %v303 = vld [vmem:[#allocation2 + $0x30] sm:$0xff]
    %v304 = vld [vmem:[#allocation2 + $0x38] sm:$0xff]
    %v305 = vld [vmem:[#allocation2 + $0x48] sm:$0xff]
    %v306 = vld [vmem:[#allocation2 + $0x50] sm:$0xff]
    %v307 = vld [vmem:[#allocation2 + $0x60] sm:$0xff]
    %v308 = vld [vmem:[#allocation2 + $0x68] sm:$0xff]
    %v309 = vld [vmem:[#allocation2 + $0x78] sm:$0xff]
    %v310 = vld [vmem:[#allocation2 + $0x80] sm:$0xff]
    %v311 = vld [vmem:[#allocation2 + $0x90] sm:$0xff]
    %v312 = vld [vmem:[#allocation2 + $0x98] sm:$0xff]
    %v313 = vld [vmem:[#allocation2 + $0xa8] sm:$0xff]
    %v314 = vld [vmem:[#allocation2 + $0xb0] sm:$0xff]
    %v315 = vld [vmem:[#allocation2 + $0xc0] sm:$0xff]
    %v316 = vld [vmem:[#allocation2 + $0xc8] sm:$0xff]
    %v317 = vld [vmem:[#allocation2 + $0xd8] sm:$0xff]
    %v318 = vld [vmem:[#allocation2 + $0xe0] sm:$0xff]
    %v319 = vld [vmem:[#allocation2 + $0xf0] sm:$0xff]
    %v320 = vld [vmem:[#allocation2 + $0xf8] sm:$0xff]
    %v321 = vld [vmem:[#allocation2 + $0x108] sm:$0xff]
    %v322 = vld [vmem:[#allocation2 + $0x110] sm:$0xff]
    %v323 = vld [vmem:[#allocation2 + $0x120] sm:$0xff]
    %v324 = vld [vmem:[#allocation2 + $0x128] sm:$0xff]
    %v325 = vld [vmem:[#allocation2 + $0x138] sm:$0xff]
    %v326 = vld [vmem:[#allocation2 + $0x140] sm:$0xff]
    %v327 = vld [vmem:[#allocation2 + $0x150] sm:$0xff]
    %v328 = vld [vmem:[#allocation2 + $0x158] sm:$0xff]
    %v329 = vld [vmem:[#allocation2 + $0x168] sm:$0xff]
    %v330 = vld [vmem:[#allocation2 + $0x170] sm:$0xff]
    %v331 = vld [vmem:[#allocation2 + $0x180] sm:$0xff]
    %v332 = vld [vmem:[#allocation2 + $0x188] sm:$0xff]
    %v333 = vld [vmem:[#allocation2 + $0x198] sm:$0xff]
    %v334 = vld [vmem:[#allocation2 + $0x1a0] sm:$0xff]
    %v335 = vld [vmem:[#allocation2 + $0x1b0] sm:$0xff]
    %v336 = vld [vmem:[#allocation2 + $0x1b8] sm:$0xff]
    %v337 = vld [vmem:[#allocation2 + $0x1c8] sm:$0xff]
    %v338 = vld [vmem:[#allocation2 + $0x1d0] sm:$0xff]
    %v339 = vld [vmem:[#allocation2 + $0x1e0] sm:$0xff]
    %v340 = vld [vmem:[#allocation2 + $0x1e8] sm:$0xff]
    %v341 = vld [vmem:[#allocation2 + $0x1f8] sm:$0xff]
    %v342 = vld [vmem:[#allocation2 + $0x200] sm:$0xff]
    %v343 = vld [vmem:[#allocation2 + $0x210] sm:$0xff]
    %v344 = vld [vmem:[#allocation2 + $0x218] sm:$0xff]
    %v345 = vld [vmem:[#allocation2 + $0x228] sm:$0xff]
    %v346 = vld [vmem:[#allocation2 + $0x230] sm:$0xff]
    %v347 = vld [vmem:[#allocation2 + $0x240] sm:$0xff]
    %v348 = vld [vmem:[#allocation2 + $0x248] sm:$0xff]
    %v349 = vld [vmem:[#allocation2 + $0x258] sm:$0xff]
    %v350 = vld [vmem:[#allocation2 + $0x260] sm:$0xff]
    %v351 = vld [vmem:[#allocation2 + $0x270] sm:$0xff]
    %v352 = vld [vmem:[#allocation2 + $0x278] sm:$0xff]
    %v353 = vld [vmem:[#allocation2 + $0x288] sm:$0xff]
    %v354 = vld [vmem:[#allocation2 + $0x290] sm:$0xff]
    %v355 = vld [vmem:[#allocation2 + $0x2a0] sm:$0xff]
    %v356 = vld [vmem:[#allocation2 + $0x2a8] sm:$0xff]
    %v357 = vld [vmem:[#allocation2 + $0x2b8] sm:$0xff]
    %v358 = vld [vmem:[#allocation2 + $0x2c0] sm:$0xff]
    %v359 = vld [vmem:[#allocation2 + $0x2d0] sm:$0xff]
    %v360 = vld [vmem:[#allocation2 + $0x2d8] sm:$0xff]
    %v361 = vld [vmem:[#allocation2 + $0x2e8] sm:$0xff]
    %v362 = vld [vmem:[#allocation2 + $0x2f0] sm:$0xff]
    %v363 = vld [vmem:[#allocation2 + $0x300] sm:$0xff]
    %v364 = vld [vmem:[#allocation2 + $0x308] sm:$0xff]
    %v365 = vld [vmem:[#allocation2 + $0x318] sm:$0xff]
    %v366 = vld [vmem:[#allocation2 + $0x320] sm:$0xff]
    %v367 = vld [vmem:[#allocation2 + $0x330] sm:$0xff]
    %v368 = vld [vmem:[#allocation2 + $0x338] sm:$0xff]
    %v369 = vld [vmem:[#allocation2 + $0x348] sm:$0xff]
    %v370 = vld [vmem:[#allocation2 + $0x350] sm:$0xff]
    %v371 = vlaneseq
    %v372 = vshrl.u32 %v371, 7
    %v373 = vsub.s32 0, %v372
    %v374 = vrot.slane %v297, %v373
    %v375 = vmul.f32 %v299, %v374
    %v376 = vmul.f32 %v300, %v374
    %v377 = vmul.f32 %v301, %v374
    %v378 = vmul.f32 %v302, %v374
    %v379 = vmul.f32 %v303, %v374
    %v380 = vmul.f32 %v304, %v374
    %v381 = vmul.f32 %v305, %v374
    %v382 = vmul.f32 %v306, %v374
    %v383 = vmul.f32 %v307, %v374
    %v384 = vmul.f32 %v308, %v374
    %v385 = vmul.f32 %v309, %v374
    %v386 = vmul.f32 %v310, %v374
    %v387 = vmul.f32 %v311, %v374
    %v388 = vmul.f32 %v312, %v374
    %v389 = vmul.f32 %v313, %v374
    %v390 = vmul.f32 %v314, %v374
    %v391 = vmul.f32 %v315, %v374
    %v392 = vmul.f32 %v316, %v374
    %v393 = vmul.f32 %v317, %v374
    %v394 = vmul.f32 %v318, %v374
    %v395 = vmul.f32 %v319, %v374
    %v396 = vmul.f32 %v320, %v374
    %v397 = vmul.f32 %v321, %v374
    %v398 = vmul.f32 %v322, %v374
    %v399 = vmul.f32 %v323, %v374
    %v400 = vmul.f32 %v324, %v374
    %v401 = vmul.f32 %v325, %v374
    %v402 = vmul.f32 %v326, %v374
    %v403 = vmul.f32 %v327, %v374
    %v404 = vmul.f32 %v328, %v374
    %v405 = vmul.f32 %v329, %v374
    %v406 = vmul.f32 %v330, %v374
    %v407 = vmul.f32 %v335, %v374
    %v408 = vmul.f32 %v336, %v374
    %v409 = vmul.f32 %v337, %v374
    %v410 = vmul.f32 %v338, %v374
    %v411 = vmul.f32 %v339, %v374
    %v412 = vmul.f32 %v340, %v374
    %v413 = vmul.f32 %v341, %v374
    %v414 = vmul.f32 %v342, %v374
    %v415 = vmul.f32 %v343, %v374
    %v416 = vmul.f32 %v344, %v374
    %v417 = vmul.f32 %v345, %v374
    %v418 = vmul.f32 %v346, %v374
    %v419 = vmul.f32 %v347, %v374
    %v420 = vmul.f32 %v348, %v374
    %v421 = vmul.f32 %v349, %v374
    %v422 = vmul.f32 %v350, %v374
    %v423 = vmul.f32 %v351, %v374
    %v424 = vmul.f32 %v352, %v374
    %v425 = vmul.f32 %v353, %v374
    %v426 = vmul.f32 %v354, %v374
    %v427 = vmul.f32 %v355, %v374
    %v428 = vmul.f32 %v356, %v374
    %v429 = vmul.f32 %v357, %v374
    %v430 = vmul.f32 %v358, %v374
    %v431 = vmul.f32 %v359, %v374
    %v432 = vmul.f32 %v360, %v374
    %v433 = vmul.f32 %v361, %v374
    %v434 = vmul.f32 %v362, %v374
    %v435 = vmul.f32 %v363, %v374
    %v436 = vmul.f32 %v364, %v374
    %v437 = vmul.f32 %v365, %v374
    %v438 = vmul.f32 %v366, %v374
    %v439 = vlaneseq
    %v440 = vshrl.u32 %v439, 7
    %v441 = vsub.s32 3, %v440
    %v442 = vrot.slane %v297, %v441
    %v443 = vmul.f32 %v301, %v442
    %v444 = vmul.f32 %v302, %v442
    %v445 = vmul.f32 %v303, %v442
    %v446 = vmul.f32 %v304, %v442
    %v447 = vmul.f32 %v305, %v442
    %v448 = vmul.f32 %v306, %v442
    %v449 = vmul.f32 %v307, %v442
    %v450 = vmul.f32 %v308, %v442
    %v451 = vmul.f32 %v309, %v442
    %v452 = vmul.f32 %v310, %v442
    %v453 = vmul.f32 %v311, %v442
    %v454 = vmul.f32 %v312, %v442
    %v455 = vmul.f32 %v313, %v442
    %v456 = vmul.f32 %v314, %v442
    %v457 = vmul.f32 %v315, %v442
    %v458 = vmul.f32 %v316, %v442
    %v459 = vmul.f32 %v317, %v442
    %v460 = vmul.f32 %v318, %v442
    %v461 = vmul.f32 %v319, %v442
    %v462 = vmul.f32 %v320, %v442
    %v463 = vmul.f32 %v321, %v442
    %v464 = vmul.f32 %v322, %v442
    %v465 = vmul.f32 %v323, %v442
    %v466 = vmul.f32 %v324, %v442
    %v467 = vmul.f32 %v325, %v442
    %v468 = vmul.f32 %v326, %v442
    %v469 = vmul.f32 %v327, %v442
    %v470 = vmul.f32 %v328, %v442
    %v471 = vmul.f32 %v329, %v442
    %v472 = vmul.f32 %v330, %v442
    %v473 = vmul.f32 %v331, %v442
    %v474 = vmul.f32 %v332, %v442
    %v475 = vmul.f32 %v337, %v442
    %v476 = vmul.f32 %v338, %v442
    %v477 = vmul.f32 %v339, %v442
    %v478 = vmul.f32 %v340, %v442
    %v479 = vmul.f32 %v341, %v442
    %v480 = vmul.f32 %v342, %v442
    %v481 = vmul.f32 %v343, %v442
    %v482 = vmul.f32 %v344, %v442
    %v483 = vmul.f32 %v345, %v442
    %v484 = vmul.f32 %v346, %v442
    %v485 = vmul.f32 %v347, %v442
    %v486 = vmul.f32 %v348, %v442
    %v487 = vmul.f32 %v349, %v442
    %v488 = vmul.f32 %v350, %v442
    %v489 = vmul.f32 %v351, %v442
    %v490 = vmul.f32 %v352, %v442
    %v491 = vmul.f32 %v353, %v442
    %v492 = vmul.f32 %v354, %v442
    %v493 = vmul.f32 %v355, %v442
    %v494 = vmul.f32 %v356, %v442
    %v495 = vmul.f32 %v357, %v442
    %v496 = vmul.f32 %v358, %v442
    %v497 = vmul.f32 %v359, %v442
    %v498 = vmul.f32 %v360, %v442
    %v499 = vmul.f32 %v361, %v442
    %v500 = vmul.f32 %v362, %v442
    %v501 = vmul.f32 %v363, %v442
    %v502 = vmul.f32 %v364, %v442
    %v503 = vmul.f32 %v365, %v442
    %v504 = vmul.f32 %v366, %v442
    %v505 = vmul.f32 %v367, %v442
    %v506 = vmul.f32 %v368, %v442
    %v507 = vadd.f32 %v375, %v443
    %v508 = vadd.f32 %v376, %v444
    %v509 = vadd.f32 %v377, %v445
    %v510 = vadd.f32 %v378, %v446
    %v511 = vadd.f32 %v379, %v447
    %v512 = vadd.f32 %v380, %v448
    %v513 = vadd.f32 %v381, %v449
    %v514 = vadd.f32 %v382, %v450
    %v515 = vadd.f32 %v383, %v451
    %v516 = vadd.f32 %v384, %v452
    %v517 = vadd.f32 %v385, %v453
    %v518 = vadd.f32 %v386, %v454
    %v519 = vadd.f32 %v387, %v455
    %v520 = vadd.f32 %v388, %v456
    %v521 = vadd.f32 %v389, %v457
    %v522 = vadd.f32 %v390, %v458
    %v523 = vadd.f32 %v391, %v459
    %v524 = vadd.f32 %v392, %v460
    %v525 = vadd.f32 %v393, %v461
    %v526 = vadd.f32 %v394, %v462
    %v527 = vadd.f32 %v395, %v463
    %v528 = vadd.f32 %v396, %v464
    %v529 = vadd.f32 %v397, %v465
    %v530 = vadd.f32 %v398, %v466
    %v531 = vadd.f32 %v399, %v467
    %v532 = vadd.f32 %v400, %v468
    %v533 = vadd.f32 %v401, %v469
    %v534 = vadd.f32 %v402, %v470
    %v535 = vadd.f32 %v403, %v471
    %v536 = vadd.f32 %v404, %v472
    %v537 = vadd.f32 %v405, %v473
    %v538 = vadd.f32 %v406, %v474
    %v539 = vadd.f32 %v407, %v475
    %v540 = vadd.f32 %v408, %v476
    %v541 = vadd.f32 %v409, %v477
    %v542 = vadd.f32 %v410, %v478
    %v543 = vadd.f32 %v411, %v479
    %v544 = vadd.f32 %v412, %v480
    %v545 = vadd.f32 %v413, %v481
    %v546 = vadd.f32 %v414, %v482
    %v547 = vadd.f32 %v415, %v483
    %v548 = vadd.f32 %v416, %v484
    %v549 = vadd.f32 %v417, %v485
    %v550 = vadd.f32 %v418, %v486
    %v551 = vadd.f32 %v419, %v487
    %v552 = vadd.f32 %v420, %v488
    %v553 = vadd.f32 %v421, %v489
    %v554 = vadd.f32 %v422, %v490
    %v555 = vadd.f32 %v423, %v491
    %v556 = vadd.f32 %v424, %v492
    %v557 = vadd.f32 %v425, %v493
    %v558 = vadd.f32 %v426, %v494
    %v559 = vadd.f32 %v427, %v495
    %v560 = vadd.f32 %v428, %v496
    %v561 = vadd.f32 %v429, %v497
    %v562 = vadd.f32 %v430, %v498
    %v563 = vadd.f32 %v431, %v499
    %v564 = vadd.f32 %v432, %v500
    %v565 = vadd.f32 %v433, %v501
    %v566 = vadd.f32 %v434, %v502
    %v567 = vadd.f32 %v435, %v503
    %v568 = vadd.f32 %v436, %v504
    %v569 = vadd.f32 %v437, %v505
    %v570 = vadd.f32 %v438, %v506
    %v571 = vlaneseq
    %v572 = vshrl.u32 %v571, 7
    %v573 = vsub.s32 6, %v572
    %v574 = vrot.slane %v297, %v573
    %v575 = vmul.f32 %v303, %v574
    %v576 = vmul.f32 %v304, %v574
    %v577 = vmul.f32 %v305, %v574
    %v578 = vmul.f32 %v306, %v574
    %v579 = vmul.f32 %v307, %v574
    %v580 = vmul.f32 %v308, %v574
    %v581 = vmul.f32 %v309, %v574
    %v582 = vmul.f32 %v310, %v574
    %v583 = vmul.f32 %v311, %v574
    %v584 = vmul.f32 %v312, %v574
    %v585 = vmul.f32 %v313, %v574
    %v586 = vmul.f32 %v314, %v574
    %v587 = vmul.f32 %v315, %v574
    %v588 = vmul.f32 %v316, %v574
    %v589 = vmul.f32 %v317, %v574
    %v590 = vmul.f32 %v318, %v574
    %v591 = vmul.f32 %v319, %v574
    %v592 = vmul.f32 %v320, %v574
    %v593 = vmul.f32 %v321, %v574
    %v594 = vmul.f32 %v322, %v574
    %v595 = vmul.f32 %v323, %v574
    %v596 = vmul.f32 %v324, %v574
    %v597 = vmul.f32 %v325, %v574
    %v598 = vmul.f32 %v326, %v574
    %v599 = vmul.f32 %v327, %v574
    %v600 = vmul.f32 %v328, %v574
    %v601 = vmul.f32 %v329, %v574
    %v602 = vmul.f32 %v330, %v574
    %v603 = vmul.f32 %v331, %v574
    %v604 = vmul.f32 %v332, %v574
    %v605 = vmul.f32 %v333, %v574
    %v606 = vmul.f32 %v334, %v574
    %v607 = vmul.f32 %v339, %v574
    %v608 = vmul.f32 %v340, %v574
    %v609 = vmul.f32 %v341, %v574
    %v610 = vmul.f32 %v342, %v574
    %v611 = vmul.f32 %v343, %v574
    %v612 = vmul.f32 %v344, %v574
    %v613 = vmul.f32 %v345, %v574
    %v614 = vmul.f32 %v346, %v574
    %v615 = vmul.f32 %v347, %v574
    %v616 = vmul.f32 %v348, %v574
    %v617 = vmul.f32 %v349, %v574
    %v618 = vmul.f32 %v350, %v574
    %v619 = vmul.f32 %v351, %v574
    %v620 = vmul.f32 %v352, %v574
    %v621 = vmul.f32 %v353, %v574
    %v622 = vmul.f32 %v354, %v574
    %v623 = vmul.f32 %v355, %v574
    %v624 = vmul.f32 %v356, %v574
    %v625 = vmul.f32 %v357, %v574
    %v626 = vmul.f32 %v358, %v574
    %v627 = vmul.f32 %v359, %v574
    %v628 = vmul.f32 %v360, %v574
    %v629 = vmul.f32 %v361, %v574
    %v630 = vmul.f32 %v362, %v574
    %v631 = vmul.f32 %v363, %v574
    %v632 = vmul.f32 %v364, %v574
    %v633 = vmul.f32 %v365, %v574
    %v634 = vmul.f32 %v366, %v574
    %v635 = vmul.f32 %v367, %v574
    %v636 = vmul.f32 %v368, %v574
    %v637 = vmul.f32 %v369, %v574
    %v638 = vmul.f32 %v370, %v574
    %v639 = vadd.f32 %v507, %v575
    %v640 = vadd.f32 %v508, %v576
    %v641 = vadd.f32 %v509, %v577
    %v642 = vadd.f32 %v510, %v578
    %v643 = vadd.f32 %v511, %v579
    %v644 = vadd.f32 %v512, %v580
    %v645 = vadd.f32 %v513, %v581
    %v646 = vadd.f32 %v514, %v582
    %v647 = vadd.f32 %v515, %v583
    %v648 = vadd.f32 %v516, %v584
    %v649 = vadd.f32 %v517, %v585
    %v650 = vadd.f32 %v518, %v586
    %v651 = vadd.f32 %v519, %v587
    %v652 = vadd.f32 %v520, %v588
    %v653 = vadd.f32 %v521, %v589
    %v654 = vadd.f32 %v522, %v590
    %v655 = vadd.f32 %v523, %v591
    %v656 = vadd.f32 %v524, %v592
    %v657 = vadd.f32 %v525, %v593
    %v658 = vadd.f32 %v526, %v594
    %v659 = vadd.f32 %v527, %v595
    %v660 = vadd.f32 %v528, %v596
    %v661 = vadd.f32 %v529, %v597
    %v662 = vadd.f32 %v530, %v598
    %v663 = vadd.f32 %v531, %v599
    %v664 = vadd.f32 %v532, %v600
    %v665 = vadd.f32 %v533, %v601
    %v666 = vadd.f32 %v534, %v602
    %v667 = vadd.f32 %v535, %v603
    %v668 = vadd.f32 %v536, %v604
    %v669 = vadd.f32 %v537, %v605
    %v670 = vadd.f32 %v538, %v606
    %v671 = vadd.f32 %v539, %v607
    %v672 = vadd.f32 %v540, %v608
    %v673 = vadd.f32 %v541, %v609
    %v674 = vadd.f32 %v542, %v610
    %v675 = vadd.f32 %v543, %v611
    %v676 = vadd.f32 %v544, %v612
    %v677 = vadd.f32 %v545, %v613
    %v678 = vadd.f32 %v546, %v614
    %v679 = vadd.f32 %v547, %v615
    %v680 = vadd.f32 %v548, %v616
    %v681 = vadd.f32 %v549, %v617
    %v682 = vadd.f32 %v550, %v618
    %v683 = vadd.f32 %v551, %v619
    %v684 = vadd.f32 %v552, %v620
    %v685 = vadd.f32 %v553, %v621
    %v686 = vadd.f32 %v554, %v622
    %v687 = vadd.f32 %v555, %v623
    %v688 = vadd.f32 %v556, %v624
    %v689 = vadd.f32 %v557, %v625
    %v690 = vadd.f32 %v558, %v626
    %v691 = vadd.f32 %v559, %v627
    %v692 = vadd.f32 %v560, %v628
    %v693 = vadd.f32 %v561, %v629
    %v694 = vadd.f32 %v562, %v630
    %v695 = vadd.f32 %v563, %v631
    %v696 = vadd.f32 %v564, %v632
    %v697 = vadd.f32 %v565, %v633
    %v698 = vadd.f32 %v566, %v634
    %v699 = vadd.f32 %v567, %v635
    %v700 = vadd.f32 %v568, %v636
    %v701 = vadd.f32 %v569, %v637
    %v702 = vadd.f32 %v570, %v638
    %v703 = vld [vmem:[#allocation2 + $0x1] sm:$0xff]
    %v704 = vld [vmem:[#allocation2 + $0x9] sm:$0xff]
    %v705 = vld [vmem:[#allocation2 + $0x19] sm:$0xff]
    %v706 = vld [vmem:[#allocation2 + $0x21] sm:$0xff]
    %v707 = vld [vmem:[#allocation2 + $0x31] sm:$0xff]
    %v708 = vld [vmem:[#allocation2 + $0x39] sm:$0xff]
    %v709 = vld [vmem:[#allocation2 + $0x49] sm:$0xff]
    %v710 = vld [vmem:[#allocation2 + $0x51] sm:$0xff]
    %v711 = vld [vmem:[#allocation2 + $0x61] sm:$0xff]
    %v712 = vld [vmem:[#allocation2 + $0x69] sm:$0xff]
    %v713 = vld [vmem:[#allocation2 + $0x79] sm:$0xff]
    %v714 = vld [vmem:[#allocation2 + $0x81] sm:$0xff]
    %v715 = vld [vmem:[#allocation2 + $0x91] sm:$0xff]
    %v716 = vld [vmem:[#allocation2 + $0x99] sm:$0xff]
    %v717 = vld [vmem:[#allocation2 + $0xa9] sm:$0xff]
    %v718 = vld [vmem:[#allocation2 + $0xb1] sm:$0xff]
    %v719 = vld [vmem:[#allocation2 + $0xc1] sm:$0xff]
    %v720 = vld [vmem:[#allocation2 + $0xc9] sm:$0xff]
    %v721 = vld [vmem:[#allocation2 + $0xd9] sm:$0xff]
    %v722 = vld [vmem:[#allocation2 + $0xe1] sm:$0xff]
    %v723 = vld [vmem:[#allocation2 + $0xf1] sm:$0xff]
    %v724 = vld [vmem:[#allocation2 + $0xf9] sm:$0xff]
    %v725 = vld [vmem:[#allocation2 + $0x109] sm:$0xff]
    %v726 = vld [vmem:[#allocation2 + $0x111] sm:$0xff]
    %v727 = vld [vmem:[#allocation2 + $0x121] sm:$0xff]
    %v728 = vld [vmem:[#allocation2 + $0x129] sm:$0xff]
    %v729 = vld [vmem:[#allocation2 + $0x139] sm:$0xff]
    %v730 = vld [vmem:[#allocation2 + $0x141] sm:$0xff]
    %v731 = vld [vmem:[#allocation2 + $0x151] sm:$0xff]
    %v732 = vld [vmem:[#allocation2 + $0x159] sm:$0xff]
    %v733 = vld [vmem:[#allocation2 + $0x169] sm:$0xff]
    %v734 = vld [vmem:[#allocation2 + $0x171] sm:$0xff]
    %v735 = vld [vmem:[#allocation2 + $0x181] sm:$0xff]
    %v736 = vld [vmem:[#allocation2 + $0x189] sm:$0xff]
    %v737 = vld [vmem:[#allocation2 + $0x199] sm:$0xff]
    %v738 = vld [vmem:[#allocation2 + $0x1a1] sm:$0xff]
    %v739 = vld [vmem:[#allocation2 + $0x1b1] sm:$0xff]
    %v740 = vld [vmem:[#allocation2 + $0x1b9] sm:$0xff]
    %v741 = vld [vmem:[#allocation2 + $0x1c9] sm:$0xff]
    %v742 = vld [vmem:[#allocation2 + $0x1d1] sm:$0xff]
    %v743 = vld [vmem:[#allocation2 + $0x1e1] sm:$0xff]
    %v744 = vld [vmem:[#allocation2 + $0x1e9] sm:$0xff]
    %v745 = vld [vmem:[#allocation2 + $0x1f9] sm:$0xff]
    %v746 = vld [vmem:[#allocation2 + $0x201] sm:$0xff]
    %v747 = vld [vmem:[#allocation2 + $0x211] sm:$0xff]
    %v748 = vld [vmem:[#allocation2 + $0x219] sm:$0xff]
    %v749 = vld [vmem:[#allocation2 + $0x229] sm:$0xff]
    %v750 = vld [vmem:[#allocation2 + $0x231] sm:$0xff]
    %v751 = vld [vmem:[#allocation2 + $0x241] sm:$0xff]
    %v752 = vld [vmem:[#allocation2 + $0x249] sm:$0xff]
    %v753 = vld [vmem:[#allocation2 + $0x259] sm:$0xff]
    %v754 = vld [vmem:[#allocation2 + $0x261] sm:$0xff]
    %v755 = vld [vmem:[#allocation2 + $0x271] sm:$0xff]
    %v756 = vld [vmem:[#allocation2 + $0x279] sm:$0xff]
    %v757 = vld [vmem:[#allocation2 + $0x289] sm:$0xff]
    %v758 = vld [vmem:[#allocation2 + $0x291] sm:$0xff]
    %v759 = vld [vmem:[#allocation2 + $0x2a1] sm:$0xff]
    %v760 = vld [vmem:[#allocation2 + $0x2a9] sm:$0xff]
    %v761 = vld [vmem:[#allocation2 + $0x2b9] sm:$0xff]
    %v762 = vld [vmem:[#allocation2 + $0x2c1] sm:$0xff]
    %v763 = vld [vmem:[#allocation2 + $0x2d1] sm:$0xff]
    %v764 = vld [vmem:[#allocation2 + $0x2d9] sm:$0xff]
    %v765 = vld [vmem:[#allocation2 + $0x2e9] sm:$0xff]
    %v766 = vld [vmem:[#allocation2 + $0x2f1] sm:$0xff]
    %v767 = vld [vmem:[#allocation2 + $0x301] sm:$0xff]
    %v768 = vld [vmem:[#allocation2 + $0x309] sm:$0xff]
    %v769 = vld [vmem:[#allocation2 + $0x319] sm:$0xff]
    %v770 = vld [vmem:[#allocation2 + $0x321] sm:$0xff]
    %v771 = vld [vmem:[#allocation2 + $0x331] sm:$0xff]
    %v772 = vld [vmem:[#allocation2 + $0x339] sm:$0xff]
    %v773 = vld [vmem:[#allocation2 + $0x349] sm:$0xff]
    %v774 = vld [vmem:[#allocation2 + $0x351] sm:$0xff]
    %v775 = vlaneseq
    %v776 = vshrl.u32 %v775, 7
    %v777 = vsub.s32 1, %v776
    %v778 = vrot.slane %v297, %v777
    %v779 = vmul.f32 %v703, %v778
    %v780 = vmul.f32 %v704, %v778
    %v781 = vmul.f32 %v705, %v778
    %v782 = vmul.f32 %v706, %v778
    %v783 = vmul.f32 %v707, %v778
    %v784 = vmul.f32 %v708, %v778
    %v785 = vmul.f32 %v709, %v778
    %v786 = vmul.f32 %v710, %v778
    %v787 = vmul.f32 %v711, %v778
    %v788 = vmul.f32 %v712, %v778
    %v789 = vmul.f32 %v713, %v778
    %v790 = vmul.f32 %v714, %v778
    %v791 = vmul.f32 %v715, %v778
    %v792 = vmul.f32 %v716, %v778
    %v793 = vmul.f32 %v717, %v778
    %v794 = vmul.f32 %v718, %v778
    %v795 = vmul.f32 %v719, %v778
    %v796 = vmul.f32 %v720, %v778
    %v797 = vmul.f32 %v721, %v778
    %v798 = vmul.f32 %v722, %v778
    %v799 = vmul.f32 %v723, %v778
    %v800 = vmul.f32 %v724, %v778
    %v801 = vmul.f32 %v725, %v778
    %v802 = vmul.f32 %v726, %v778
    %v803 = vmul.f32 %v727, %v778
    %v804 = vmul.f32 %v728, %v778
    %v805 = vmul.f32 %v729, %v778
    %v806 = vmul.f32 %v730, %v778
    %v807 = vmul.f32 %v731, %v778
    %v808 = vmul.f32 %v732, %v778
    %v809 = vmul.f32 %v733, %v778
    %v810 = vmul.f32 %v734, %v778
    %v811 = vmul.f32 %v739, %v778
    %v812 = vmul.f32 %v740, %v778
    %v813 = vmul.f32 %v741, %v778
    %v814 = vmul.f32 %v742, %v778
    %v815 = vmul.f32 %v743, %v778
    %v816 = vmul.f32 %v744, %v778
    %v817 = vmul.f32 %v745, %v778
    %v818 = vmul.f32 %v746, %v778
    %v819 = vmul.f32 %v747, %v778
    %v820 = vmul.f32 %v748, %v778
    %v821 = vmul.f32 %v749, %v778
    %v822 = vmul.f32 %v750, %v778
    %v823 = vmul.f32 %v751, %v778
    %v824 = vmul.f32 %v752, %v778
    %v825 = vmul.f32 %v753, %v778
    %v826 = vmul.f32 %v754, %v778
    %v827 = vmul.f32 %v755, %v778
    %v828 = vmul.f32 %v756, %v778
    %v829 = vmul.f32 %v757, %v778
    %v830 = vmul.f32 %v758, %v778
    %v831 = vmul.f32 %v759, %v778
    %v832 = vmul.f32 %v760, %v778
    %v833 = vmul.f32 %v761, %v778
    %v834 = vmul.f32 %v762, %v778
    %v835 = vmul.f32 %v763, %v778
    %v836 = vmul.f32 %v764, %v778
    %v837 = vmul.f32 %v765, %v778
    %v838 = vmul.f32 %v766, %v778
    %v839 = vmul.f32 %v767, %v778
    %v840 = vmul.f32 %v768, %v778
    %v841 = vmul.f32 %v769, %v778
    %v842 = vmul.f32 %v770, %v778
    %v843 = vlaneseq
    %v844 = vshrl.u32 %v843, 7
    %v845 = vsub.s32 4, %v844
    %v846 = vrot.slane %v297, %v845
    %v847 = vmul.f32 %v705, %v846
    %v848 = vmul.f32 %v706, %v846
    %v849 = vmul.f32 %v707, %v846
    %v850 = vmul.f32 %v708, %v846
    %v851 = vmul.f32 %v709, %v846
    %v852 = vmul.f32 %v710, %v846
    %v853 = vmul.f32 %v711, %v846
    %v854 = vmul.f32 %v712, %v846
    %v855 = vmul.f32 %v713, %v846
    %v856 = vmul.f32 %v714, %v846
    %v857 = vmul.f32 %v715, %v846
    %v858 = vmul.f32 %v716, %v846
    %v859 = vmul.f32 %v717, %v846
    %v860 = vmul.f32 %v718, %v846
    %v861 = vmul.f32 %v719, %v846
    %v862 = vmul.f32 %v720, %v846
    %v863 = vmul.f32 %v721, %v846
    %v864 = vmul.f32 %v722, %v846
    %v865 = vmul.f32 %v723, %v846
    %v866 = vmul.f32 %v724, %v846
    %v867 = vmul.f32 %v725, %v846
    %v868 = vmul.f32 %v726, %v846
    %v869 = vmul.f32 %v727, %v846
    %v870 = vmul.f32 %v728, %v846
    %v871 = vmul.f32 %v729, %v846
    %v872 = vmul.f32 %v730, %v846
    %v873 = vmul.f32 %v731, %v846
    %v874 = vmul.f32 %v732, %v846
    %v875 = vmul.f32 %v733, %v846
    %v876 = vmul.f32 %v734, %v846
    %v877 = vmul.f32 %v735, %v846
    %v878 = vmul.f32 %v736, %v846
    %v879 = vmul.f32 %v741, %v846
    %v880 = vmul.f32 %v742, %v846
    %v881 = vmul.f32 %v743, %v846
    %v882 = vmul.f32 %v744, %v846
    %v883 = vmul.f32 %v745, %v846
    %v884 = vmul.f32 %v746, %v846
    %v885 = vmul.f32 %v747, %v846
    %v886 = vmul.f32 %v748, %v846
    %v887 = vmul.f32 %v749, %v846
    %v888 = vmul.f32 %v750, %v846
    %v889 = vmul.f32 %v751, %v846
    %v890 = vmul.f32 %v752, %v846
    %v891 = vmul.f32 %v753, %v846
    %v892 = vmul.f32 %v754, %v846
    %v893 = vmul.f32 %v755, %v846
    %v894 = vmul.f32 %v756, %v846
    %v895 = vmul.f32 %v757, %v846
    %v896 = vmul.f32 %v758, %v846
    %v897 = vmul.f32 %v759, %v846
    %v898 = vmul.f32 %v760, %v846
    %v899 = vmul.f32 %v761, %v846
    %v900 = vmul.f32 %v762, %v846
    %v901 = vmul.f32 %v763, %v846
    %v902 = vmul.f32 %v764, %v846
    %v903 = vmul.f32 %v765, %v846
    %v904 = vmul.f32 %v766, %v846
    %v905 = vmul.f32 %v767, %v846
    %v906 = vmul.f32 %v768, %v846
    %v907 = vmul.f32 %v769, %v846
    %v908 = vmul.f32 %v770, %v846
    %v909 = vmul.f32 %v771, %v846
    %v910 = vmul.f32 %v772, %v846
    %v911 = vadd.f32 %v779, %v847
    %v912 = vadd.f32 %v780, %v848
    %v913 = vadd.f32 %v781, %v849
    %v914 = vadd.f32 %v782, %v850
    %v915 = vadd.f32 %v783, %v851
    %v916 = vadd.f32 %v784, %v852
    %v917 = vadd.f32 %v785, %v853
    %v918 = vadd.f32 %v786, %v854
    %v919 = vadd.f32 %v787, %v855
    %v920 = vadd.f32 %v788, %v856
    %v921 = vadd.f32 %v789, %v857
    %v922 = vadd.f32 %v790, %v858
    %v923 = vadd.f32 %v791, %v859
    %v924 = vadd.f32 %v792, %v860
    %v925 = vadd.f32 %v793, %v861
    %v926 = vadd.f32 %v794, %v862
    %v927 = vadd.f32 %v795, %v863
    %v928 = vadd.f32 %v796, %v864
    %v929 = vadd.f32 %v797, %v865
    %v930 = vadd.f32 %v798, %v866
    %v931 = vadd.f32 %v799, %v867
    %v932 = vadd.f32 %v800, %v868
    %v933 = vadd.f32 %v801, %v869
    %v934 = vadd.f32 %v802, %v870
    %v935 = vadd.f32 %v803, %v871
    %v936 = vadd.f32 %v804, %v872
    %v937 = vadd.f32 %v805, %v873
    %v938 = vadd.f32 %v806, %v874
    %v939 = vadd.f32 %v807, %v875
    %v940 = vadd.f32 %v808, %v876
    %v941 = vadd.f32 %v809, %v877
    %v942 = vadd.f32 %v810, %v878
    %v943 = vadd.f32 %v811, %v879
    %v944 = vadd.f32 %v812, %v880
    %v945 = vadd.f32 %v813, %v881
    %v946 = vadd.f32 %v814, %v882
    %v947 = vadd.f32 %v815, %v883
    %v948 = vadd.f32 %v816, %v884
    %v949 = vadd.f32 %v817, %v885
    %v950 = vadd.f32 %v818, %v886
    %v951 = vadd.f32 %v819, %v887
    %v952 = vadd.f32 %v820, %v888
    %v953 = vadd.f32 %v821, %v889
    %v954 = vadd.f32 %v822, %v890
    %v955 = vadd.f32 %v823, %v891
    %v956 = vadd.f32 %v824, %v892
    %v957 = vadd.f32 %v825, %v893
    %v958 = vadd.f32 %v826, %v894
    %v959 = vadd.f32 %v827, %v895
    %v960 = vadd.f32 %v828, %v896
    %v961 = vadd.f32 %v829, %v897
    %v962 = vadd.f32 %v830, %v898
    %v963 = vadd.f32 %v831, %v899
    %v964 = vadd.f32 %v832, %v900
    %v965 = vadd.f32 %v833, %v901
    %v966 = vadd.f32 %v834, %v902
    %v967 = vadd.f32 %v835, %v903
    %v968 = vadd.f32 %v836, %v904
    %v969 = vadd.f32 %v837, %v905
    %v970 = vadd.f32 %v838, %v906
    %v971 = vadd.f32 %v839, %v907
    %v972 = vadd.f32 %v840, %v908
    %v973 = vadd.f32 %v841, %v909
    %v974 = vadd.f32 %v842, %v910
    %v975 = vlaneseq
    %v976 = vshrl.u32 %v975, 7
    %v977 = vsub.s32 7, %v976
    %v978 = vrot.slane %v297, %v977
    %v979 = vmul.f32 %v707, %v978
    %v980 = vmul.f32 %v708, %v978
    %v981 = vmul.f32 %v709, %v978
    %v982 = vmul.f32 %v710, %v978
    %v983 = vmul.f32 %v711, %v978
    %v984 = vmul.f32 %v712, %v978
    %v985 = vmul.f32 %v713, %v978
    %v986 = vmul.f32 %v714, %v978
    %v987 = vmul.f32 %v715, %v978
    %v988 = vmul.f32 %v716, %v978
    %v989 = vmul.f32 %v717, %v978
    %v990 = vmul.f32 %v718, %v978
    %v991 = vmul.f32 %v719, %v978
    %v992 = vmul.f32 %v720, %v978
    %v993 = vmul.f32 %v721, %v978
    %v994 = vmul.f32 %v722, %v978
    %v995 = vmul.f32 %v723, %v978
    %v996 = vmul.f32 %v724, %v978
    %v997 = vmul.f32 %v725, %v978
    %v998 = vmul.f32 %v726, %v978
    %v999 = vmul.f32 %v727, %v978
    %v1000 = vmul.f32 %v728, %v978
    %v1001 = vmul.f32 %v729, %v978
    %v1002 = vmul.f32 %v730, %v978
    %v1003 = vmul.f32 %v731, %v978
    %v1004 = vmul.f32 %v732, %v978
    %v1005 = vmul.f32 %v733, %v978
    %v1006 = vmul.f32 %v734, %v978
    %v1007 = vmul.f32 %v735, %v978
    %v1008 = vmul.f32 %v736, %v978
    %v1009 = vmul.f32 %v737, %v978
    %v1010 = vmul.f32 %v738, %v978
    %v1011 = vmul.f32 %v743, %v978
    %v1012 = vmul.f32 %v744, %v978
    %v1013 = vmul.f32 %v745, %v978
    %v1014 = vmul.f32 %v746, %v978
    %v1015 = vmul.f32 %v747, %v978
    %v1016 = vmul.f32 %v748, %v978
    %v1017 = vmul.f32 %v749, %v978
    %v1018 = vmul.f32 %v750, %v978
    %v1019 = vmul.f32 %v751, %v978
    %v1020 = vmul.f32 %v752, %v978
    %v1021 = vmul.f32 %v753, %v978
    %v1022 = vmul.f32 %v754, %v978
    %v1023 = vmul.f32 %v755, %v978
    %v1024 = vmul.f32 %v756, %v978
    %v1025 = vmul.f32 %v757, %v978
    %v1026 = vmul.f32 %v758, %v978
    %v1027 = vmul.f32 %v759, %v978
    %v1028 = vmul.f32 %v760, %v978
    %v1029 = vmul.f32 %v761, %v978
    %v1030 = vmul.f32 %v762, %v978
    %v1031 = vmul.f32 %v763, %v978
    %v1032 = vmul.f32 %v764, %v978
    %v1033 = vmul.f32 %v765, %v978
    %v1034 = vmul.f32 %v766, %v978
    %v1035 = vmul.f32 %v767, %v978
    %v1036 = vmul.f32 %v768, %v978
    %v1037 = vmul.f32 %v769, %v978
    %v1038 = vmul.f32 %v770, %v978
    %v1039 = vmul.f32 %v771, %v978
    %v1040 = vmul.f32 %v772, %v978
    %v1041 = vmul.f32 %v773, %v978
    %v1042 = vmul.f32 %v774, %v978
    %v1043 = vadd.f32 %v911, %v979
    %v1044 = vadd.f32 %v912, %v980
    %v1045 = vadd.f32 %v913, %v981
    %v1046 = vadd.f32 %v914, %v982
    %v1047 = vadd.f32 %v915, %v983
    %v1048 = vadd.f32 %v916, %v984
    %v1049 = vadd.f32 %v917, %v985
    %v1050 = vadd.f32 %v918, %v986
    %v1051 = vadd.f32 %v919, %v987
    %v1052 = vadd.f32 %v920, %v988
    %v1053 = vadd.f32 %v921, %v989
    %v1054 = vadd.f32 %v922, %v990
    %v1055 = vadd.f32 %v923, %v991
    %v1056 = vadd.f32 %v924, %v992
    %v1057 = vadd.f32 %v925, %v993
    %v1058 = vadd.f32 %v926, %v994
    %v1059 = vadd.f32 %v927, %v995
    %v1060 = vadd.f32 %v928, %v996
    %v1061 = vadd.f32 %v929, %v997
    %v1062 = vadd.f32 %v930, %v998
    %v1063 = vadd.f32 %v931, %v999
    %v1064 = vadd.f32 %v932, %v1000
    %v1065 = vadd.f32 %v933, %v1001
    %v1066 = vadd.f32 %v934, %v1002
    %v1067 = vadd.f32 %v935, %v1003
    %v1068 = vadd.f32 %v936, %v1004
    %v1069 = vadd.f32 %v937, %v1005
    %v1070 = vadd.f32 %v938, %v1006
    %v1071 = vadd.f32 %v939, %v1007
    %v1072 = vadd.f32 %v940, %v1008
    %v1073 = vadd.f32 %v941, %v1009
    %v1074 = vadd.f32 %v942, %v1010
    %v1075 = vadd.f32 %v943, %v1011
    %v1076 = vadd.f32 %v944, %v1012
    %v1077 = vadd.f32 %v945, %v1013
    %v1078 = vadd.f32 %v946, %v1014
    %v1079 = vadd.f32 %v947, %v1015
    %v1080 = vadd.f32 %v948, %v1016
    %v1081 = vadd.f32 %v949, %v1017
    %v1082 = vadd.f32 %v950, %v1018
    %v1083 = vadd.f32 %v951, %v1019
    %v1084 = vadd.f32 %v952, %v1020
    %v1085 = vadd.f32 %v953, %v1021
    %v1086 = vadd.f32 %v954, %v1022
    %v1087 = vadd.f32 %v955, %v1023
    %v1088 = vadd.f32 %v956, %v1024
    %v1089 = vadd.f32 %v957, %v1025
    %v1090 = vadd.f32 %v958, %v1026
    %v1091 = vadd.f32 %v959, %v1027
    %v1092 = vadd.f32 %v960, %v1028
    %v1093 = vadd.f32 %v961, %v1029
    %v1094 = vadd.f32 %v962, %v1030
    %v1095 = vadd.f32 %v963, %v1031
    %v1096 = vadd.f32 %v964, %v1032
    %v1097 = vadd.f32 %v965, %v1033
    %v1098 = vadd.f32 %v966, %v1034
    %v1099 = vadd.f32 %v967, %v1035
    %v1100 = vadd.f32 %v968, %v1036
    %v1101 = vadd.f32 %v969, %v1037
    %v1102 = vadd.f32 %v970, %v1038
    %v1103 = vadd.f32 %v971, %v1039
    %v1104 = vadd.f32 %v972, %v1040
    %v1105 = vadd.f32 %v973, %v1041
    %v1106 = vadd.f32 %v974, %v1042
    %v1107 = vadd.f32 %v639, %v1043
    %v1108 = vadd.f32 %v640, %v1044
    %v1109 = vadd.f32 %v641, %v1045
    %v1110 = vadd.f32 %v642, %v1046
    %v1111 = vadd.f32 %v643, %v1047
    %v1112 = vadd.f32 %v644, %v1048
    %v1113 = vadd.f32 %v645, %v1049
    %v1114 = vadd.f32 %v646, %v1050
    %v1115 = vadd.f32 %v647, %v1051
    %v1116 = vadd.f32 %v648, %v1052
    %v1117 = vadd.f32 %v649, %v1053
    %v1118 = vadd.f32 %v650, %v1054
    %v1119 = vadd.f32 %v651, %v1055
    %v1120 = vadd.f32 %v652, %v1056
    %v1121 = vadd.f32 %v653, %v1057
    %v1122 = vadd.f32 %v654, %v1058
    %v1123 = vadd.f32 %v655, %v1059
    %v1124 = vadd.f32 %v656, %v1060
    %v1125 = vadd.f32 %v657, %v1061
    %v1126 = vadd.f32 %v658, %v1062
    %v1127 = vadd.f32 %v659, %v1063
    %v1128 = vadd.f32 %v660, %v1064
    %v1129 = vadd.f32 %v661, %v1065
    %v1130 = vadd.f32 %v662, %v1066
    %v1131 = vadd.f32 %v663, %v1067
    %v1132 = vadd.f32 %v664, %v1068
    %v1133 = vadd.f32 %v665, %v1069
    %v1134 = vadd.f32 %v666, %v1070
    %v1135 = vadd.f32 %v667, %v1071
    %v1136 = vadd.f32 %v668, %v1072
    %v1137 = vadd.f32 %v669, %v1073
    %v1138 = vadd.f32 %v670, %v1074
    %v1139 = vadd.f32 %v671, %v1075
    %v1140 = vadd.f32 %v672, %v1076
    %v1141 = vadd.f32 %v673, %v1077
    %v1142 = vadd.f32 %v674, %v1078
    %v1143 = vadd.f32 %v675, %v1079
    %v1144 = vadd.f32 %v676, %v1080
    %v1145 = vadd.f32 %v677, %v1081
    %v1146 = vadd.f32 %v678, %v1082
    %v1147 = vadd.f32 %v679, %v1083
    %v1148 = vadd.f32 %v680, %v1084
    %v1149 = vadd.f32 %v681, %v1085
    %v1150 = vadd.f32 %v682, %v1086
    %v1151 = vadd.f32 %v683, %v1087
    %v1152 = vadd.f32 %v684, %v1088
    %v1153 = vadd.f32 %v685, %v1089
    %v1154 = vadd.f32 %v686, %v1090
    %v1155 = vadd.f32 %v687, %v1091
    %v1156 = vadd.f32 %v688, %v1092
    %v1157 = vadd.f32 %v689, %v1093
    %v1158 = vadd.f32 %v690, %v1094
    %v1159 = vadd.f32 %v691, %v1095
    %v1160 = vadd.f32 %v692, %v1096
    %v1161 = vadd.f32 %v693, %v1097
    %v1162 = vadd.f32 %v694, %v1098
    %v1163 = vadd.f32 %v695, %v1099
    %v1164 = vadd.f32 %v696, %v1100
    %v1165 = vadd.f32 %v697, %v1101
    %v1166 = vadd.f32 %v698, %v1102
    %v1167 = vadd.f32 %v699, %v1103
    %v1168 = vadd.f32 %v700, %v1104
    %v1169 = vadd.f32 %v701, %v1105
    %v1170 = vadd.f32 %v702, %v1106
    %v1171 = vld [vmem:[#allocation2 + $0x2] sm:$0xff]
    %v1172 = vld [vmem:[#allocation2 + $0xa] sm:$0xff]
    %v1173 = vld [vmem:[#allocation2 + $0x1a] sm:$0xff]
    %v1174 = vld [vmem:[#allocation2 + $0x22] sm:$0xff]
    %v1175 = vld [vmem:[#allocation2 + $0x32] sm:$0xff]
    %v1176 = vld [vmem:[#allocation2 + $0x3a] sm:$0xff]
    %v1177 = vld [vmem:[#allocation2 + $0x4a] sm:$0xff]
    %v1178 = vld [vmem:[#allocation2 + $0x52] sm:$0xff]
    %v1179 = vld [vmem:[#allocation2 + $0x62] sm:$0xff]
    %v1180 = vld [vmem:[#allocation2 + $0x6a] sm:$0xff]
    %v1181 = vld [vmem:[#allocation2 + $0x7a] sm:$0xff]
    %v1182 = vld [vmem:[#allocation2 + $0x82] sm:$0xff]
    %v1183 = vld [vmem:[#allocation2 + $0x92] sm:$0xff]
    %v1184 = vld [vmem:[#allocation2 + $0x9a] sm:$0xff]
    %v1185 = vld [vmem:[#allocation2 + $0xaa] sm:$0xff]
    %v1186 = vld [vmem:[#allocation2 + $0xb2] sm:$0xff]
    %v1187 = vld [vmem:[#allocation2 + $0xc2] sm:$0xff]
    %v1188 = vld [vmem:[#allocation2 + $0xca] sm:$0xff]
    %v1189 = vld [vmem:[#allocation2 + $0xda] sm:$0xff]
    %v1190 = vld [vmem:[#allocation2 + $0xe2] sm:$0xff]
    %v1191 = vld [vmem:[#allocation2 + $0xf2] sm:$0xff]
    %v1192 = vld [vmem:[#allocation2 + $0xfa] sm:$0xff]
    %v1193 = vld [vmem:[#allocation2 + $0x10a] sm:$0xff]
    %v1194 = vld [vmem:[#allocation2 + $0x112] sm:$0xff]
    %v1195 = vld [vmem:[#allocation2 + $0x122] sm:$0xff]
    %v1196 = vld [vmem:[#allocation2 + $0x12a] sm:$0xff]
    %v1197 = vld [vmem:[#allocation2 + $0x13a] sm:$0xff]
    %v1198 = vld [vmem:[#allocation2 + $0x142] sm:$0xff]
    %v1199 = vld [vmem:[#allocation2 + $0x152] sm:$0xff]
    %v1200 = vld [vmem:[#allocation2 + $0x15a] sm:$0xff]
    %v1201 = vld [vmem:[#allocation2 + $0x16a] sm:$0xff]
    %v1202 = vld [vmem:[#allocation2 + $0x172] sm:$0xff]
    %v1203 = vld [vmem:[#allocation2 + $0x182] sm:$0xff]
    %v1204 = vld [vmem:[#allocation2 + $0x18a] sm:$0xff]
    %v1205 = vld [vmem:[#allocation2 + $0x19a] sm:$0xff]
    %v1206 = vld [vmem:[#allocation2 + $0x1a2] sm:$0xff]
    %v1207 = vld [vmem:[#allocation2 + $0x1b2] sm:$0xff]
    %v1208 = vld [vmem:[#allocation2 + $0x1ba] sm:$0xff]
    %v1209 = vld [vmem:[#allocation2 + $0x1ca] sm:$0xff]
    %v1210 = vld [vmem:[#allocation2 + $0x1d2] sm:$0xff]
    %v1211 = vld [vmem:[#allocation2 + $0x1e2] sm:$0xff]
    %v1212 = vld [vmem:[#allocation2 + $0x1ea] sm:$0xff]
    %v1213 = vld [vmem:[#allocation2 + $0x1fa] sm:$0xff]
    %v1214 = vld [vmem:[#allocation2 + $0x202] sm:$0xff]
    %v1215 = vld [vmem:[#allocation2 + $0x212] sm:$0xff]
    %v1216 = vld [vmem:[#allocation2 + $0x21a] sm:$0xff]
    %v1217 = vld [vmem:[#allocation2 + $0x22a] sm:$0xff]
    %v1218 = vld [vmem:[#allocation2 + $0x232] sm:$0xff]
    %v1219 = vld [vmem:[#allocation2 + $0x242] sm:$0xff]
    %v1220 = vld [vmem:[#allocation2 + $0x24a] sm:$0xff]
    %v1221 = vld [vmem:[#allocation2 + $0x25a] sm:$0xff]
    %v1222 = vld [vmem:[#allocation2 + $0x262] sm:$0xff]
    %v1223 = vld [vmem:[#allocation2 + $0x272] sm:$0xff]
    %v1224 = vld [vmem:[#allocation2 + $0x27a] sm:$0xff]
    %v1225 = vld [vmem:[#allocation2 + $0x28a] sm:$0xff]
    %v1226 = vld [vmem:[#allocation2 + $0x292] sm:$0xff]
    %v1227 = vld [vmem:[#allocation2 + $0x2a2] sm:$0xff]
    %v1228 = vld [vmem:[#allocation2 + $0x2aa] sm:$0xff]
    %v1229 = vld [vmem:[#allocation2 + $0x2ba] sm:$0xff]
    %v1230 = vld [vmem:[#allocation2 + $0x2c2] sm:$0xff]
    %v1231 = vld [vmem:[#allocation2 + $0x2d2] sm:$0xff]
    %v1232 = vld [vmem:[#allocation2 + $0x2da] sm:$0xff]
    %v1233 = vld [vmem:[#allocation2 + $0x2ea] sm:$0xff]
    %v1234 = vld [vmem:[#allocation2 + $0x2f2] sm:$0xff]
    %v1235 = vld [vmem:[#allocation2 + $0x302] sm:$0xff]
    %v1236 = vld [vmem:[#allocation2 + $0x30a] sm:$0xff]
    %v1237 = vld [vmem:[#allocation2 + $0x31a] sm:$0xff]
    %v1238 = vld [vmem:[#allocation2 + $0x322] sm:$0xff]
    %v1239 = vld [vmem:[#allocation2 + $0x332] sm:$0xff]
    %v1240 = vld [vmem:[#allocation2 + $0x33a] sm:$0xff]
    %v1241 = vld [vmem:[#allocation2 + $0x34a] sm:$0xff]
    %v1242 = vld [vmem:[#allocation2 + $0x352] sm:$0xff]
    %v1243 = vlaneseq
    %v1244 = vshrl.u32 %v1243, 7
    %v1245 = vsub.s32 2, %v1244
    %v1246 = vrot.slane %v297, %v1245
    %v1247 = vmul.f32 %v1171, %v1246
    %v1248 = vmul.f32 %v1172, %v1246
    %v1249 = vmul.f32 %v1173, %v1246
    %v1250 = vmul.f32 %v1174, %v1246
    %v1251 = vmul.f32 %v1175, %v1246
    %v1252 = vmul.f32 %v1176, %v1246
    %v1253 = vmul.f32 %v1177, %v1246
    %v1254 = vmul.f32 %v1178, %v1246
    %v1255 = vmul.f32 %v1179, %v1246
    %v1256 = vmul.f32 %v1180, %v1246
    %v1257 = vmul.f32 %v1181, %v1246
    %v1258 = vmul.f32 %v1182, %v1246
    %v1259 = vmul.f32 %v1183, %v1246
    %v1260 = vmul.f32 %v1184, %v1246
    %v1261 = vmul.f32 %v1185, %v1246
    %v1262 = vmul.f32 %v1186, %v1246
    %v1263 = vmul.f32 %v1187, %v1246
    %v1264 = vmul.f32 %v1188, %v1246
    %v1265 = vmul.f32 %v1189, %v1246
    %v1266 = vmul.f32 %v1190, %v1246
    %v1267 = vmul.f32 %v1191, %v1246
    %v1268 = vmul.f32 %v1192, %v1246
    %v1269 = vmul.f32 %v1193, %v1246
    %v1270 = vmul.f32 %v1194, %v1246
    %v1271 = vmul.f32 %v1195, %v1246
    %v1272 = vmul.f32 %v1196, %v1246
    %v1273 = vmul.f32 %v1197, %v1246
    %v1274 = vmul.f32 %v1198, %v1246
    %v1275 = vmul.f32 %v1199, %v1246
    %v1276 = vmul.f32 %v1200, %v1246
    %v1277 = vmul.f32 %v1201, %v1246
    %v1278 = vmul.f32 %v1202, %v1246
    %v1279 = vmul.f32 %v1207, %v1246
    %v1280 = vmul.f32 %v1208, %v1246
    %v1281 = vmul.f32 %v1209, %v1246
    %v1282 = vmul.f32 %v1210, %v1246
    %v1283 = vmul.f32 %v1211, %v1246
    %v1284 = vmul.f32 %v1212, %v1246
    %v1285 = vmul.f32 %v1213, %v1246
    %v1286 = vmul.f32 %v1214, %v1246
    %v1287 = vmul.f32 %v1215, %v1246
    %v1288 = vmul.f32 %v1216, %v1246
    %v1289 = vmul.f32 %v1217, %v1246
    %v1290 = vmul.f32 %v1218, %v1246
    %v1291 = vmul.f32 %v1219, %v1246
    %v1292 = vmul.f32 %v1220, %v1246
    %v1293 = vmul.f32 %v1221, %v1246
    %v1294 = vmul.f32 %v1222, %v1246
    %v1295 = vmul.f32 %v1223, %v1246
    %v1296 = vmul.f32 %v1224, %v1246
    %v1297 = vmul.f32 %v1225, %v1246
    %v1298 = vmul.f32 %v1226, %v1246
    %v1299 = vmul.f32 %v1227, %v1246
    %v1300 = vmul.f32 %v1228, %v1246
    %v1301 = vmul.f32 %v1229, %v1246
    %v1302 = vmul.f32 %v1230, %v1246
    %v1303 = vmul.f32 %v1231, %v1246
    %v1304 = vmul.f32 %v1232, %v1246
    %v1305 = vmul.f32 %v1233, %v1246
    %v1306 = vmul.f32 %v1234, %v1246
    %v1307 = vmul.f32 %v1235, %v1246
    %v1308 = vmul.f32 %v1236, %v1246
    %v1309 = vmul.f32 %v1237, %v1246
    %v1310 = vmul.f32 %v1238, %v1246
    %v1311 = vlaneseq
    %v1312 = vshrl.u32 %v1311, 7
    %v1313 = vsub.s32 5, %v1312
    %v1314 = vrot.slane %v297, %v1313
    %v1315 = vmul.f32 %v1173, %v1314
    %v1316 = vmul.f32 %v1174, %v1314
    %v1317 = vmul.f32 %v1175, %v1314
    %v1318 = vmul.f32 %v1176, %v1314
    %v1319 = vmul.f32 %v1177, %v1314
    %v1320 = vmul.f32 %v1178, %v1314
    %v1321 = vmul.f32 %v1179, %v1314
    %v1322 = vmul.f32 %v1180, %v1314
    %v1323 = vmul.f32 %v1181, %v1314
    %v1324 = vmul.f32 %v1182, %v1314
    %v1325 = vmul.f32 %v1183, %v1314
    %v1326 = vmul.f32 %v1184, %v1314
    %v1327 = vmul.f32 %v1185, %v1314
    %v1328 = vmul.f32 %v1186, %v1314
    %v1329 = vmul.f32 %v1187, %v1314
    %v1330 = vmul.f32 %v1188, %v1314
    %v1331 = vmul.f32 %v1189, %v1314
    %v1332 = vmul.f32 %v1190, %v1314
    %v1333 = vmul.f32 %v1191, %v1314
    %v1334 = vmul.f32 %v1192, %v1314
    %v1335 = vmul.f32 %v1193, %v1314
    %v1336 = vmul.f32 %v1194, %v1314
    %v1337 = vmul.f32 %v1195, %v1314
    %v1338 = vmul.f32 %v1196, %v1314
    %v1339 = vmul.f32 %v1197, %v1314
    %v1340 = vmul.f32 %v1198, %v1314
    %v1341 = vmul.f32 %v1199, %v1314
    %v1342 = vmul.f32 %v1200, %v1314
    %v1343 = vmul.f32 %v1201, %v1314
    %v1344 = vmul.f32 %v1202, %v1314
    %v1345 = vmul.f32 %v1203, %v1314
    %v1346 = vmul.f32 %v1204, %v1314
    %v1347 = vmul.f32 %v1209, %v1314
    %v1348 = vmul.f32 %v1210, %v1314
    %v1349 = vmul.f32 %v1211, %v1314
    %v1350 = vmul.f32 %v1212, %v1314
    %v1351 = vmul.f32 %v1213, %v1314
    %v1352 = vmul.f32 %v1214, %v1314
    %v1353 = vmul.f32 %v1215, %v1314
    %v1354 = vmul.f32 %v1216, %v1314
    %v1355 = vmul.f32 %v1217, %v1314
    %v1356 = vmul.f32 %v1218, %v1314
    %v1357 = vmul.f32 %v1219, %v1314
    %v1358 = vmul.f32 %v1220, %v1314
    %v1359 = vmul.f32 %v1221, %v1314
    %v1360 = vmul.f32 %v1222, %v1314
    %v1361 = vmul.f32 %v1223, %v1314
    %v1362 = vmul.f32 %v1224, %v1314
    %v1363 = vmul.f32 %v1225, %v1314
    %v1364 = vmul.f32 %v1226, %v1314
    %v1365 = vmul.f32 %v1227, %v1314
    %v1366 = vmul.f32 %v1228, %v1314
    %v1367 = vmul.f32 %v1229, %v1314
    %v1368 = vmul.f32 %v1230, %v1314
    %v1369 = vmul.f32 %v1231, %v1314
    %v1370 = vmul.f32 %v1232, %v1314
    %v1371 = vmul.f32 %v1233, %v1314
    %v1372 = vmul.f32 %v1234, %v1314
    %v1373 = vmul.f32 %v1235, %v1314
    %v1374 = vmul.f32 %v1236, %v1314
    %v1375 = vmul.f32 %v1237, %v1314
    %v1376 = vmul.f32 %v1238, %v1314
    %v1377 = vmul.f32 %v1239, %v1314
    %v1378 = vmul.f32 %v1240, %v1314
    %v1379 = vadd.f32 %v1247, %v1315
    %v1380 = vadd.f32 %v1248, %v1316
    %v1381 = vadd.f32 %v1249, %v1317
    %v1382 = vadd.f32 %v1250, %v1318
    %v1383 = vadd.f32 %v1251, %v1319
    %v1384 = vadd.f32 %v1252, %v1320
    %v1385 = vadd.f32 %v1253, %v1321
    %v1386 = vadd.f32 %v1254, %v1322
    %v1387 = vadd.f32 %v1255, %v1323
    %v1388 = vadd.f32 %v1256, %v1324
    %v1389 = vadd.f32 %v1257, %v1325
    %v1390 = vadd.f32 %v1258, %v1326
    %v1391 = vadd.f32 %v1259, %v1327
    %v1392 = vadd.f32 %v1260, %v1328
    %v1393 = vadd.f32 %v1261, %v1329
    %v1394 = vadd.f32 %v1262, %v1330
    %v1395 = vadd.f32 %v1263, %v1331
    %v1396 = vadd.f32 %v1264, %v1332
    %v1397 = vadd.f32 %v1265, %v1333
    %v1398 = vadd.f32 %v1266, %v1334
    %v1399 = vadd.f32 %v1267, %v1335
    %v1400 = vadd.f32 %v1268, %v1336
    %v1401 = vadd.f32 %v1269, %v1337
    %v1402 = vadd.f32 %v1270, %v1338
    %v1403 = vadd.f32 %v1271, %v1339
    %v1404 = vadd.f32 %v1272, %v1340
    %v1405 = vadd.f32 %v1273, %v1341
    %v1406 = vadd.f32 %v1274, %v1342
    %v1407 = vadd.f32 %v1275, %v1343
    %v1408 = vadd.f32 %v1276, %v1344
    %v1409 = vadd.f32 %v1277, %v1345
    %v1410 = vadd.f32 %v1278, %v1346
    %v1411 = vadd.f32 %v1279, %v1347
    %v1412 = vadd.f32 %v1280, %v1348
    %v1413 = vadd.f32 %v1281, %v1349
    %v1414 = vadd.f32 %v1282, %v1350
    %v1415 = vadd.f32 %v1283, %v1351
    %v1416 = vadd.f32 %v1284, %v1352
    %v1417 = vadd.f32 %v1285, %v1353
    %v1418 = vadd.f32 %v1286, %v1354
    %v1419 = vadd.f32 %v1287, %v1355
    %v1420 = vadd.f32 %v1288, %v1356
    %v1421 = vadd.f32 %v1289, %v1357
    %v1422 = vadd.f32 %v1290, %v1358
    %v1423 = vadd.f32 %v1291, %v1359
    %v1424 = vadd.f32 %v1292, %v1360
    %v1425 = vadd.f32 %v1293, %v1361
    %v1426 = vadd.f32 %v1294, %v1362
    %v1427 = vadd.f32 %v1295, %v1363
    %v1428 = vadd.f32 %v1296, %v1364
    %v1429 = vadd.f32 %v1297, %v1365
    %v1430 = vadd.f32 %v1298, %v1366
    %v1431 = vadd.f32 %v1299, %v1367
    %v1432 = vadd.f32 %v1300, %v1368
    %v1433 = vadd.f32 %v1301, %v1369
    %v1434 = vadd.f32 %v1302, %v1370
    %v1435 = vadd.f32 %v1303, %v1371
    %v1436 = vadd.f32 %v1304, %v1372
    %v1437 = vadd.f32 %v1305, %v1373
    %v1438 = vadd.f32 %v1306, %v1374
    %v1439 = vadd.f32 %v1307, %v1375
    %v1440 = vadd.f32 %v1308, %v1376
    %v1441 = vadd.f32 %v1309, %v1377
    %v1442 = vadd.f32 %v1310, %v1378
    %v1443 = vlaneseq
    %v1444 = vshrl.u32 %v1443, 7
    %v1445 = vsub.s32 0, %v1444
    %v1446 = vrot.slane %v298, %v1445
    %v1447 = vmul.f32 %v1175, %v1446
    %v1448 = vmul.f32 %v1176, %v1446
    %v1449 = vmul.f32 %v1177, %v1446
    %v1450 = vmul.f32 %v1178, %v1446
    %v1451 = vmul.f32 %v1179, %v1446
    %v1452 = vmul.f32 %v1180, %v1446
    %v1453 = vmul.f32 %v1181, %v1446
    %v1454 = vmul.f32 %v1182, %v1446
    %v1455 = vmul.f32 %v1183, %v1446
    %v1456 = vmul.f32 %v1184, %v1446
    %v1457 = vmul.f32 %v1185, %v1446
    %v1458 = vmul.f32 %v1186, %v1446
    %v1459 = vmul.f32 %v1187, %v1446
    %v1460 = vmul.f32 %v1188, %v1446
    %v1461 = vmul.f32 %v1189, %v1446
    %v1462 = vmul.f32 %v1190, %v1446
    %v1463 = vmul.f32 %v1191, %v1446
    %v1464 = vmul.f32 %v1192, %v1446
    %v1465 = vmul.f32 %v1193, %v1446
    %v1466 = vmul.f32 %v1194, %v1446
    %v1467 = vmul.f32 %v1195, %v1446
    %v1468 = vmul.f32 %v1196, %v1446
    %v1469 = vmul.f32 %v1197, %v1446
    %v1470 = vmul.f32 %v1198, %v1446
    %v1471 = vmul.f32 %v1199, %v1446
    %v1472 = vmul.f32 %v1200, %v1446
    %v1473 = vmul.f32 %v1201, %v1446
    %v1474 = vmul.f32 %v1202, %v1446
    %v1475 = vmul.f32 %v1203, %v1446
    %v1476 = vmul.f32 %v1204, %v1446
    %v1477 = vmul.f32 %v1205, %v1446
    %v1478 = vmul.f32 %v1206, %v1446
    %v1479 = vmul.f32 %v1211, %v1446
    %v1480 = vmul.f32 %v1212, %v1446
    %v1481 = vmul.f32 %v1213, %v1446
    %v1482 = vmul.f32 %v1214, %v1446
    %v1483 = vmul.f32 %v1215, %v1446
    %v1484 = vmul.f32 %v1216, %v1446
    %v1485 = vmul.f32 %v1217, %v1446
    %v1486 = vmul.f32 %v1218, %v1446
    %v1487 = vmul.f32 %v1219, %v1446
    %v1488 = vmul.f32 %v1220, %v1446
    %v1489 = vmul.f32 %v1221, %v1446
    %v1490 = vmul.f32 %v1222, %v1446
    %v1491 = vmul.f32 %v1223, %v1446
    %v1492 = vmul.f32 %v1224, %v1446
    %v1493 = vmul.f32 %v1225, %v1446
    %v1494 = vmul.f32 %v1226, %v1446
    %v1495 = vmul.f32 %v1227, %v1446
    %v1496 = vmul.f32 %v1228, %v1446
    %v1497 = vmul.f32 %v1229, %v1446
    %v1498 = vmul.f32 %v1230, %v1446
    %v1499 = vmul.f32 %v1231, %v1446
    %v1500 = vmul.f32 %v1232, %v1446
    %v1501 = vmul.f32 %v1233, %v1446
    %v1502 = vmul.f32 %v1234, %v1446
    %v1503 = vmul.f32 %v1235, %v1446
    %v1504 = vmul.f32 %v1236, %v1446
    %v1505 = vmul.f32 %v1237, %v1446
    %v1506 = vmul.f32 %v1238, %v1446
    %v1507 = vmul.f32 %v1239, %v1446
    %v1508 = vmul.f32 %v1240, %v1446
    %v1509 = vmul.f32 %v1241, %v1446
    %v1510 = vmul.f32 %v1242, %v1446
    %v1511 = vadd.f32 %v1379, %v1447
    %v1512 = vadd.f32 %v1380, %v1448
    %v1513 = vadd.f32 %v1381, %v1449
    %v1514 = vadd.f32 %v1382, %v1450
    %v1515 = vadd.f32 %v1383, %v1451
    %v1516 = vadd.f32 %v1384, %v1452
    %v1517 = vadd.f32 %v1385, %v1453
    %v1518 = vadd.f32 %v1386, %v1454
    %v1519 = vadd.f32 %v1387, %v1455
    %v1520 = vadd.f32 %v1388, %v1456
    %v1521 = vadd.f32 %v1389, %v1457
    %v1522 = vadd.f32 %v1390, %v1458
    %v1523 = vadd.f32 %v1391, %v1459
    %v1524 = vadd.f32 %v1392, %v1460
    %v1525 = vadd.f32 %v1393, %v1461
    %v1526 = vadd.f32 %v1394, %v1462
    %v1527 = vadd.f32 %v1395, %v1463
    %v1528 = vadd.f32 %v1396, %v1464
    %v1529 = vadd.f32 %v1397, %v1465
    %v1530 = vadd.f32 %v1398, %v1466
    %v1531 = vadd.f32 %v1399, %v1467
    %v1532 = vadd.f32 %v1400, %v1468
    %v1533 = vadd.f32 %v1401, %v1469
    %v1534 = vadd.f32 %v1402, %v1470
    %v1535 = vadd.f32 %v1403, %v1471
    %v1536 = vadd.f32 %v1404, %v1472
    %v1537 = vadd.f32 %v1405, %v1473
    %v1538 = vadd.f32 %v1406, %v1474
    %v1539 = vadd.f32 %v1407, %v1475
    %v1540 = vadd.f32 %v1408, %v1476
    %v1541 = vadd.f32 %v1409, %v1477
    %v1542 = vadd.f32 %v1410, %v1478
    %v1543 = vadd.f32 %v1411, %v1479
    %v1544 = vadd.f32 %v1412, %v1480
    %v1545 = vadd.f32 %v1413, %v1481
    %v1546 = vadd.f32 %v1414, %v1482
    %v1547 = vadd.f32 %v1415, %v1483
    %v1548 = vadd.f32 %v1416, %v1484
    %v1549 = vadd.f32 %v1417, %v1485
    %v1550 = vadd.f32 %v1418, %v1486
    %v1551 = vadd.f32 %v1419, %v1487
    %v1552 = vadd.f32 %v1420, %v1488
    %v1553 = vadd.f32 %v1421, %v1489
    %v1554 = vadd.f32 %v1422, %v1490
    %v1555 = vadd.f32 %v1423, %v1491
    %v1556 = vadd.f32 %v1424, %v1492
    %v1557 = vadd.f32 %v1425, %v1493
    %v1558 = vadd.f32 %v1426, %v1494
    %v1559 = vadd.f32 %v1427, %v1495
    %v1560 = vadd.f32 %v1428, %v1496
    %v1561 = vadd.f32 %v1429, %v1497
    %v1562 = vadd.f32 %v1430, %v1498
    %v1563 = vadd.f32 %v1431, %v1499
    %v1564 = vadd.f32 %v1432, %v1500
    %v1565 = vadd.f32 %v1433, %v1501
    %v1566 = vadd.f32 %v1434, %v1502
    %v1567 = vadd.f32 %v1435, %v1503
    %v1568 = vadd.f32 %v1436, %v1504
    %v1569 = vadd.f32 %v1437, %v1505
    %v1570 = vadd.f32 %v1438, %v1506
    %v1571 = vadd.f32 %v1439, %v1507
    %v1572 = vadd.f32 %v1440, %v1508
    %v1573 = vadd.f32 %v1441, %v1509
    %v1574 = vadd.f32 %v1442, %v1510
    %v1575 = vadd.f32 %v1107, %v1511
    %v1576 = vadd.f32 %v1108, %v1512
    %v1577 = vadd.f32 %v1109, %v1513
    %v1578 = vadd.f32 %v1110, %v1514
    %v1579 = vadd.f32 %v1111, %v1515
    %v1580 = vadd.f32 %v1112, %v1516
    %v1581 = vadd.f32 %v1113, %v1517
    %v1582 = vadd.f32 %v1114, %v1518
    %v1583 = vadd.f32 %v1115, %v1519
    %v1584 = vadd.f32 %v1116, %v1520
    %v1585 = vadd.f32 %v1117, %v1521
    %v1586 = vadd.f32 %v1118, %v1522
    %v1587 = vadd.f32 %v1119, %v1523
    %v1588 = vadd.f32 %v1120, %v1524
    %v1589 = vadd.f32 %v1121, %v1525
    %v1590 = vadd.f32 %v1122, %v1526
    %v1591 = vadd.f32 %v1123, %v1527
    %v1592 = vadd.f32 %v1124, %v1528
    %v1593 = vadd.f32 %v1125, %v1529
    %v1594 = vadd.f32 %v1126, %v1530
    %v1595 = vadd.f32 %v1127, %v1531
    %v1596 = vadd.f32 %v1128, %v1532
    %v1597 = vadd.f32 %v1129, %v1533
    %v1598 = vadd.f32 %v1130, %v1534
    %v1599 = vadd.f32 %v1131, %v1535
    %v1600 = vadd.f32 %v1132, %v1536
    %v1601 = vadd.f32 %v1133, %v1537
    %v1602 = vadd.f32 %v1134, %v1538
    %v1603 = vadd.f32 %v1135, %v1539
    %v1604 = vadd.f32 %v1136, %v1540
    %v1605 = vadd.f32 %v1137, %v1541
    %v1606 = vadd.f32 %v1138, %v1542
    %v1607 = vadd.f32 %v1139, %v1543
    %v1608 = vadd.f32 %v1140, %v1544
    %v1609 = vadd.f32 %v1141, %v1545
    %v1610 = vadd.f32 %v1142, %v1546
    %v1611 = vadd.f32 %v1143, %v1547
    %v1612 = vadd.f32 %v1144, %v1548
    %v1613 = vadd.f32 %v1145, %v1549
    %v1614 = vadd.f32 %v1146, %v1550
    %v1615 = vadd.f32 %v1147, %v1551
    %v1616 = vadd.f32 %v1148, %v1552
    %v1617 = vadd.f32 %v1149, %v1553
    %v1618 = vadd.f32 %v1150, %v1554
    %v1619 = vadd.f32 %v1151, %v1555
    %v1620 = vadd.f32 %v1152, %v1556
    %v1621 = vadd.f32 %v1153, %v1557
    %v1622 = vadd.f32 %v1154, %v1558
    %v1623 = vadd.f32 %v1155, %v1559
    %v1624 = vadd.f32 %v1156, %v1560
    %v1625 = vadd.f32 %v1157, %v1561
    %v1626 = vadd.f32 %v1158, %v1562
    %v1627 = vadd.f32 %v1159, %v1563
    %v1628 = vadd.f32 %v1160, %v1564
    %v1629 = vadd.f32 %v1161, %v1565
    %v1630 = vadd.f32 %v1162, %v1566
    %v1631 = vadd.f32 %v1163, %v1567
    %v1632 = vadd.f32 %v1164, %v1568
    %v1633 = vadd.f32 %v1165, %v1569
    %v1634 = vadd.f32 %v1166, %v1570
    %v1635 = vadd.f32 %v1167, %v1571
    %v1636 = vadd.f32 %v1168, %v1572
    %v1637 = vadd.f32 %v1169, %v1573
    %v1638 = vadd.f32 %v1170, %v1574
    %v1639 = vld [vmem:[%s2] sm:$0x1]
    %v1641 = vlaneseq
    %v1642 = vshrl.u32 %v1641, 7
    %v1643 = vsub.s32 0, %v1642
    %v1644 = vrot.slane %v1639, %v1643
    %v1646 = vadd.f32 %v1575, %v1644
    %v1647 = vadd.f32 %v1576, %v1644
    %v1648 = vadd.f32 %v1577, %v1644
    %v1649 = vadd.f32 %v1578, %v1644
    %v1650 = vadd.f32 %v1579, %v1644
    %v1651 = vadd.f32 %v1580, %v1644
    %v1652 = vadd.f32 %v1581, %v1644
    %v1653 = vadd.f32 %v1582, %v1644
    %v1654 = vadd.f32 %v1583, %v1644
    %v1655 = vadd.f32 %v1584, %v1644
    %v1656 = vadd.f32 %v1585, %v1644
    %v1657 = vadd.f32 %v1586, %v1644
    %v1658 = vadd.f32 %v1587, %v1644
    %v1659 = vadd.f32 %v1588, %v1644
    %v1660 = vadd.f32 %v1589, %v1644
    %v1661 = vadd.f32 %v1590, %v1644
    %v1662 = vadd.f32 %v1591, %v1644
    %v1663 = vadd.f32 %v1592, %v1644
    %v1664 = vadd.f32 %v1593, %v1644
    %v1665 = vadd.f32 %v1594, %v1644
    %v1666 = vadd.f32 %v1595, %v1644
    %v1667 = vadd.f32 %v1596, %v1644
    %v1668 = vadd.f32 %v1597, %v1644
    %v1669 = vadd.f32 %v1598, %v1644
    %v1670 = vadd.f32 %v1599, %v1644
    %v1671 = vadd.f32 %v1600, %v1644
    %v1672 = vadd.f32 %v1601, %v1644
    %v1673 = vadd.f32 %v1602, %v1644
    %v1674 = vadd.f32 %v1603, %v1644
    %v1675 = vadd.f32 %v1604, %v1644
    %v1676 = vadd.f32 %v1605, %v1644
    %v1677 = vadd.f32 %v1606, %v1644
    %v1678 = vadd.f32 %v1607, %v1644
    %v1679 = vadd.f32 %v1608, %v1644
    %v1680 = vadd.f32 %v1609, %v1644
    %v1681 = vadd.f32 %v1610, %v1644
    %v1682 = vadd.f32 %v1611, %v1644
    %v1683 = vadd.f32 %v1612, %v1644
    %v1684 = vadd.f32 %v1613, %v1644
    %v1685 = vadd.f32 %v1614, %v1644
    %v1686 = vadd.f32 %v1615, %v1644
    %v1687 = vadd.f32 %v1616, %v1644
    %v1688 = vadd.f32 %v1617, %v1644
    %v1689 = vadd.f32 %v1618, %v1644
    %v1690 = vadd.f32 %v1619, %v1644
    %v1691 = vadd.f32 %v1620, %v1644
    %v1692 = vadd.f32 %v1621, %v1644
    %v1693 = vadd.f32 %v1622, %v1644
    %v1694 = vadd.f32 %v1623, %v1644
    %v1695 = vadd.f32 %v1624, %v1644
    %v1696 = vadd.f32 %v1625, %v1644
    %v1697 = vadd.f32 %v1626, %v1644
    %v1698 = vadd.f32 %v1627, %v1644
    %v1699 = vadd.f32 %v1628, %v1644
    %v1700 = vadd.f32 %v1629, %v1644
    %v1701 = vadd.f32 %v1630, %v1644
    %v1702 = vadd.f32 %v1631, %v1644
    %v1703 = vadd.f32 %v1632, %v1644
    %v1704 = vadd.f32 %v1633, %v1644
    %v1705 = vadd.f32 %v1634, %v1644
    %v1706 = vadd.f32 %v1635, %v1644
    %v1707 = vadd.f32 %v1636, %v1644
    %v1708 = vadd.f32 %v1637, %v1644
    %v1709 = vadd.f32 %v1638, %v1644
    %v1710 = vmax.f32 %v1646, 0.0
    %v1711 = vmax.f32 %v1647, 0.0
    %v1712 = vmax.f32 %v1648, 0.0
    %v1713 = vmax.f32 %v1649, 0.0
    %v1714 = vmax.f32 %v1650, 0.0
    %v1715 = vmax.f32 %v1651, 0.0
    %v1716 = vmax.f32 %v1652, 0.0
    %v1717 = vmax.f32 %v1653, 0.0
    %v1718 = vmax.f32 %v1654, 0.0
    %v1719 = vmax.f32 %v1655, 0.0
    %v1720 = vmax.f32 %v1656, 0.0
    %v1721 = vmax.f32 %v1657, 0.0
    %v1722 = vmax.f32 %v1658, 0.0
    %v1723 = vmax.f32 %v1659, 0.0
    %v1724 = vmax.f32 %v1660, 0.0
    %v1725 = vmax.f32 %v1661, 0.0
    %v1726 = vmax.f32 %v1662, 0.0
    %v1727 = vmax.f32 %v1663, 0.0
    %v1728 = vmax.f32 %v1664, 0.0
    %v1729 = vmax.f32 %v1665, 0.0
    %v1730 = vmax.f32 %v1666, 0.0
    %v1731 = vmax.f32 %v1667, 0.0
    %v1732 = vmax.f32 %v1668, 0.0
    %v1733 = vmax.f32 %v1669, 0.0
    %v1734 = vmax.f32 %v1670, 0.0
    %v1735 = vmax.f32 %v1671, 0.0
    %v1736 = vmax.f32 %v1672, 0.0
    %v1737 = vmax.f32 %v1673, 0.0
    %v1738 = vmax.f32 %v1674, 0.0
    %v1739 = vmax.f32 %v1675, 0.0
    %v1740 = vmax.f32 %v1676, 0.0
    %v1741 = vmax.f32 %v1677, 0.0
    %v1742 = vmax.f32 %v1678, 0.0
    %v1743 = vmax.f32 %v1679, 0.0
    %v1744 = vmax.f32 %v1680, 0.0
    %v1745 = vmax.f32 %v1681, 0.0
    %v1746 = vmax.f32 %v1682, 0.0
    %v1747 = vmax.f32 %v1683, 0.0
    %v1748 = vmax.f32 %v1684, 0.0
    %v1749 = vmax.f32 %v1685, 0.0
    %v1750 = vmax.f32 %v1686, 0.0
    %v1751 = vmax.f32 %v1687, 0.0
    %v1752 = vmax.f32 %v1688, 0.0
    %v1753 = vmax.f32 %v1689, 0.0
    %v1754 = vmax.f32 %v1690, 0.0
    %v1755 = vmax.f32 %v1691, 0.0
    %v1756 = vmax.f32 %v1692, 0.0
    %v1757 = vmax.f32 %v1693, 0.0
    %v1758 = vmax.f32 %v1694, 0.0
    %v1759 = vmax.f32 %v1695, 0.0
    %v1760 = vmax.f32 %v1696, 0.0
    %v1761 = vmax.f32 %v1697, 0.0
    %v1762 = vmax.f32 %v1698, 0.0
    %v1763 = vmax.f32 %v1699, 0.0
    %v1764 = vmax.f32 %v1700, 0.0
    %v1765 = vmax.f32 %v1701, 0.0
    %v1766 = vmax.f32 %v1702, 0.0
    %v1767 = vmax.f32 %v1703, 0.0
    %v1768 = vmax.f32 %v1704, 0.0
    %v1769 = vmax.f32 %v1705, 0.0
    %v1770 = vmax.f32 %v1706, 0.0
    %v1771 = vmax.f32 %v1707, 0.0
    %v1772 = vmax.f32 %v1708, 0.0
    %v1773 = vmax.f32 %v1709, 0.0
    %v1774 = vmin.f32 %v1710, 6.0
    %v1775 = vmin.f32 %v1711, 6.0
    %v1776 = vmin.f32 %v1712, 6.0
    %v1777 = vmin.f32 %v1713, 6.0
    %v1778 = vmin.f32 %v1714, 6.0
    %v1779 = vmin.f32 %v1715, 6.0
    %v1780 = vmin.f32 %v1716, 6.0
    %v1781 = vmin.f32 %v1717, 6.0
    %v1782 = vmin.f32 %v1718, 6.0
    %v1783 = vmin.f32 %v1719, 6.0
    %v1784 = vmin.f32 %v1720, 6.0
    %v1785 = vmin.f32 %v1721, 6.0
    %v1786 = vmin.f32 %v1722, 6.0
    %v1787 = vmin.f32 %v1723, 6.0
    %v1788 = vmin.f32 %v1724, 6.0
    %v1789 = vmin.f32 %v1725, 6.0
    %v1790 = vmin.f32 %v1726, 6.0
    %v1791 = vmin.f32 %v1727, 6.0
    %v1792 = vmin.f32 %v1728, 6.0
    %v1793 = vmin.f32 %v1729, 6.0
    %v1794 = vmin.f32 %v1730, 6.0
    %v1795 = vmin.f32 %v1731, 6.0
    %v1796 = vmin.f32 %v1732, 6.0
    %v1797 = vmin.f32 %v1733, 6.0
    %v1798 = vmin.f32 %v1734, 6.0
    %v1799 = vmin.f32 %v1735, 6.0
    %v1800 = vmin.f32 %v1736, 6.0
    %v1801 = vmin.f32 %v1737, 6.0
    %v1802 = vmin.f32 %v1738, 6.0
    %v1803 = vmin.f32 %v1739, 6.0
    %v1804 = vmin.f32 %v1740, 6.0
    %v1805 = vmin.f32 %v1741, 6.0
    %v1806 = vmin.f32 %v1742, 6.0
    %v1807 = vmin.f32 %v1743, 6.0
    %v1808 = vmin.f32 %v1744, 6.0
    %v1809 = vmin.f32 %v1745, 6.0
    %v1810 = vmin.f32 %v1746, 6.0
    %v1811 = vmin.f32 %v1747, 6.0
    %v1812 = vmin.f32 %v1748, 6.0
    %v1813 = vmin.f32 %v1749, 6.0
    %v1814 = vmin.f32 %v1750, 6.0
    %v1815 = vmin.f32 %v1751, 6.0
    %v1816 = vmin.f32 %v1752, 6.0
    %v1817 = vmin.f32 %v1753, 6.0
    %v1818 = vmin.f32 %v1754, 6.0
    %v1819 = vmin.f32 %v1755, 6.0
    %v1820 = vmin.f32 %v1756, 6.0
    %v1821 = vmin.f32 %v1757, 6.0
    %v1822 = vmin.f32 %v1758, 6.0
    %v1823 = vmin.f32 %v1759, 6.0
    %v1824 = vmin.f32 %v1760, 6.0
    %v1825 = vmin.f32 %v1761, 6.0
    %v1826 = vmin.f32 %v1762, 6.0
    %v1827 = vmin.f32 %v1763, 6.0
    %v1828 = vmin.f32 %v1764, 6.0
    %v1829 = vmin.f32 %v1765, 6.0
    %v1830 = vmin.f32 %v1766, 6.0
    %v1831 = vmin.f32 %v1767, 6.0
    %v1832 = vmin.f32 %v1768, 6.0
    %v1833 = vmin.f32 %v1769, 6.0
    %v1834 = vmin.f32 %v1770, 6.0
    %v1835 = vmin.f32 %v1771, 6.0
    %v1836 = vmin.f32 %v1772, 6.0
    %v1837 = vmin.f32 %v1773, 6.0
    %v1838 = vld [vmem:[#allocation8] sm:$0xff]
    %v1839 = vld [vmem:[#allocation8 + $0x8] sm:$0xff]
    %v1840 = vld [vmem:[#allocation8 + $0x10] sm:$0xff]
    %v1841 = vld [vmem:[#allocation8 + $0x18] sm:$0xff]
    %v1842 = vld [vmem:[%s4] sm:$0x1]
    %v1844 = vlaneseq
    %v1845 = vshrl.u32 %v1844, 7
    %v1846 = vsub.s32 0, %v1845
    %v1847 = vrot.slane %v1842, %v1846
    %v1850 = vsel %vm88, %v1774, 0
    %v1853 = vsel %vm88, %v1775, 0
    %v1856 = vsel %vm88, %v1776, 0
    %v1859 = vsel %vm88, %v1777, 0
    %v1862 = vsel %vm88, %v1778, 0
    %v1865 = vsel %vm88, %v1779, 0
    %v1868 = vsel %vm88, %v1780, 0
    %v1871 = vsel %vm88, %v1781, 0
    %v1874 = vsel %vm88, %v1782, 0
    %v1877 = vsel %vm88, %v1783, 0
    %v1880 = vsel %vm88, %v1784, 0
    %v1883 = vsel %vm88, %v1785, 0
    %v1886 = vsel %vm88, %v1786, 0
    %v1889 = vsel %vm88, %v1787, 0
    %v1892 = vsel %vm88, %v1788, 0
    %v1895 = vsel %vm88, %v1789, 0
    %v1898 = vsel %vm88, %v1790, 0
    %v1901 = vsel %vm88, %v1791, 0
    %v1904 = vsel %vm88, %v1792, 0
    %v1907 = vsel %vm88, %v1793, 0
    %v1910 = vsel %vm88, %v1794, 0
    %v1913 = vsel %vm88, %v1795, 0
    %v1916 = vsel %vm88, %v1796, 0
    %v1919 = vsel %vm88, %v1797, 0
    %v1922 = vsel %vm88, %v1798, 0
    %v1925 = vsel %vm88, %v1799, 0
    %v1928 = vsel %vm88, %v1800, 0
    %v1931 = vsel %vm88, %v1801, 0
    %v1934 = vsel %vm88, %v1802, 0
    %v1937 = vsel %vm88, %v1803, 0
    %v1940 = vsel %vm88, %v1804, 0
    %v1943 = vsel %vm88, %v1805, 0
    %v1946 = vsel %vm88, %v1806, 0
    %v1949 = vsel %vm88, %v1807, 0
    %v1952 = vsel %vm88, %v1808, 0
    %v1955 = vsel %vm88, %v1809, 0
    %v1958 = vsel %vm88, %v1810, 0
    %v1961 = vsel %vm88, %v1811, 0
    %v1964 = vsel %vm88, %v1812, 0
    %v1967 = vsel %vm88, %v1813, 0
    %v1970 = vsel %vm88, %v1814, 0
    %v1973 = vsel %vm88, %v1815, 0
    %v1976 = vsel %vm88, %v1816, 0
    %v1979 = vsel %vm88, %v1817, 0
    %v1982 = vsel %vm88, %v1818, 0
    %v1985 = vsel %vm88, %v1819, 0
    %v1988 = vsel %vm88, %v1820, 0
    %v1991 = vsel %vm88, %v1821, 0
    %v1994 = vsel %vm88, %v1822, 0
    %v1997 = vsel %vm88, %v1823, 0
    %v2000 = vsel %vm88, %v1824, 0
    %v2003 = vsel %vm88, %v1825, 0
    %v2006 = vsel %vm88, %v1826, 0
    %v2009 = vsel %vm88, %v1827, 0
    %v2012 = vsel %vm88, %v1828, 0
    %v2015 = vsel %vm88, %v1829, 0
    %v2018 = vsel %vm88, %v1830, 0
    %v2021 = vsel %vm88, %v1831, 0
    %v2024 = vsel %vm88, %v1832, 0
    %v2027 = vsel %vm88, %v1833, 0
    %v2030 = vsel %vm88, %v1834, 0
    %v2033 = vsel %vm88, %v1835, 0
    %v2036 = vsel %vm88, %v1836, 0
    %v2039 = vsel %vm88, %v1837, 0
    %2041 = vmatprep.subr.mxu0 0.0
    %2042 = vmatpush1.msra.mxu0 %v1838
    %2043 = vmatprep.subr.mxu0 0.0
    %2044 = vmatpush1.msra.mxu0 %v1839
    %2045 = vmatprep.subr.mxu0 0.0
    %2046 = vmatpush1.msra.mxu0 %v1840
    %2047 = vmatprep.subr.mxu0 0.0
    %2048 = vmatpush1.msra.mxu0 %v1841
    %2049 = vmatprep.subr.mxu0 0.0
    %2050 = vmatpush1.msra.mxu0 0.0
    %2051 = vmatprep.subr.mxu0 0.0
    %2052 = vmatpush1.msra.mxu0 0.0
    %2053 = vmatprep.subr.mxu0 0.0
    %2054 = vmatpush1.msra.mxu0 0.0
    %2055 = vmatprep.subr.mxu0 0.0
    %2056 = vmatpush1.msra.mxu0 0.0
    %2057 = vmatprep.subr.mxu0 0.0
    %2058 = vmatpush1.msra.mxu0 0.0
    %2059 = vmatprep.subr.mxu0 0.0
    %2060 = vmatpush1.msra.mxu0 0.0
    %2061 = vmatprep.subr.mxu0 0.0
    %2062 = vmatpush1.msra.mxu0 0.0
    %2063 = vmatprep.subr.mxu0 0.0
    %2064 = vmatpush1.msra.mxu0 0.0
    %2065 = vmatprep.subr.mxu0 0.0
    %2066 = vmatpush1.msra.mxu0 0.0
    %2067 = vmatprep.subr.mxu0 0.0
    %2068 = vmatpush1.msra.mxu0 0.0
    %2069 = vmatprep.subr.mxu0 0.0
    %2070 = vmatpush1.msra.mxu0 0.0
    %2071 = vmatprep.subr.mxu0 0.0
    %2072 = vmatpush1.msra.mxu0 0.0
    %2073 = vmatprep.subr.mxu0 0.0
    %2074 = vmatpush1.msra.mxu0 0.0
    %2075 = vmatprep.subr.mxu0 0.0
    %2076 = vmatpush1.msra.mxu0 0.0
    %2077 = vmatprep.subr.mxu0 0.0
    %2078 = vmatpush1.msra.mxu0 0.0
    %2079 = vmatprep.subr.mxu0 0.0
    %2080 = vmatpush1.msra.mxu0 0.0
    %2081 = vmatprep.subr.mxu0 0.0
    %2082 = vmatpush1.msra.mxu0 0.0
    %2083 = vmatprep.subr.mxu0 0.0
    %2084 = vmatpush1.msra.mxu0 0.0
    %2085 = vmatprep.subr.mxu0 0.0
    %2086 = vmatpush1.msra.mxu0 0.0
    %2087 = vmatprep.subr.mxu0 0.0
    %2088 = vmatpush1.msra.mxu0 0.0
    %2089 = vmatprep.subr.mxu0 0.0
    %2090 = vmatpush1.msra.mxu0 0.0
    %2091 = vmatprep.subr.mxu0 0.0
    %2092 = vmatpush1.msra.mxu0 0.0
    %2093 = vmatprep.subr.mxu0 0.0
    %2094 = vmatpush1.msra.mxu0 0.0
    %2095 = vmatprep.subr.mxu0 0.0
    %2096 = vmatpush1.msra.mxu0 0.0
    %2097 = vmatprep.subr.mxu0 0.0
    %2098 = vmatpush1.msra.mxu0 0.0
    %2099 = vmatprep.subr.mxu0 0.0
    %2100 = vmatpush1.msra.mxu0 0.0
    %2101 = vmatprep.subr.mxu0 0.0
    %2102 = vmatpush1.msra.mxu0 0.0
    %2103 = vmatprep.subr.mxu0 0.0
    %2104 = vmatpush1.msra.mxu0 0.0
    %2105 = vmatprep.mubr.f32.mxu0 0.0
    %2106 = vmatmul.mubr.f32.gmra.mrb[0].mxu0 %v1850
    %v2107 = vpop.f32.mrb[0].mxu0
    %v2108 = vadd.f32 %v1847, %v2107
    %v2109 = vpop.f32.mrb[0].mxu0
    %2110 = vmatprep.mubr.f32.mxu0 0.0
    %2111 = vmatmul.mubr.f32.gmra.mrb[0].mxu0 %v1853
    %v2112 = vpop.f32.mrb[0].mxu0
    %v2113 = vadd.f32 %v1847, %v2112
    %v2114 = vpop.f32.mrb[0].mxu0
    %2115 = vmatprep.mubr.f32.mxu0 0.0
    %2116 = vmatmul.mubr.f32.gmra.mrb[0].mxu0 %v1856
    %v2117 = vpop.f32.mrb[0].mxu0
    %v2118 = vadd.f32 %v1847, %v2117
    %v2119 = vpop.f32.mrb[0].mxu0
    %2120 = vmatprep.mubr.f32.mxu0 0.0
    %2121 = vmatmul.mubr.f32.gmra.mrb[0].mxu0 %v1859
    %v2122 = vpop.f32.mrb[0].mxu0
    %v2123 = vadd.f32 %v1847, %v2122
    %v2124 = vpop.f32.mrb[0].mxu0
    %2125 = vmatprep.mubr.f32.mxu0 0.0
    %2126 = vmatmul.mubr.f32.gmra.mrb[0].mxu0 %v1862
    %v2127 = vpop.f32.mrb[0].mxu0
    %v2128 = vadd.f32 %v1847, %v2127
    %v2129 = vpop.f32.mrb[0].mxu0
    %2130 = vmatprep.mubr.f32.mxu0 0.0
    %2131 = vmatmul.mubr.f32.gmra.mrb[0].mxu0 %v1865
    %v2132 = vpop.f32.mrb[0].mxu0
    %v2133 = vadd.f32 %v1847, %v2132
    %v2134 = vpop.f32.mrb[0].mxu0
    %2135 = vmatprep.mubr.f32.mxu0 0.0
    %2136 = vmatmul.mubr.f32.gmra.mrb[0].mxu0 %v1868
    %v2137 = vpop.f32.mrb[0].mxu0
    %v2138 = vadd.f32 %v1847, %v2137
    %v2139 = vpop.f32.mrb[0].mxu0
    %2140 = vmatprep.mubr.f32.mxu0 0.0
    %2141 = vmatmul.mubr.f32.gmra.mrb[0].mxu0 %v1871
    %v2142 = vpop.f32.mrb[0].mxu0
    %v2143 = vadd.f32 %v1847, %v2142
    %v2144 = vpop.f32.mrb[0].mxu0
    %2145 = vmatprep.mubr.f32.mxu0 0.0
    %2146 = vmatmul.mubr.f32.gmra.mrb[0].mxu0 %v1874
    %v2147 = vpop.f32.mrb[0].mxu0
    %v2148 = vadd.f32 %v1847, %v2147
    %v2149 = vpop.f32.mrb[0].mxu0
    %2150 = vmatprep.mubr.f32.mxu0 0.0
    %2151 = vmatmul.mubr.f32.gmra.mrb[0].mxu0 %v1877
    %v2152 = vpop.f32.mrb[0].mxu0
    %v2153 = vadd.f32 %v1847, %v2152
    %v2154 = vpop.f32.mrb[0].mxu0
    %2155 = vmatprep.mubr.f32.mxu0 0.0
    %2156 = vmatmul.mubr.f32.gmra.mrb[0].mxu0 %v1880
    %v2157 = vpop.f32.mrb[0].mxu0
    %v2158 = vadd.f32 %v1847, %v2157
    %v2159 = vpop.f32.mrb[0].mxu0
    %2160 = vmatprep.mubr.f32.mxu0 0.0
    %2161 = vmatmul.mubr.f32.gmra.mrb[0].mxu0 %v1883
    %v2162 = vpop.f32.mrb[0].mxu0
    %v2163 = vadd.f32 %v1847, %v2162
    %v2164 = vpop.f32.mrb[0].mxu0
    %2165 = vmatprep.mubr.f32.mxu0 0.0
    %2166 = vmatmul.mubr.f32.gmra.mrb[0].mxu0 %v1886
    %v2167 = vpop.f32.mrb[0].mxu0
    %v2168 = vadd.f32 %v1847, %v2167
    %v2169 = vpop.f32.mrb[0].mxu0
    %2170 = vmatprep.mubr.f32.mxu0 0.0
    %2171 = vmatmul.mubr.f32.gmra.mrb[0].mxu0 %v1889
    %v2172 = vpop.f32.mrb[0].mxu0
    %v2173 = vadd.f32 %v1847, %v2172
    %v2174 = vpop.f32.mrb[0].mxu0
    %2175 = vmatprep.mubr.f32.mxu0 0.0
    %2176 = vmatmul.mubr.f32.gmra.mrb[0].mxu0 %v1892
    %v2177 = vpop.f32.mrb[0].mxu0
    %v2178 = vadd.f32 %v1847, %v2177
    %v2179 = vpop.f32.mrb[0].mxu0
    %2180 = vmatprep.mubr.f32.mxu0 0.0
    %2181 = vmatmul.mubr.f32.gmra.mrb[0].mxu0 %v1895
    %v2182 = vpop.f32.mrb[0].mxu0
    %v2183 = vadd.f32 %v1847, %v2182
    %v2184 = vpop.f32.mrb[0].mxu0
    %2185 = vmatprep.mubr.f32.mxu0 0.0
    %2186 = vmatmul.mubr.f32.gmra.mrb[0].mxu0 %v1898
    %v2187 = vpop.f32.mrb[0].mxu0
    %v2188 = vadd.f32 %v1847, %v2187
    %v2189 = vpop.f32.mrb[0].mxu0
    %2190 = vmatprep.mubr.f32.mxu0 0.0
    %2191 = vmatmul.mubr.f32.gmra.mrb[0].mxu0 %v1901
    %v2192 = vpop.f32.mrb[0].mxu0
    %v2193 = vadd.f32 %v1847, %v2192
    %v2194 = vpop.f32.mrb[0].mxu0
    %2195 = vmatprep.mubr.f32.mxu0 0.0
    %2196 = vmatmul.mubr.f32.gmra.mrb[0].mxu0 %v1904
    %v2197 = vpop.f32.mrb[0].mxu0
    %v2198 = vadd.f32 %v1847, %v2197
    %v2199 = vpop.f32.mrb[0].mxu0
    %2200 = vmatprep.mubr.f32.mxu0 0.0
    %2201 = vmatmul.mubr.f32.gmra.mrb[0].mxu0 %v1907
    %v2202 = vpop.f32.mrb[0].mxu0
    %v2203 = vadd.f32 %v1847, %v2202
    %v2204 = vpop.f32.mrb[0].mxu0
    %2205 = vmatprep.mubr.f32.mxu0 0.0
    %2206 = vmatmul.mubr.f32.gmra.mrb[0].mxu0 %v1910
    %v2207 = vpop.f32.mrb[0].mxu0
    %v2208 = vadd.f32 %v1847, %v2207
    %v2209 = vpop.f32.mrb[0].mxu0
    %2210 = vmatprep.mubr.f32.mxu0 0.0
    %2211 = vmatmul.mubr.f32.gmra.mrb[0].mxu0 %v1913
    %v2212 = vpop.f32.mrb[0].mxu0
    %v2213 = vadd.f32 %v1847, %v2212
    %v2214 = vpop.f32.mrb[0].mxu0
    %2215 = vmatprep.mubr.f32.mxu0 0.0
    %2216 = vmatmul.mubr.f32.gmra.mrb[0].mxu0 %v1916
    %v2217 = vpop.f32.mrb[0].mxu0
    %v2218 = vadd.f32 %v1847, %v2217
    %v2219 = vpop.f32.mrb[0].mxu0
    %2220 = vmatprep.mubr.f32.mxu0 0.0
    %2221 = vmatmul.mubr.f32.gmra.mrb[0].mxu0 %v1919
    %v2222 = vpop.f32.mrb[0].mxu0
    %v2223 = vadd.f32 %v1847, %v2222
    %v2224 = vpop.f32.mrb[0].mxu0
    %2225 = vmatprep.mubr.f32.mxu0 0.0
    %2226 = vmatmul.mubr.f32.gmra.mrb[0].mxu0 %v1922
    %v2227 = vpop.f32.mrb[0].mxu0
    %v2228 = vadd.f32 %v1847, %v2227
    %v2229 = vpop.f32.mrb[0].mxu0
    %2230 = vmatprep.mubr.f32.mxu0 0.0
    %2231 = vmatmul.mubr.f32.gmra.mrb[0].mxu0 %v1925
    %v2232 = vpop.f32.mrb[0].mxu0
    %v2233 = vadd.f32 %v1847, %v2232
    %v2234 = vpop.f32.mrb[0].mxu0
    %2235 = vmatprep.mubr.f32.mxu0 0.0
    %2236 = vmatmul.mubr.f32.gmra.mrb[0].mxu0 %v1928
    %v2237 = vpop.f32.mrb[0].mxu0
    %v2238 = vadd.f32 %v1847, %v2237
    %v2239 = vpop.f32.mrb[0].mxu0
    %2240 = vmatprep.mubr.f32.mxu0 0.0
    %2241 = vmatmul.mubr.f32.gmra.mrb[0].mxu0 %v1931
    %v2242 = vpop.f32.mrb[0].mxu0
    %v2243 = vadd.f32 %v1847, %v2242
    %v2244 = vpop.f32.mrb[0].mxu0
    %2245 = vmatprep.mubr.f32.mxu0 0.0
    %2246 = vmatmul.mubr.f32.gmra.mrb[0].mxu0 %v1934
    %v2247 = vpop.f32.mrb[0].mxu0
    %v2248 = vadd.f32 %v1847, %v2247
    %v2249 = vpop.f32.mrb[0].mxu0
    %2250 = vmatprep.mubr.f32.mxu0 0.0
    %2251 = vmatmul.mubr.f32.gmra.mrb[0].mxu0 %v1937
    %v2252 = vpop.f32.mrb[0].mxu0
    %v2253 = vadd.f32 %v1847, %v2252
    %v2254 = vpop.f32.mrb[0].mxu0
    %2255 = vmatprep.mubr.f32.mxu0 0.0
    %2256 = vmatmul.mubr.f32.gmra.mrb[0].mxu0 %v1940
    %v2257 = vpop.f32.mrb[0].mxu0
    %v2258 = vadd.f32 %v1847, %v2257
    %v2259 = vpop.f32.mrb[0].mxu0
    %2260 = vmatprep.mubr.f32.mxu0 0.0
    %2261 = vmatmul.mubr.f32.gmra.mrb[0].mxu0 %v1943
    %v2262 = vpop.f32.mrb[0].mxu0
    %v2263 = vadd.f32 %v1847, %v2262
    %v2264 = vpop.f32.mrb[0].mxu0
    %2265 = vmatprep.mubr.f32.mxu0 0.0
    %2266 = vmatmul.mubr.f32.gmra.mrb[0].mxu0 %v1946
    %v2267 = vpop.f32.mrb[0].mxu0
    %v2268 = vadd.f32 %v1847, %v2267
    %v2269 = vpop.f32.mrb[0].mxu0
    %2270 = vmatprep.mubr.f32.mxu0 0.0
    %2271 = vmatmul.mubr.f32.gmra.mrb[0].mxu0 %v1949
    %v2272 = vpop.f32.mrb[0].mxu0
    %v2273 = vadd.f32 %v1847, %v2272
    %v2274 = vpop.f32.mrb[0].mxu0
    %2275 = vmatprep.mubr.f32.mxu0 0.0
    %2276 = vmatmul.mubr.f32.gmra.mrb[0].mxu0 %v1952
    %v2277 = vpop.f32.mrb[0].mxu0
    %v2278 = vadd.f32 %v1847, %v2277
    %v2279 = vpop.f32.mrb[0].mxu0
    %2280 = vmatprep.mubr.f32.mxu0 0.0
    %2281 = vmatmul.mubr.f32.gmra.mrb[0].mxu0 %v1955
    %v2282 = vpop.f32.mrb[0].mxu0
    %v2283 = vadd.f32 %v1847, %v2282
    %v2284 = vpop.f32.mrb[0].mxu0
    %2285 = vmatprep.mubr.f32.mxu0 0.0
    %2286 = vmatmul.mubr.f32.gmra.mrb[0].mxu0 %v1958
    %v2287 = vpop.f32.mrb[0].mxu0
    %v2288 = vadd.f32 %v1847, %v2287
    %v2289 = vpop.f32.mrb[0].mxu0
    %2290 = vmatprep.mubr.f32.mxu0 0.0
    %2291 = vmatmul.mubr.f32.gmra.mrb[0].mxu0 %v1961
    %v2292 = vpop.f32.mrb[0].mxu0
    %v2293 = vadd.f32 %v1847, %v2292
    %v2294 = vpop.f32.mrb[0].mxu0
    %2295 = vmatprep.mubr.f32.mxu0 0.0
    %2296 = vmatmul.mubr.f32.gmra.mrb[0].mxu0 %v1964
    %v2297 = vpop.f32.mrb[0].mxu0
    %v2298 = vadd.f32 %v1847, %v2297
    %v2299 = vpop.f32.mrb[0].mxu0
    %2300 = vmatprep.mubr.f32.mxu0 0.0
    %2301 = vmatmul.mubr.f32.gmra.mrb[0].mxu0 %v1967
    %v2302 = vpop.f32.mrb[0].mxu0
    %v2303 = vadd.f32 %v1847, %v2302
    %v2304 = vpop.f32.mrb[0].mxu0
    %2305 = vmatprep.mubr.f32.mxu0 0.0
    %2306 = vmatmul.mubr.f32.gmra.mrb[0].mxu0 %v1970
    %v2307 = vpop.f32.mrb[0].mxu0
    %v2308 = vadd.f32 %v1847, %v2307
    %v2309 = vpop.f32.mrb[0].mxu0
    %2310 = vmatprep.mubr.f32.mxu0 0.0
    %2311 = vmatmul.mubr.f32.gmra.mrb[0].mxu0 %v1973
    %v2312 = vpop.f32.mrb[0].mxu0
    %v2313 = vadd.f32 %v1847, %v2312
    %v2314 = vpop.f32.mrb[0].mxu0
    %2315 = vmatprep.mubr.f32.mxu0 0.0
    %2316 = vmatmul.mubr.f32.gmra.mrb[0].mxu0 %v1976
    %v2317 = vpop.f32.mrb[0].mxu0
    %v2318 = vadd.f32 %v1847, %v2317
    %v2319 = vpop.f32.mrb[0].mxu0
    %2320 = vmatprep.mubr.f32.mxu0 0.0
    %2321 = vmatmul.mubr.f32.gmra.mrb[0].mxu0 %v1979
    %v2322 = vpop.f32.mrb[0].mxu0
    %v2323 = vadd.f32 %v1847, %v2322
    %v2324 = vpop.f32.mrb[0].mxu0
    %2325 = vmatprep.mubr.f32.mxu0 0.0
    %2326 = vmatmul.mubr.f32.gmra.mrb[0].mxu0 %v1982
    %v2327 = vpop.f32.mrb[0].mxu0
    %v2328 = vadd.f32 %v1847, %v2327
    %v2329 = vpop.f32.mrb[0].mxu0
    %2330 = vmatprep.mubr.f32.mxu0 0.0
    %2331 = vmatmul.mubr.f32.gmra.mrb[0].mxu0 %v1985
    %v2332 = vpop.f32.mrb[0].mxu0
    %v2333 = vadd.f32 %v1847, %v2332
    %v2334 = vpop.f32.mrb[0].mxu0
    %2335 = vmatprep.mubr.f32.mxu0 0.0
    %2336 = vmatmul.mubr.f32.gmra.mrb[0].mxu0 %v1988
    %v2337 = vpop.f32.mrb[0].mxu0
    %v2338 = vadd.f32 %v1847, %v2337
    %v2339 = vpop.f32.mrb[0].mxu0
    %2340 = vmatprep.mubr.f32.mxu0 0.0
    %2341 = vmatmul.mubr.f32.gmra.mrb[0].mxu0 %v1991
    %v2342 = vpop.f32.mrb[0].mxu0
    %v2343 = vadd.f32 %v1847, %v2342
    %v2344 = vpop.f32.mrb[0].mxu0
    %2345 = vmatprep.mubr.f32.mxu0 0.0
    %2346 = vmatmul.mubr.f32.gmra.mrb[0].mxu0 %v1994
    %v2347 = vpop.f32.mrb[0].mxu0
    %v2348 = vadd.f32 %v1847, %v2347
    %v2349 = vpop.f32.mrb[0].mxu0
    %2350 = vmatprep.mubr.f32.mxu0 0.0
    %2351 = vmatmul.mubr.f32.gmra.mrb[0].mxu0 %v1997
    %v2352 = vpop.f32.mrb[0].mxu0
    %v2353 = vadd.f32 %v1847, %v2352
    %v2354 = vpop.f32.mrb[0].mxu0
    %2355 = vmatprep.mubr.f32.mxu0 0.0
    %2356 = vmatmul.mubr.f32.gmra.mrb[0].mxu0 %v2000
    %v2357 = vpop.f32.mrb[0].mxu0
    %v2358 = vadd.f32 %v1847, %v2357
    %v2359 = vpop.f32.mrb[0].mxu0
    %2360 = vmatprep.mubr.f32.mxu0 0.0
    %2361 = vmatmul.mubr.f32.gmra.mrb[0].mxu0 %v2003
    %v2362 = vpop.f32.mrb[0].mxu0
    %v2363 = vadd.f32 %v1847, %v2362
    %v2364 = vpop.f32.mrb[0].mxu0
    %2365 = vmatprep.mubr.f32.mxu0 0.0
    %2366 = vmatmul.mubr.f32.gmra.mrb[0].mxu0 %v2006
    %v2367 = vpop.f32.mrb[0].mxu0
    %v2368 = vadd.f32 %v1847, %v2367
    %v2369 = vpop.f32.mrb[0].mxu0
    %2370 = vmatprep.mubr.f32.mxu0 0.0
    %2371 = vmatmul.mubr.f32.gmra.mrb[0].mxu0 %v2009
    %v2372 = vpop.f32.mrb[0].mxu0
    %v2373 = vadd.f32 %v1847, %v2372
    %v2374 = vpop.f32.mrb[0].mxu0
    %2375 = vmatprep.mubr.f32.mxu0 0.0
    %2376 = vmatmul.mubr.f32.gmra.mrb[0].mxu0 %v2012
    %v2377 = vpop.f32.mrb[0].mxu0
    %v2378 = vadd.f32 %v1847, %v2377
    %v2379 = vpop.f32.mrb[0].mxu0
    %2380 = vmatprep.mubr.f32.mxu0 0.0
    %2381 = vmatmul.mubr.f32.gmra.mrb[0].mxu0 %v2015
    %v2382 = vpop.f32.mrb[0].mxu0
    %v2383 = vadd.f32 %v1847, %v2382
    %v2384 = vpop.f32.mrb[0].mxu0
    %2385 = vmatprep.mubr.f32.mxu0 0.0
    %2386 = vmatmul.mubr.f32.gmra.mrb[0].mxu0 %v2018
    %v2387 = vpop.f32.mrb[0].mxu0
    %v2388 = vadd.f32 %v1847, %v2387
    %v2389 = vpop.f32.mrb[0].mxu0
    %2390 = vmatprep.mubr.f32.mxu0 0.0
    %2391 = vmatmul.mubr.f32.gmra.mrb[0].mxu0 %v2021
    %v2392 = vpop.f32.mrb[0].mxu0
    %v2393 = vadd.f32 %v1847, %v2392
    %v2394 = vpop.f32.mrb[0].mxu0
    %2395 = vmatprep.mubr.f32.mxu0 0.0
    %2396 = vmatmul.mubr.f32.gmra.mrb[0].mxu0 %v2024
    %v2397 = vpop.f32.mrb[0].mxu0
    %v2398 = vadd.f32 %v1847, %v2397
    %v2399 = vpop.f32.mrb[0].mxu0
    %2400 = vmatprep.mubr.f32.mxu0 0.0
    %2401 = vmatmul.mubr.f32.gmra.mrb[0].mxu0 %v2027
    %v2402 = vpop.f32.mrb[0].mxu0
    %v2403 = vadd.f32 %v1847, %v2402
    %v2404 = vpop.f32.mrb[0].mxu0
    %2405 = vmatprep.mubr.f32.mxu0 0.0
    %2406 = vmatmul.mubr.f32.gmra.mrb[0].mxu0 %v2030
    %v2407 = vpop.f32.mrb[0].mxu0
    %v2408 = vadd.f32 %v1847, %v2407
    %v2409 = vpop.f32.mrb[0].mxu0
    %2410 = vmatprep.mubr.f32.mxu0 0.0
    %2411 = vmatmul.mubr.f32.gmra.mrb[0].mxu0 %v2033
    %v2412 = vpop.f32.mrb[0].mxu0
    %v2413 = vadd.f32 %v1847, %v2412
    %v2414 = vpop.f32.mrb[0].mxu0
    %2415 = vmatprep.mubr.f32.mxu0 0.0
    %2416 = vmatmul.mubr.f32.gmra.mrb[0].mxu0 %v2036
    %v2417 = vpop.f32.mrb[0].mxu0
    %v2418 = vadd.f32 %v1847, %v2417
    %v2419 = vpop.f32.mrb[0].mxu0
    %2420 = vmatprep.mubr.f32.mxu0 0.0
    %2421 = vmatmul.mubr.f32.gmra.mrb[0].mxu0 %v2039
    %v2422 = vpop.f32.mrb[0].mxu0
    %v2423 = vadd.f32 %v1847, %v2422
    %v2424 = vpop.f32.mrb[0].mxu0
    %2425 = vdwg.mxu0
    %v2426 = vmax.f32 %v2108, 0.0
    %v2427 = vmax.f32 %v2113, 0.0
    %v2428 = vmax.f32 %v2118, 0.0
    %v2429 = vmax.f32 %v2123, 0.0
    %v2430 = vmax.f32 %v2128, 0.0
    %v2431 = vmax.f32 %v2133, 0.0
    %v2432 = vmax.f32 %v2138, 0.0
    %v2433 = vmax.f32 %v2143, 0.0
    %v2434 = vmax.f32 %v2148, 0.0
    %v2435 = vmax.f32 %v2153, 0.0
    %v2436 = vmax.f32 %v2158, 0.0
    %v2437 = vmax.f32 %v2163, 0.0
    %v2438 = vmax.f32 %v2168, 0.0
    %v2439 = vmax.f32 %v2173, 0.0
    %v2440 = vmax.f32 %v2178, 0.0
    %v2441 = vmax.f32 %v2183, 0.0
    %v2442 = vmax.f32 %v2188, 0.0
    %v2443 = vmax.f32 %v2193, 0.0
    %v2444 = vmax.f32 %v2198, 0.0
    %v2445 = vmax.f32 %v2203, 0.0
    %v2446 = vmax.f32 %v2208, 0.0
    %v2447 = vmax.f32 %v2213, 0.0
    %v2448 = vmax.f32 %v2218, 0.0
    %v2449 = vmax.f32 %v2223, 0.0
    %v2450 = vmax.f32 %v2228, 0.0
    %v2451 = vmax.f32 %v2233, 0.0
    %v2452 = vmax.f32 %v2238, 0.0
    %v2453 = vmax.f32 %v2243, 0.0
    %v2454 = vmax.f32 %v2248, 0.0
    %v2455 = vmax.f32 %v2253, 0.0
    %v2456 = vmax.f32 %v2258, 0.0
    %v2457 = vmax.f32 %v2263, 0.0
    %v2458 = vmax.f32 %v2268, 0.0
    %v2459 = vmax.f32 %v2273, 0.0
    %v2460 = vmax.f32 %v2278, 0.0
    %v2461 = vmax.f32 %v2283, 0.0
    %v2462 = vmax.f32 %v2288, 0.0
    %v2463 = vmax.f32 %v2293, 0.0
    %v2464 = vmax.f32 %v2298, 0.0
    %v2465 = vmax.f32 %v2303, 0.0
    %v2466 = vmax.f32 %v2308, 0.0
    %v2467 = vmax.f32 %v2313, 0.0
    %v2468 = vmax.f32 %v2318, 0.0
    %v2469 = vmax.f32 %v2323, 0.0
    %v2470 = vmax.f32 %v2328, 0.0
    %v2471 = vmax.f32 %v2333, 0.0
    %v2472 = vmax.f32 %v2338, 0.0
    %v2473 = vmax.f32 %v2343, 0.0
    %v2474 = vmax.f32 %v2348, 0.0
    %v2475 = vmax.f32 %v2353, 0.0
    %v2476 = vmax.f32 %v2358, 0.0
    %v2477 = vmax.f32 %v2363, 0.0
    %v2478 = vmax.f32 %v2368, 0.0
    %v2479 = vmax.f32 %v2373, 0.0
    %v2480 = vmax.f32 %v2378, 0.0
    %v2481 = vmax.f32 %v2383, 0.0
    %v2482 = vmax.f32 %v2388, 0.0
    %v2483 = vmax.f32 %v2393, 0.0
    %v2484 = vmax.f32 %v2398, 0.0
    %v2485 = vmax.f32 %v2403, 0.0
    %v2486 = vmax.f32 %v2408, 0.0
    %v2487 = vmax.f32 %v2413, 0.0
    %v2488 = vmax.f32 %v2418, 0.0
    %v2489 = vmax.f32 %v2423, 0.0
    %v2490 = vmin.f32 %v2426, 6.0
    %v2491 = vmin.f32 %v2427, 6.0
    %v2492 = vmin.f32 %v2428, 6.0
    %v2493 = vmin.f32 %v2429, 6.0
    %v2494 = vmin.f32 %v2430, 6.0
    %v2495 = vmin.f32 %v2431, 6.0
    %v2496 = vmin.f32 %v2432, 6.0
    %v2497 = vmin.f32 %v2433, 6.0
    %v2498 = vmin.f32 %v2434, 6.0
    %v2499 = vmin.f32 %v2435, 6.0
    %v2500 = vmin.f32 %v2436, 6.0
    %v2501 = vmin.f32 %v2437, 6.0
    %v2502 = vmin.f32 %v2438, 6.0
    %v2503 = vmin.f32 %v2439, 6.0
    %v2504 = vmin.f32 %v2440, 6.0
    %v2505 = vmin.f32 %v2441, 6.0
    %v2506 = vmin.f32 %v2442, 6.0
    %v2507 = vmin.f32 %v2443, 6.0
    %v2508 = vmin.f32 %v2444, 6.0
    %v2509 = vmin.f32 %v2445, 6.0
    %v2510 = vmin.f32 %v2446, 6.0
    %v2511 = vmin.f32 %v2447, 6.0
    %v2512 = vmin.f32 %v2448, 6.0
    %v2513 = vmin.f32 %v2449, 6.0
    %v2514 = vmin.f32 %v2450, 6.0
    %v2515 = vmin.f32 %v2451, 6.0
    %v2516 = vmin.f32 %v2452, 6.0
    %v2517 = vmin.f32 %v2453, 6.0
    %v2518 = vmin.f32 %v2454, 6.0
    %v2519 = vmin.f32 %v2455, 6.0
    %v2520 = vmin.f32 %v2456, 6.0
    %v2521 = vmin.f32 %v2457, 6.0
    %v2522 = vmin.f32 %v2458, 6.0
    %v2523 = vmin.f32 %v2459, 6.0
    %v2524 = vmin.f32 %v2460, 6.0
    %v2525 = vmin.f32 %v2461, 6.0
    %v2526 = vmin.f32 %v2462, 6.0
    %v2527 = vmin.f32 %v2463, 6.0
    %v2528 = vmin.f32 %v2464, 6.0
    %v2529 = vmin.f32 %v2465, 6.0
    %v2530 = vmin.f32 %v2466, 6.0
    %v2531 = vmin.f32 %v2467, 6.0
    %v2532 = vmin.f32 %v2468, 6.0
    %v2533 = vmin.f32 %v2469, 6.0
    %v2534 = vmin.f32 %v2470, 6.0
    %v2535 = vmin.f32 %v2471, 6.0
    %v2536 = vmin.f32 %v2472, 6.0
    %v2537 = vmin.f32 %v2473, 6.0
    %v2538 = vmin.f32 %v2474, 6.0
    %v2539 = vmin.f32 %v2475, 6.0
    %v2540 = vmin.f32 %v2476, 6.0
    %v2541 = vmin.f32 %v2477, 6.0
    %v2542 = vmin.f32 %v2478, 6.0
    %v2543 = vmin.f32 %v2479, 6.0
    %v2544 = vmin.f32 %v2480, 6.0
    %v2545 = vmin.f32 %v2481, 6.0
    %v2546 = vmin.f32 %v2482, 6.0
    %v2547 = vmin.f32 %v2483, 6.0
    %v2548 = vmin.f32 %v2484, 6.0
    %v2549 = vmin.f32 %v2485, 6.0
    %v2550 = vmin.f32 %v2486, 6.0
    %v2551 = vmin.f32 %v2487, 6.0
    %v2552 = vmin.f32 %v2488, 6.0
    %v2553 = vmin.f32 %v2489, 6.0
    %2554 = vst.msk [vmem:[%s103 + $0x1] sm:$0xff] %vm88, %v2490
    %2555 = vst.msk [vmem:[%s103 + $0x9] sm:$0xff] %vm88, %v2491
    %2556 = vst.msk [vmem:[%s103 + $0x19] sm:$0xff] %vm88, %v2492
    %2557 = vst.msk [vmem:[%s103 + $0x21] sm:$0xff] %vm88, %v2493
    %2558 = vst.msk [vmem:[%s103 + $0x31] sm:$0xff] %vm88, %v2494
    %2559 = vst.msk [vmem:[%s103 + $0x39] sm:$0xff] %vm88, %v2495
    %2560 = vst.msk [vmem:[%s103 + $0x49] sm:$0xff] %vm88, %v2496
    %2561 = vst.msk [vmem:[%s103 + $0x51] sm:$0xff] %vm88, %v2497
    %2562 = vst.msk [vmem:[%s103 + $0x61] sm:$0xff] %vm88, %v2498
    %2563 = vst.msk [vmem:[%s103 + $0x69] sm:$0xff] %vm88, %v2499
    %2564 = vst.msk [vmem:[%s103 + $0x79] sm:$0xff] %vm88, %v2500
    %2565 = vst.msk [vmem:[%s103 + $0x81] sm:$0xff] %vm88, %v2501
    %2566 = vst.msk [vmem:[%s103 + $0x91] sm:$0xff] %vm88, %v2502
    %2567 = vst.msk [vmem:[%s103 + $0x99] sm:$0xff] %vm88, %v2503
    %2568 = vst.msk [vmem:[%s103 + $0xa9] sm:$0xff] %vm88, %v2504
    %2569 = vst.msk [vmem:[%s103 + $0xb1] sm:$0xff] %vm88, %v2505
    %2570 = vst.msk [vmem:[%s103 + $0xc1] sm:$0xff] %vm88, %v2506
    %2571 = vst.msk [vmem:[%s103 + $0xc9] sm:$0xff] %vm88, %v2507
    %2572 = vst.msk [vmem:[%s103 + $0xd9] sm:$0xff] %vm88, %v2508
    %2573 = vst.msk [vmem:[%s103 + $0xe1] sm:$0xff] %vm88, %v2509
    %2574 = vst.msk [vmem:[%s103 + $0xf1] sm:$0xff] %vm88, %v2510
    %2575 = vst.msk [vmem:[%s103 + $0xf9] sm:$0xff] %vm88, %v2511
    %2576 = vst.msk [vmem:[%s103 + $0x109] sm:$0xff] %vm88, %v2512
    %2577 = vst.msk [vmem:[%s103 + $0x111] sm:$0xff] %vm88, %v2513
    %2578 = vst.msk [vmem:[%s103 + $0x121] sm:$0xff] %vm88, %v2514
    %2579 = vst.msk [vmem:[%s103 + $0x129] sm:$0xff] %vm88, %v2515
    %2580 = vst.msk [vmem:[%s103 + $0x139] sm:$0xff] %vm88, %v2516
    %2581 = vst.msk [vmem:[%s103 + $0x141] sm:$0xff] %vm88, %v2517
    %2582 = vst.msk [vmem:[%s103 + $0x151] sm:$0xff] %vm88, %v2518
    %2583 = vst.msk [vmem:[%s103 + $0x159] sm:$0xff] %vm88, %v2519
    %2584 = vst.msk [vmem:[%s103 + $0x169] sm:$0xff] %vm88, %v2520
    %2585 = vst.msk [vmem:[%s103 + $0x171] sm:$0xff] %vm88, %v2521
    %2586 = vst.msk [vmem:[%s103 + $0x1b1] sm:$0xff] %vm88, %v2522
    %2587 = vst.msk [vmem:[%s103 + $0x1b9] sm:$0xff] %vm88, %v2523
    %2588 = vst.msk [vmem:[%s103 + $0x1c9] sm:$0xff] %vm88, %v2524
    %2589 = vst.msk [vmem:[%s103 + $0x1d1] sm:$0xff] %vm88, %v2525
    %2590 = vst.msk [vmem:[%s103 + $0x1e1] sm:$0xff] %vm88, %v2526
    %2591 = vst.msk [vmem:[%s103 + $0x1e9] sm:$0xff] %vm88, %v2527
    %2592 = vst.msk [vmem:[%s103 + $0x1f9] sm:$0xff] %vm88, %v2528
    %2593 = vst.msk [vmem:[%s103 + $0x201] sm:$0xff] %vm88, %v2529
    %2594 = vst.msk [vmem:[%s103 + $0x211] sm:$0xff] %vm88, %v2530
    %2595 = vst.msk [vmem:[%s103 + $0x219] sm:$0xff] %vm88, %v2531
    %2596 = vst.msk [vmem:[%s103 + $0x229] sm:$0xff] %vm88, %v2532
    %2597 = vst.msk [vmem:[%s103 + $0x231] sm:$0xff] %vm88, %v2533
    %2598 = vst.msk [vmem:[%s103 + $0x241] sm:$0xff] %vm88, %v2534
    %2599 = vst.msk [vmem:[%s103 + $0x249] sm:$0xff] %vm88, %v2535
    %2600 = vst.msk [vmem:[%s103 + $0x259] sm:$0xff] %vm88, %v2536
    %2601 = vst.msk [vmem:[%s103 + $0x261] sm:$0xff] %vm88, %v2537
    %2602 = vst.msk [vmem:[%s103 + $0x271] sm:$0xff] %vm88, %v2538
    %2603 = vst.msk [vmem:[%s103 + $0x279] sm:$0xff] %vm88, %v2539
    %2604 = vst.msk [vmem:[%s103 + $0x289] sm:$0xff] %vm88, %v2540
    %2605 = vst.msk [vmem:[%s103 + $0x291] sm:$0xff] %vm88, %v2541
    %2606 = vst.msk [vmem:[%s103 + $0x2a1] sm:$0xff] %vm88, %v2542
    %2607 = vst.msk [vmem:[%s103 + $0x2a9] sm:$0xff] %vm88, %v2543
    %2608 = vst.msk [vmem:[%s103 + $0x2b9] sm:$0xff] %vm88, %v2544
    %2609 = vst.msk [vmem:[%s103 + $0x2c1] sm:$0xff] %vm88, %v2545
    %2610 = vst.msk [vmem:[%s103 + $0x2d1] sm:$0xff] %vm88, %v2546
    %2611 = vst.msk [vmem:[%s103 + $0x2d9] sm:$0xff] %vm88, %v2547
    %2612 = vst.msk [vmem:[%s103 + $0x2e9] sm:$0xff] %vm88, %v2548
    %2613 = vst.msk [vmem:[%s103 + $0x2f1] sm:$0xff] %vm88, %v2549
    %2614 = vst.msk [vmem:[%s103 + $0x301] sm:$0xff] %vm88, %v2550
    %2615 = vst.msk [vmem:[%s103 + $0x309] sm:$0xff] %vm88, %v2551
    %2616 = vst.msk [vmem:[%s103 + $0x319] sm:$0xff] %vm88, %v2552
    %2617 = vst.msk [vmem:[%s103 + $0x321] sm:$0xff] %vm88, %v2553
    %v2618 = vld [vmem:[%s5] sm:$0xff]
    %v2619 = vld [vmem:[%s5 + $0x8] sm:$0x1]
    %v2620 = vld [vmem:[#allocation2] sm:$0xff]
    %v2621 = vld [vmem:[#allocation2 + $0x8] sm:$0xff]
    %v2622 = vld [vmem:[#allocation2 + $0x18] sm:$0xff]
    %v2623 = vld [vmem:[#allocation2 + $0x20] sm:$0xff]
    %v2624 = vld [vmem:[#allocation2 + $0x30] sm:$0xff]
    %v2625 = vld [vmem:[#allocation2 + $0x38] sm:$0xff]
    %v2626 = vld [vmem:[#allocation2 + $0x48] sm:$0xff]
    %v2627 = vld [vmem:[#allocation2 + $0x50] sm:$0xff]
    %v2628 = vld [vmem:[#allocation2 + $0x60] sm:$0xff]
    %v2629 = vld [vmem:[#allocation2 + $0x68] sm:$0xff]
    %v2630 = vld [vmem:[#allocation2 + $0x78] sm:$0xff]
    %v2631 = vld [vmem:[#allocation2 + $0x80] sm:$0xff]
    %v2632 = vld [vmem:[#allocation2 + $0x90] sm:$0xff]
    %v2633 = vld [vmem:[#allocation2 + $0x98] sm:$0xff]
    %v2634 = vld [vmem:[#allocation2 + $0xa8] sm:$0xff]
    %v2635 = vld [vmem:[#allocation2 + $0xb0] sm:$0xff]
    %v2636 = vld [vmem:[#allocation2 + $0xc0] sm:$0xff]
    %v2637 = vld [vmem:[#allocation2 + $0xc8] sm:$0xff]
    %v2638 = vld [vmem:[#allocation2 + $0xd8] sm:$0xff]
    %v2639 = vld [vmem:[#allocation2 + $0xe0] sm:$0xff]
    %v2640 = vld [vmem:[#allocation2 + $0xf0] sm:$0xff]
    %v2641 = vld [vmem:[#allocation2 + $0xf8] sm:$0xff]
    %v2642 = vld [vmem:[#allocation2 + $0x108] sm:$0xff]
    %v2643 = vld [vmem:[#allocation2 + $0x110] sm:$0xff]
    %v2644 = vld [vmem:[#allocation2 + $0x120] sm:$0xff]
    %v2645 = vld [vmem:[#allocation2 + $0x128] sm:$0xff]
    %v2646 = vld [vmem:[#allocation2 + $0x138] sm:$0xff]
    %v2647 = vld [vmem:[#allocation2 + $0x140] sm:$0xff]
    %v2648 = vld [vmem:[#allocation2 + $0x150] sm:$0xff]
    %v2649 = vld [vmem:[#allocation2 + $0x158] sm:$0xff]
    %v2650 = vld [vmem:[#allocation2 + $0x168] sm:$0xff]
    %v2651 = vld [vmem:[#allocation2 + $0x170] sm:$0xff]
    %v2652 = vld [vmem:[#allocation2 + $0x180] sm:$0xff]
    %v2653 = vld [vmem:[#allocation2 + $0x188] sm:$0xff]
    %v2654 = vld [vmem:[#allocation2 + $0x198] sm:$0xff]
    %v2655 = vld [vmem:[#allocation2 + $0x1a0] sm:$0xff]
    %v2656 = vld [vmem:[#allocation2 + $0x1b0] sm:$0xff]
    %v2657 = vld [vmem:[#allocation2 + $0x1b8] sm:$0xff]
    %v2658 = vld [vmem:[#allocation2 + $0x1c8] sm:$0xff]
    %v2659 = vld [vmem:[#allocation2 + $0x1d0] sm:$0xff]
    %v2660 = vld [vmem:[#allocation2 + $0x1e0] sm:$0xff]
    %v2661 = vld [vmem:[#allocation2 + $0x1e8] sm:$0xff]
    %v2662 = vld [vmem:[#allocation2 + $0x1f8] sm:$0xff]
    %v2663 = vld [vmem:[#allocation2 + $0x200] sm:$0xff]
    %v2664 = vld [vmem:[#allocation2 + $0x210] sm:$0xff]
    %v2665 = vld [vmem:[#allocation2 + $0x218] sm:$0xff]
    %v2666 = vld [vmem:[#allocation2 + $0x228] sm:$0xff]
    %v2667 = vld [vmem:[#allocation2 + $0x230] sm:$0xff]
    %v2668 = vld [vmem:[#allocation2 + $0x240] sm:$0xff]
    %v2669 = vld [vmem:[#allocation2 + $0x248] sm:$0xff]
    %v2670 = vld [vmem:[#allocation2 + $0x258] sm:$0xff]
    %v2671 = vld [vmem:[#allocation2 + $0x260] sm:$0xff]
    %v2672 = vld [vmem:[#allocation2 + $0x270] sm:$0xff]
    %v2673 = vld [vmem:[#allocation2 + $0x278] sm:$0xff]
    %v2674 = vld [vmem:[#allocation2 + $0x288] sm:$0xff]
    %v2675 = vld [vmem:[#allocation2 + $0x290] sm:$0xff]
    %v2676 = vld [vmem:[#allocation2 + $0x2a0] sm:$0xff]
    %v2677 = vld [vmem:[#allocation2 + $0x2a8] sm:$0xff]
    %v2678 = vld [vmem:[#allocation2 + $0x2b8] sm:$0xff]
    %v2679 = vld [vmem:[#allocation2 + $0x2c0] sm:$0xff]
    %v2680 = vld [vmem:[#allocation2 + $0x2d0] sm:$0xff]
    %v2681 = vld [vmem:[#allocation2 + $0x2d8] sm:$0xff]
    %v2682 = vld [vmem:[#allocation2 + $0x2e8] sm:$0xff]
    %v2683 = vld [vmem:[#allocation2 + $0x2f0] sm:$0xff]
    %v2684 = vld [vmem:[#allocation2 + $0x300] sm:$0xff]
    %v2685 = vld [vmem:[#allocation2 + $0x308] sm:$0xff]
    %v2686 = vld [vmem:[#allocation2 + $0x318] sm:$0xff]
    %v2687 = vld [vmem:[#allocation2 + $0x320] sm:$0xff]
    %v2688 = vld [vmem:[#allocation2 + $0x330] sm:$0xff]
    %v2689 = vld [vmem:[#allocation2 + $0x338] sm:$0xff]
    %v2690 = vld [vmem:[#allocation2 + $0x348] sm:$0xff]
    %v2691 = vld [vmem:[#allocation2 + $0x350] sm:$0xff]
    %v2692 = vlaneseq
    %v2693 = vshrl.u32 %v2692, 7
    %v2694 = vsub.s32 0, %v2693
    %v2695 = vrot.slane %v2618, %v2694
    %v2696 = vmul.f32 %v2620, %v2695
    %v2697 = vmul.f32 %v2621, %v2695
    %v2698 = vmul.f32 %v2622, %v2695
    %v2699 = vmul.f32 %v2623, %v2695
    %v2700 = vmul.f32 %v2624, %v2695
    %v2701 = vmul.f32 %v2625, %v2695
    %v2702 = vmul.f32 %v2626, %v2695
    %v2703 = vmul.f32 %v2627, %v2695
    %v2704 = vmul.f32 %v2628, %v2695
    %v2705 = vmul.f32 %v2629, %v2695
    %v2706 = vmul.f32 %v2630, %v2695
    %v2707 = vmul.f32 %v2631, %v2695
    %v2708 = vmul.f32 %v2632, %v2695
    %v2709 = vmul.f32 %v2633, %v2695
    %v2710 = vmul.f32 %v2634, %v2695
    %v2711 = vmul.f32 %v2635, %v2695
    %v2712 = vmul.f32 %v2636, %v2695
    %v2713 = vmul.f32 %v2637, %v2695
    %v2714 = vmul.f32 %v2638, %v2695
    %v2715 = vmul.f32 %v2639, %v2695
    %v2716 = vmul.f32 %v2640, %v2695
    %v2717 = vmul.f32 %v2641, %v2695
    %v2718 = vmul.f32 %v2642, %v2695
    %v2719 = vmul.f32 %v2643, %v2695
    %v2720 = vmul.f32 %v2644, %v2695
    %v2721 = vmul.f32 %v2645, %v2695
    %v2722 = vmul.f32 %v2646, %v2695
    %v2723 = vmul.f32 %v2647, %v2695
    %v2724 = vmul.f32 %v2648, %v2695
    %v2725 = vmul.f32 %v2649, %v2695
    %v2726 = vmul.f32 %v2650, %v2695
    %v2727 = vmul.f32 %v2651, %v2695
    %v2728 = vmul.f32 %v2656, %v2695
    %v2729 = vmul.f32 %v2657, %v2695
    %v2730 = vmul.f32 %v2658, %v2695
    %v2731 = vmul.f32 %v2659, %v2695
    %v2732 = vmul.f32 %v2660, %v2695
    %v2733 = vmul.f32 %v2661, %v2695
    %v2734 = vmul.f32 %v2662, %v2695
    %v2735 = vmul.f32 %v2663, %v2695
    %v2736 = vmul.f32 %v2664, %v2695
    %v2737 = vmul.f32 %v2665, %v2695
    %v2738 = vmul.f32 %v2666, %v2695
    %v2739 = vmul.f32 %v2667, %v2695
    %v2740 = vmul.f32 %v2668, %v2695
    %v2741 = vmul.f32 %v2669, %v2695
    %v2742 = vmul.f32 %v2670, %v2695
    %v2743 = vmul.f32 %v2671, %v2695
    %v2744 = vmul.f32 %v2672, %v2695
    %v2745 = vmul.f32 %v2673, %v2695
    %v2746 = vmul.f32 %v2674, %v2695
    %v2747 = vmul.f32 %v2675, %v2695
    %v2748 = vmul.f32 %v2676, %v2695
    %v2749 = vmul.f32 %v2677, %v2695
    %v2750 = vmul.f32 %v2678, %v2695
    %v2751 = vmul.f32 %v2679, %v2695
    %v2752 = vmul.f32 %v2680, %v2695
    %v2753 = vmul.f32 %v2681, %v2695
    %v2754 = vmul.f32 %v2682, %v2695
    %v2755 = vmul.f32 %v2683, %v2695
    %v2756 = vmul.f32 %v2684, %v2695
    %v2757 = vmul.f32 %v2685, %v2695
    %v2758 = vmul.f32 %v2686, %v2695
    %v2759 = vmul.f32 %v2687, %v2695
    %v2760 = vlaneseq
    %v2761 = vshrl.u32 %v2760, 7
    %v2762 = vsub.s32 3, %v2761
    %v2763 = vrot.slane %v2618, %v2762
    %v2764 = vmul.f32 %v2622, %v2763
    %v2765 = vmul.f32 %v2623, %v2763
    %v2766 = vmul.f32 %v2624, %v2763
    %v2767 = vmul.f32 %v2625, %v2763
    %v2768 = vmul.f32 %v2626, %v2763
    %v2769 = vmul.f32 %v2627, %v2763
    %v2770 = vmul.f32 %v2628, %v2763
    %v2771 = vmul.f32 %v2629, %v2763
    %v2772 = vmul.f32 %v2630, %v2763
    %v2773 = vmul.f32 %v2631, %v2763
    %v2774 = vmul.f32 %v2632, %v2763
    %v2775 = vmul.f32 %v2633, %v2763
    %v2776 = vmul.f32 %v2634, %v2763
    %v2777 = vmul.f32 %v2635, %v2763
    %v2778 = vmul.f32 %v2636, %v2763
    %v2779 = vmul.f32 %v2637, %v2763
    %v2780 = vmul.f32 %v2638, %v2763
    %v2781 = vmul.f32 %v2639, %v2763
    %v2782 = vmul.f32 %v2640, %v2763
    %v2783 = vmul.f32 %v2641, %v2763
    %v2784 = vmul.f32 %v2642, %v2763
    %v2785 = vmul.f32 %v2643, %v2763
    %v2786 = vmul.f32 %v2644, %v2763
    %v2787 = vmul.f32 %v2645, %v2763
    %v2788 = vmul.f32 %v2646, %v2763
    %v2789 = vmul.f32 %v2647, %v2763
    %v2790 = vmul.f32 %v2648, %v2763
    %v2791 = vmul.f32 %v2649, %v2763
    %v2792 = vmul.f32 %v2650, %v2763
    %v2793 = vmul.f32 %v2651, %v2763
    %v2794 = vmul.f32 %v2652, %v2763
    %v2795 = vmul.f32 %v2653, %v2763
    %v2796 = vmul.f32 %v2658, %v2763
    %v2797 = vmul.f32 %v2659, %v2763
    %v2798 = vmul.f32 %v2660, %v2763
    %v2799 = vmul.f32 %v2661, %v2763
    %v2800 = vmul.f32 %v2662, %v2763
    %v2801 = vmul.f32 %v2663, %v2763
    %v2802 = vmul.f32 %v2664, %v2763
    %v2803 = vmul.f32 %v2665, %v2763
    %v2804 = vmul.f32 %v2666, %v2763
    %v2805 = vmul.f32 %v2667, %v2763
    %v2806 = vmul.f32 %v2668, %v2763
    %v2807 = vmul.f32 %v2669, %v2763
    %v2808 = vmul.f32 %v2670, %v2763
    %v2809 = vmul.f32 %v2671, %v2763
    %v2810 = vmul.f32 %v2672, %v2763
    %v2811 = vmul.f32 %v2673, %v2763
    %v2812 = vmul.f32 %v2674, %v2763
    %v2813 = vmul.f32 %v2675, %v2763
    %v2814 = vmul.f32 %v2676, %v2763
    %v2815 = vmul.f32 %v2677, %v2763
    %v2816 = vmul.f32 %v2678, %v2763
    %v2817 = vmul.f32 %v2679, %v2763
    %v2818 = vmul.f32 %v2680, %v2763
    %v2819 = vmul.f32 %v2681, %v2763
    %v2820 = vmul.f32 %v2682, %v2763
    %v2821 = vmul.f32 %v2683, %v2763
    %v2822 = vmul.f32 %v2684, %v2763
    %v2823 = vmul.f32 %v2685, %v2763
    %v2824 = vmul.f32 %v2686, %v2763
    %v2825 = vmul.f32 %v2687, %v2763
    %v2826 = vmul.f32 %v2688, %v2763
    %v2827 = vmul.f32 %v2689, %v2763
    %v2828 = vadd.f32 %v2696, %v2764
    %v2829 = vadd.f32 %v2697, %v2765
    %v2830 = vadd.f32 %v2698, %v2766
    %v2831 = vadd.f32 %v2699, %v2767
    %v2832 = vadd.f32 %v2700, %v2768
    %v2833 = vadd.f32 %v2701, %v2769
    %v2834 = vadd.f32 %v2702, %v2770
    %v2835 = vadd.f32 %v2703, %v2771
    %v2836 = vadd.f32 %v2704, %v2772
    %v2837 = vadd.f32 %v2705, %v2773
    %v2838 = vadd.f32 %v2706, %v2774
    %v2839 = vadd.f32 %v2707, %v2775
    %v2840 = vadd.f32 %v2708, %v2776
    %v2841 = vadd.f32 %v2709, %v2777
    %v2842 = vadd.f32 %v2710, %v2778
    %v2843 = vadd.f32 %v2711, %v2779
    %v2844 = vadd.f32 %v2712, %v2780
    %v2845 = vadd.f32 %v2713, %v2781
    %v2846 = vadd.f32 %v2714, %v2782
    %v2847 = vadd.f32 %v2715, %v2783
    %v2848 = vadd.f32 %v2716, %v2784
    %v2849 = vadd.f32 %v2717, %v2785
    %v2850 = vadd.f32 %v2718, %v2786
    %v2851 = vadd.f32 %v2719, %v2787
    %v2852 = vadd.f32 %v2720, %v2788
    %v2853 = vadd.f32 %v2721, %v2789
    %v2854 = vadd.f32 %v2722, %v2790
    %v2855 = vadd.f32 %v2723, %v2791
    %v2856 = vadd.f32 %v2724, %v2792
    %v2857 = vadd.f32 %v2725, %v2793
    %v2858 = vadd.f32 %v2726, %v2794
    %v2859 = vadd.f32 %v2727, %v2795
    %v2860 = vadd.f32 %v2728, %v2796
    %v2861 = vadd.f32 %v2729, %v2797
    %v2862 = vadd.f32 %v2730, %v2798
    %v2863 = vadd.f32 %v2731, %v2799
    %v2864 = vadd.f32 %v2732, %v2800
    %v2865 = vadd.f32 %v2733, %v2801
    %v2866 = vadd.f32 %v2734, %v2802
    %v2867 = vadd.f32 %v2735, %v2803
    %v2868 = vadd.f32 %v2736, %v2804
    %v2869 = vadd.f32 %v2737, %v2805
    %v2870 = vadd.f32 %v2738, %v2806
    %v2871 = vadd.f32 %v2739, %v2807
    %v2872 = vadd.f32 %v2740, %v2808
    %v2873 = vadd.f32 %v2741, %v2809
    %v2874 = vadd.f32 %v2742, %v2810
    %v2875 = vadd.f32 %v2743, %v2811
    %v2876 = vadd.f32 %v2744, %v2812
    %v2877 = vadd.f32 %v2745, %v2813
    %v2878 = vadd.f32 %v2746, %v2814
    %v2879 = vadd.f32 %v2747, %v2815
    %v2880 = vadd.f32 %v2748, %v2816
    %v2881 = vadd.f32 %v2749, %v2817
    %v2882 = vadd.f32 %v2750, %v2818
    %v2883 = vadd.f32 %v2751, %v2819
    %v2884 = vadd.f32 %v2752, %v2820
    %v2885 = vadd.f32 %v2753, %v2821
    %v2886 = vadd.f32 %v2754, %v2822
    %v2887 = vadd.f32 %v2755, %v2823
    %v2888 = vadd.f32 %v2756, %v2824
    %v2889 = vadd.f32 %v2757, %v2825
    %v2890 = vadd.f32 %v2758, %v2826
    %v2891 = vadd.f32 %v2759, %v2827
    %v2892 = vlaneseq
    %v2893 = vshrl.u32 %v2892, 7
    %v2894 = vsub.s32 6, %v2893
    %v2895 = vrot.slane %v2618, %v2894
    %v2896 = vmul.f32 %v2624, %v2895
    %v2897 = vmul.f32 %v2625, %v2895
    %v2898 = vmul.f32 %v2626, %v2895
    %v2899 = vmul.f32 %v2627, %v2895
    %v2900 = vmul.f32 %v2628, %v2895
    %v2901 = vmul.f32 %v2629, %v2895
    %v2902 = vmul.f32 %v2630, %v2895
    %v2903 = vmul.f32 %v2631, %v2895
    %v2904 = vmul.f32 %v2632, %v2895
    %v2905 = vmul.f32 %v2633, %v2895
    %v2906 = vmul.f32 %v2634, %v2895
    %v2907 = vmul.f32 %v2635, %v2895
    %v2908 = vmul.f32 %v2636, %v2895
    %v2909 = vmul.f32 %v2637, %v2895
    %v2910 = vmul.f32 %v2638, %v2895
    %v2911 = vmul.f32 %v2639, %v2895
    %v2912 = vmul.f32 %v2640, %v2895
    %v2913 = vmul.f32 %v2641, %v2895
    %v2914 = vmul.f32 %v2642, %v2895
    %v2915 = vmul.f32 %v2643, %v2895
    %v2916 = vmul.f32 %v2644, %v2895
    %v2917 = vmul.f32 %v2645, %v2895
    %v2918 = vmul.f32 %v2646, %v2895
    %v2919 = vmul.f32 %v2647, %v2895
    %v2920 = vmul.f32 %v2648, %v2895
    %v2921 = vmul.f32 %v2649, %v2895
    %v2922 = vmul.f32 %v2650, %v2895
    %v2923 = vmul.f32 %v2651, %v2895
    %v2924 = vmul.f32 %v2652, %v2895
    %v2925 = vmul.f32 %v2653, %v2895
    %v2926 = vmul.f32 %v2654, %v2895
    %v2927 = vmul.f32 %v2655, %v2895
    %v2928 = vmul.f32 %v2660, %v2895
    %v2929 = vmul.f32 %v2661, %v2895
    %v2930 = vmul.f32 %v2662, %v2895
    %v2931 = vmul.f32 %v2663, %v2895
    %v2932 = vmul.f32 %v2664, %v2895
    %v2933 = vmul.f32 %v2665, %v2895
    %v2934 = vmul.f32 %v2666, %v2895
    %v2935 = vmul.f32 %v2667, %v2895
    %v2936 = vmul.f32 %v2668, %v2895
    %v2937 = vmul.f32 %v2669, %v2895
    %v2938 = vmul.f32 %v2670, %v2895
    %v2939 = vmul.f32 %v2671, %v2895
    %v2940 = vmul.f32 %v2672, %v2895
    %v2941 = vmul.f32 %v2673, %v2895
    %v2942 = vmul.f32 %v2674, %v2895
    %v2943 = vmul.f32 %v2675, %v2895
    %v2944 = vmul.f32 %v2676, %v2895
    %v2945 = vmul.f32 %v2677, %v2895
    %v2946 = vmul.f32 %v2678, %v2895
    %v2947 = vmul.f32 %v2679, %v2895
    %v2948 = vmul.f32 %v2680, %v2895
    %v2949 = vmul.f32 %v2681, %v2895
    %v2950 = vmul.f32 %v2682, %v2895
    %v2951 = vmul.f32 %v2683, %v2895
    %v2952 = vmul.f32 %v2684, %v2895
    %v2953 = vmul.f32 %v2685, %v2895
    %v2954 = vmul.f32 %v2686, %v2895
    %v2955 = vmul.f32 %v2687, %v2895
    %v2956 = vmul.f32 %v2688, %v2895
    %v2957 = vmul.f32 %v2689, %v2895
    %v2958 = vmul.f32 %v2690, %v2895
    %v2959 = vmul.f32 %v2691, %v2895
    %v2960 = vadd.f32 %v2828, %v2896
    %v2961 = vadd.f32 %v2829, %v2897
    %v2962 = vadd.f32 %v2830, %v2898
    %v2963 = vadd.f32 %v2831, %v2899
    %v2964 = vadd.f32 %v2832, %v2900
    %v2965 = vadd.f32 %v2833, %v2901
    %v2966 = vadd.f32 %v2834, %v2902
    %v2967 = vadd.f32 %v2835, %v2903
    %v2968 = vadd.f32 %v2836, %v2904
    %v2969 = vadd.f32 %v2837, %v2905
    %v2970 = vadd.f32 %v2838, %v2906
    %v2971 = vadd.f32 %v2839, %v2907
    %v2972 = vadd.f32 %v2840, %v2908
    %v2973 = vadd.f32 %v2841, %v2909
    %v2974 = vadd.f32 %v2842, %v2910
    %v2975 = vadd.f32 %v2843, %v2911
    %v2976 = vadd.f32 %v2844, %v2912
    %v2977 = vadd.f32 %v2845, %v2913
    %v2978 = vadd.f32 %v2846, %v2914
    %v2979 = vadd.f32 %v2847, %v2915
    %v2980 = vadd.f32 %v2848, %v2916
    %v2981 = vadd.f32 %v2849, %v2917
    %v2982 = vadd.f32 %v2850, %v2918
    %v2983 = vadd.f32 %v2851, %v2919
    %v2984 = vadd.f32 %v2852, %v2920
    %v2985 = vadd.f32 %v2853, %v2921
    %v2986 = vadd.f32 %v2854, %v2922
    %v2987 = vadd.f32 %v2855, %v2923
    %v2988 = vadd.f32 %v2856, %v2924
    %v2989 = vadd.f32 %v2857, %v2925
    %v2990 = vadd.f32 %v2858, %v2926
    %v2991 = vadd.f32 %v2859, %v2927
    %v2992 = vadd.f32 %v2860, %v2928
    %v2993 = vadd.f32 %v2861, %v2929
    %v2994 = vadd.f32 %v2862, %v2930
    %v2995 = vadd.f32 %v2863, %v2931
    %v2996 = vadd.f32 %v2864, %v2932
    %v2997 = vadd.f32 %v2865, %v2933
    %v2998 = vadd.f32 %v2866, %v2934
    %v2999 = vadd.f32 %v2867, %v2935
    %v3000 = vadd.f32 %v2868, %v2936
    %v3001 = vadd.f32 %v2869, %v2937
    %v3002 = vadd.f32 %v2870, %v2938
    %v3003 = vadd.f32 %v2871, %v2939
    %v3004 = vadd.f32 %v2872, %v2940
    %v3005 = vadd.f32 %v2873, %v2941
    %v3006 = vadd.f32 %v2874, %v2942
    %v3007 = vadd.f32 %v2875, %v2943
    %v3008 = vadd.f32 %v2876, %v2944
    %v3009 = vadd.f32 %v2877, %v2945
    %v3010 = vadd.f32 %v2878, %v2946
    %v3011 = vadd.f32 %v2879, %v2947
    %v3012 = vadd.f32 %v2880, %v2948
    %v3013 = vadd.f32 %v2881, %v2949
    %v3014 = vadd.f32 %v2882, %v2950
    %v3015 = vadd.f32 %v2883, %v2951
    %v3016 = vadd.f32 %v2884, %v2952
    %v3017 = vadd.f32 %v2885, %v2953
    %v3018 = vadd.f32 %v2886, %v2954
    %v3019 = vadd.f32 %v2887, %v2955
    %v3020 = vadd.f32 %v2888, %v2956
    %v3021 = vadd.f32 %v2889, %v2957
    %v3022 = vadd.f32 %v2890, %v2958
    %v3023 = vadd.f32 %v2891, %v2959
    %v3024 = vld [vmem:[#allocation2 + $0x1] sm:$0xff]
    %v3025 = vld [vmem:[#allocation2 + $0x9] sm:$0xff]
    %v3026 = vld [vmem:[#allocation2 + $0x19] sm:$0xff]
    %v3027 = vld [vmem:[#allocation2 + $0x21] sm:$0xff]
    %v3028 = vld [vmem:[#allocation2 + $0x31] sm:$0xff]
    %v3029 = vld [vmem:[#allocation2 + $0x39] sm:$0xff]
    %v3030 = vld [vmem:[#allocation2 + $0x49] sm:$0xff]
    %v3031 = vld [vmem:[#allocation2 + $0x51] sm:$0xff]
    %v3032 = vld [vmem:[#allocation2 + $0x61] sm:$0xff]
    %v3033 = vld [vmem:[#allocation2 + $0x69] sm:$0xff]
    %v3034 = vld [vmem:[#allocation2 + $0x79] sm:$0xff]
    %v3035 = vld [vmem:[#allocation2 + $0x81] sm:$0xff]
    %v3036 = vld [vmem:[#allocation2 + $0x91] sm:$0xff]
    %v3037 = vld [vmem:[#allocation2 + $0x99] sm:$0xff]
    %v3038 = vld [vmem:[#allocation2 + $0xa9] sm:$0xff]
    %v3039 = vld [vmem:[#allocation2 + $0xb1] sm:$0xff]
    %v3040 = vld [vmem:[#allocation2 + $0xc1] sm:$0xff]
    %v3041 = vld [vmem:[#allocation2 + $0xc9] sm:$0xff]
    %v3042 = vld [vmem:[#allocation2 + $0xd9] sm:$0xff]
    %v3043 = vld [vmem:[#allocation2 + $0xe1] sm:$0xff]
    %v3044 = vld [vmem:[#allocation2 + $0xf1] sm:$0xff]
    %v3045 = vld [vmem:[#allocation2 + $0xf9] sm:$0xff]
    %v3046 = vld [vmem:[#allocation2 + $0x109] sm:$0xff]
    %v3047 = vld [vmem:[#allocation2 + $0x111] sm:$0xff]
    %v3048 = vld [vmem:[#allocation2 + $0x121] sm:$0xff]
    %v3049 = vld [vmem:[#allocation2 + $0x129] sm:$0xff]
    %v3050 = vld [vmem:[#allocation2 + $0x139] sm:$0xff]
    %v3051 = vld [vmem:[#allocation2 + $0x141] sm:$0xff]
    %v3052 = vld [vmem:[#allocation2 + $0x151] sm:$0xff]
    %v3053 = vld [vmem:[#allocation2 + $0x159] sm:$0xff]
    %v3054 = vld [vmem:[#allocation2 + $0x169] sm:$0xff]
    %v3055 = vld [vmem:[#allocation2 + $0x171] sm:$0xff]
    %v3056 = vld [vmem:[#allocation2 + $0x181] sm:$0xff]
    %v3057 = vld [vmem:[#allocation2 + $0x189] sm:$0xff]
    %v3058 = vld [vmem:[#allocation2 + $0x199] sm:$0xff]
    %v3059 = vld [vmem:[#allocation2 + $0x1a1] sm:$0xff]
    %v3060 = vld [vmem:[#allocation2 + $0x1b1] sm:$0xff]
    %v3061 = vld [vmem:[#allocation2 + $0x1b9] sm:$0xff]
    %v3062 = vld [vmem:[#allocation2 + $0x1c9] sm:$0xff]
    %v3063 = vld [vmem:[#allocation2 + $0x1d1] sm:$0xff]
    %v3064 = vld [vmem:[#allocation2 + $0x1e1] sm:$0xff]
    %v3065 = vld [vmem:[#allocation2 + $0x1e9] sm:$0xff]
    %v3066 = vld [vmem:[#allocation2 + $0x1f9] sm:$0xff]
    %v3067 = vld [vmem:[#allocation2 + $0x201] sm:$0xff]
    %v3068 = vld [vmem:[#allocation2 + $0x211] sm:$0xff]
    %v3069 = vld [vmem:[#allocation2 + $0x219] sm:$0xff]
    %v3070 = vld [vmem:[#allocation2 + $0x229] sm:$0xff]
    %v3071 = vld [vmem:[#allocation2 + $0x231] sm:$0xff]
    %v3072 = vld [vmem:[#allocation2 + $0x241] sm:$0xff]
    %v3073 = vld [vmem:[#allocation2 + $0x249] sm:$0xff]
    %v3074 = vld [vmem:[#allocation2 + $0x259] sm:$0xff]
    %v3075 = vld [vmem:[#allocation2 + $0x261] sm:$0xff]
    %v3076 = vld [vmem:[#allocation2 + $0x271] sm:$0xff]
    %v3077 = vld [vmem:[#allocation2 + $0x279] sm:$0xff]
    %v3078 = vld [vmem:[#allocation2 + $0x289] sm:$0xff]
    %v3079 = vld [vmem:[#allocation2 + $0x291] sm:$0xff]
    %v3080 = vld [vmem:[#allocation2 + $0x2a1] sm:$0xff]
    %v3081 = vld [vmem:[#allocation2 + $0x2a9] sm:$0xff]
    %v3082 = vld [vmem:[#allocation2 + $0x2b9] sm:$0xff]
    %v3083 = vld [vmem:[#allocation2 + $0x2c1] sm:$0xff]
    %v3084 = vld [vmem:[#allocation2 + $0x2d1] sm:$0xff]
    %v3085 = vld [vmem:[#allocation2 + $0x2d9] sm:$0xff]
    %v3086 = vld [vmem:[#allocation2 + $0x2e9] sm:$0xff]
    %v3087 = vld [vmem:[#allocation2 + $0x2f1] sm:$0xff]
    %v3088 = vld [vmem:[#allocation2 + $0x301] sm:$0xff]
    %v3089 = vld [vmem:[#allocation2 + $0x309] sm:$0xff]
    %v3090 = vld [vmem:[#allocation2 + $0x319] sm:$0xff]
    %v3091 = vld [vmem:[#allocation2 + $0x321] sm:$0xff]
    %v3092 = vld [vmem:[#allocation2 + $0x331] sm:$0xff]
    %v3093 = vld [vmem:[#allocation2 + $0x339] sm:$0xff]
    %v3094 = vld [vmem:[#allocation2 + $0x349] sm:$0xff]
    %v3095 = vld [vmem:[#allocation2 + $0x351] sm:$0xff]
    %v3096 = vlaneseq
    %v3097 = vshrl.u32 %v3096, 7
    %v3098 = vsub.s32 1, %v3097
    %v3099 = vrot.slane %v2618, %v3098
    %v3100 = vmul.f32 %v3024, %v3099
    %v3101 = vmul.f32 %v3025, %v3099
    %v3102 = vmul.f32 %v3026, %v3099
    %v3103 = vmul.f32 %v3027, %v3099
    %v3104 = vmul.f32 %v3028, %v3099
    %v3105 = vmul.f32 %v3029, %v3099
    %v3106 = vmul.f32 %v3030, %v3099
    %v3107 = vmul.f32 %v3031, %v3099
    %v3108 = vmul.f32 %v3032, %v3099
    %v3109 = vmul.f32 %v3033, %v3099
    %v3110 = vmul.f32 %v3034, %v3099
    %v3111 = vmul.f32 %v3035, %v3099
    %v3112 = vmul.f32 %v3036, %v3099
    %v3113 = vmul.f32 %v3037, %v3099
    %v3114 = vmul.f32 %v3038, %v3099
    %v3115 = vmul.f32 %v3039, %v3099
    %v3116 = vmul.f32 %v3040, %v3099
    %v3117 = vmul.f32 %v3041, %v3099
    %v3118 = vmul.f32 %v3042, %v3099
    %v3119 = vmul.f32 %v3043, %v3099
    %v3120 = vmul.f32 %v3044, %v3099
    %v3121 = vmul.f32 %v3045, %v3099
    %v3122 = vmul.f32 %v3046, %v3099
    %v3123 = vmul.f32 %v3047, %v3099
    %v3124 = vmul.f32 %v3048, %v3099
    %v3125 = vmul.f32 %v3049, %v3099
    %v3126 = vmul.f32 %v3050, %v3099
    %v3127 = vmul.f32 %v3051, %v3099
    %v3128 = vmul.f32 %v3052, %v3099
    %v3129 = vmul.f32 %v3053, %v3099
    %v3130 = vmul.f32 %v3054, %v3099
    %v3131 = vmul.f32 %v3055, %v3099
    %v3132 = vmul.f32 %v3060, %v3099
    %v3133 = vmul.f32 %v3061, %v3099
    %v3134 = vmul.f32 %v3062, %v3099
    %v3135 = vmul.f32 %v3063, %v3099
    %v3136 = vmul.f32 %v3064, %v3099
    %v3137 = vmul.f32 %v3065, %v3099
    %v3138 = vmul.f32 %v3066, %v3099
    %v3139 = vmul.f32 %v3067, %v3099
    %v3140 = vmul.f32 %v3068, %v3099
    %v3141 = vmul.f32 %v3069, %v3099
    %v3142 = vmul.f32 %v3070, %v3099
    %v3143 = vmul.f32 %v3071, %v3099
    %v3144 = vmul.f32 %v3072, %v3099
    %v3145 = vmul.f32 %v3073, %v3099
    %v3146 = vmul.f32 %v3074, %v3099
    %v3147 = vmul.f32 %v3075, %v3099
    %v3148 = vmul.f32 %v3076, %v3099
    %v3149 = vmul.f32 %v3077, %v3099
    %v3150 = vmul.f32 %v3078, %v3099
    %v3151 = vmul.f32 %v3079, %v3099
    %v3152 = vmul.f32 %v3080, %v3099
    %v3153 = vmul.f32 %v3081, %v3099
    %v3154 = vmul.f32 %v3082, %v3099
    %v3155 = vmul.f32 %v3083, %v3099
    %v3156 = vmul.f32 %v3084, %v3099
    %v3157 = vmul.f32 %v3085, %v3099
    %v3158 = vmul.f32 %v3086, %v3099
    %v3159 = vmul.f32 %v3087, %v3099
    %v3160 = vmul.f32 %v3088, %v3099
    %v3161 = vmul.f32 %v3089, %v3099
    %v3162 = vmul.f32 %v3090, %v3099
    %v3163 = vmul.f32 %v3091, %v3099
    %v3164 = vlaneseq
    %v3165 = vshrl.u32 %v3164, 7
    %v3166 = vsub.s32 4, %v3165
    %v3167 = vrot.slane %v2618, %v3166
    %v3168 = vmul.f32 %v3026, %v3167
    %v3169 = vmul.f32 %v3027, %v3167
    %v3170 = vmul.f32 %v3028, %v3167
    %v3171 = vmul.f32 %v3029, %v3167
    %v3172 = vmul.f32 %v3030, %v3167
    %v3173 = vmul.f32 %v3031, %v3167
    %v3174 = vmul.f32 %v3032, %v3167
    %v3175 = vmul.f32 %v3033, %v3167
    %v3176 = vmul.f32 %v3034, %v3167
    %v3177 = vmul.f32 %v3035, %v3167
    %v3178 = vmul.f32 %v3036, %v3167
    %v3179 = vmul.f32 %v3037, %v3167
    %v3180 = vmul.f32 %v3038, %v3167
    %v3181 = vmul.f32 %v3039, %v3167
    %v3182 = vmul.f32 %v3040, %v3167
    %v3183 = vmul.f32 %v3041, %v3167
    %v3184 = vmul.f32 %v3042, %v3167
    %v3185 = vmul.f32 %v3043, %v3167
    %v3186 = vmul.f32 %v3044, %v3167
    %v3187 = vmul.f32 %v3045, %v3167
    %v3188 = vmul.f32 %v3046, %v3167
    %v3189 = vmul.f32 %v3047, %v3167
    %v3190 = vmul.f32 %v3048, %v3167
    %v3191 = vmul.f32 %v3049, %v3167
    %v3192 = vmul.f32 %v3050, %v3167
    %v3193 = vmul.f32 %v3051, %v3167
    %v3194 = vmul.f32 %v3052, %v3167
    %v3195 = vmul.f32 %v3053, %v3167
    %v3196 = vmul.f32 %v3054, %v3167
    %v3197 = vmul.f32 %v3055, %v3167
    %v3198 = vmul.f32 %v3056, %v3167
    %v3199 = vmul.f32 %v3057, %v3167
    %v3200 = vmul.f32 %v3062, %v3167
    %v3201 = vmul.f32 %v3063, %v3167
    %v3202 = vmul.f32 %v3064, %v3167
    %v3203 = vmul.f32 %v3065, %v3167
    %v3204 = vmul.f32 %v3066, %v3167
    %v3205 = vmul.f32 %v3067, %v3167
    %v3206 = vmul.f32 %v3068, %v3167
    %v3207 = vmul.f32 %v3069, %v3167
    %v3208 = vmul.f32 %v3070, %v3167
    %v3209 = vmul.f32 %v3071, %v3167
    %v3210 = vmul.f32 %v3072, %v3167
    %v3211 = vmul.f32 %v3073, %v3167
    %v3212 = vmul.f32 %v3074, %v3167
    %v3213 = vmul.f32 %v3075, %v3167
    %v3214 = vmul.f32 %v3076, %v3167
    %v3215 = vmul.f32 %v3077, %v3167
    %v3216 = vmul.f32 %v3078, %v3167
    %v3217 = vmul.f32 %v3079, %v3167
    %v3218 = vmul.f32 %v3080, %v3167
    %v3219 = vmul.f32 %v3081, %v3167
    %v3220 = vmul.f32 %v3082, %v3167
    %v3221 = vmul.f32 %v3083, %v3167
    %v3222 = vmul.f32 %v3084, %v3167
    %v3223 = vmul.f32 %v3085, %v3167
    %v3224 = vmul.f32 %v3086, %v3167
    %v3225 = vmul.f32 %v3087, %v3167
    %v3226 = vmul.f32 %v3088, %v3167
    %v3227 = vmul.f32 %v3089, %v3167
    %v3228 = vmul.f32 %v3090, %v3167
    %v3229 = vmul.f32 %v3091, %v3167
    %v3230 = vmul.f32 %v3092, %v3167
    %v3231 = vmul.f32 %v3093, %v3167
    %v3232 = vadd.f32 %v3100, %v3168
    %v3233 = vadd.f32 %v3101, %v3169
    %v3234 = vadd.f32 %v3102, %v3170
    %v3235 = vadd.f32 %v3103, %v3171
    %v3236 = vadd.f32 %v3104, %v3172
    %v3237 = vadd.f32 %v3105, %v3173
    %v3238 = vadd.f32 %v3106, %v3174
    %v3239 = vadd.f32 %v3107, %v3175
    %v3240 = vadd.f32 %v3108, %v3176
    %v3241 = vadd.f32 %v3109, %v3177
    %v3242 = vadd.f32 %v3110, %v3178
    %v3243 = vadd.f32 %v3111, %v3179
    %v3244 = vadd.f32 %v3112, %v3180
    %v3245 = vadd.f32 %v3113, %v3181
    %v3246 = vadd.f32 %v3114, %v3182
    %v3247 = vadd.f32 %v3115, %v3183
    %v3248 = vadd.f32 %v3116, %v3184
    %v3249 = vadd.f32 %v3117, %v3185
    %v3250 = vadd.f32 %v3118, %v3186
    %v3251 = vadd.f32 %v3119, %v3187
    %v3252 = vadd.f32 %v3120, %v3188
    %v3253 = vadd.f32 %v3121, %v3189
    %v3254 = vadd.f32 %v3122, %v3190
    %v3255 = vadd.f32 %v3123, %v3191
    %v3256 = vadd.f32 %v3124, %v3192
    %v3257 = vadd.f32 %v3125, %v3193
    %v3258 = vadd.f32 %v3126, %v3194
    %v3259 = vadd.f32 %v3127, %v3195
    %v3260 = vadd.f32 %v3128, %v3196
    %v3261 = vadd.f32 %v3129, %v3197
    %v3262 = vadd.f32 %v3130, %v3198
    %v3263 = vadd.f32 %v3131, %v3199
    %v3264 = vadd.f32 %v3132, %v3200
    %v3265 = vadd.f32 %v3133, %v3201
    %v3266 = vadd.f32 %v3134, %v3202
    %v3267 = vadd.f32 %v3135, %v3203
    %v3268 = vadd.f32 %v3136, %v3204
    %v3269 = vadd.f32 %v3137, %v3205
    %v3270 = vadd.f32 %v3138, %v3206
    %v3271 = vadd.f32 %v3139, %v3207
    %v3272 = vadd.f32 %v3140, %v3208
    %v3273 = vadd.f32 %v3141, %v3209
    %v3274 = vadd.f32 %v3142, %v3210
    %v3275 = vadd.f32 %v3143, %v3211
    %v3276 = vadd.f32 %v3144, %v3212
    %v3277 = vadd.f32 %v3145, %v3213
    %v3278 = vadd.f32 %v3146, %v3214
    %v3279 = vadd.f32 %v3147, %v3215
    %v3280 = vadd.f32 %v3148, %v3216
    %v3281 = vadd.f32 %v3149, %v3217
    %v3282 = vadd.f32 %v3150, %v3218
    %v3283 = vadd.f32 %v3151, %v3219
    %v3284 = vadd.f32 %v3152, %v3220
    %v3285 = vadd.f32 %v3153, %v3221
    %v3286 = vadd.f32 %v3154, %v3222
    %v3287 = vadd.f32 %v3155, %v3223
    %v3288 = vadd.f32 %v3156, %v3224
    %v3289 = vadd.f32 %v3157, %v3225
    %v3290 = vadd.f32 %v3158, %v3226
    %v3291 = vadd.f32 %v3159, %v3227
    %v3292 = vadd.f32 %v3160, %v3228
    %v3293 = vadd.f32 %v3161, %v3229
    %v3294 = vadd.f32 %v3162, %v3230
    %v3295 = vadd.f32 %v3163, %v3231
    %v3296 = vlaneseq
    %v3297 = vshrl.u32 %v3296, 7
    %v3298 = vsub.s32 7, %v3297
    %v3299 = vrot.slane %v2618, %v3298
    %v3300 = vmul.f32 %v3028, %v3299
    %v3301 = vmul.f32 %v3029, %v3299
    %v3302 = vmul.f32 %v3030, %v3299
    %v3303 = vmul.f32 %v3031, %v3299
    %v3304 = vmul.f32 %v3032, %v3299
    %v3305 = vmul.f32 %v3033, %v3299
    %v3306 = vmul.f32 %v3034, %v3299
    %v3307 = vmul.f32 %v3035, %v3299
    %v3308 = vmul.f32 %v3036, %v3299
    %v3309 = vmul.f32 %v3037, %v3299
    %v3310 = vmul.f32 %v3038, %v3299
    %v3311 = vmul.f32 %v3039, %v3299
    %v3312 = vmul.f32 %v3040, %v3299
    %v3313 = vmul.f32 %v3041, %v3299
    %v3314 = vmul.f32 %v3042, %v3299
    %v3315 = vmul.f32 %v3043, %v3299
    %v3316 = vmul.f32 %v3044, %v3299
    %v3317 = vmul.f32 %v3045, %v3299
    %v3318 = vmul.f32 %v3046, %v3299
    %v3319 = vmul.f32 %v3047, %v3299
    %v3320 = vmul.f32 %v3048, %v3299
    %v3321 = vmul.f32 %v3049, %v3299
    %v3322 = vmul.f32 %v3050, %v3299
    %v3323 = vmul.f32 %v3051, %v3299
    %v3324 = vmul.f32 %v3052, %v3299
    %v3325 = vmul.f32 %v3053, %v3299
    %v3326 = vmul.f32 %v3054, %v3299
    %v3327 = vmul.f32 %v3055, %v3299
    %v3328 = vmul.f32 %v3056, %v3299
    %v3329 = vmul.f32 %v3057, %v3299
    %v3330 = vmul.f32 %v3058, %v3299
    %v3331 = vmul.f32 %v3059, %v3299
    %v3332 = vmul.f32 %v3064, %v3299
    %v3333 = vmul.f32 %v3065, %v3299
    %v3334 = vmul.f32 %v3066, %v3299
    %v3335 = vmul.f32 %v3067, %v3299
    %v3336 = vmul.f32 %v3068, %v3299
    %v3337 = vmul.f32 %v3069, %v3299
    %v3338 = vmul.f32 %v3070, %v3299
    %v3339 = vmul.f32 %v3071, %v3299
    %v3340 = vmul.f32 %v3072, %v3299
    %v3341 = vmul.f32 %v3073, %v3299
    %v3342 = vmul.f32 %v3074, %v3299
    %v3343 = vmul.f32 %v3075, %v3299
    %v3344 = vmul.f32 %v3076, %v3299
    %v3345 = vmul.f32 %v3077, %v3299
    %v3346 = vmul.f32 %v3078, %v3299
    %v3347 = vmul.f32 %v3079, %v3299
    %v3348 = vmul.f32 %v3080, %v3299
    %v3349 = vmul.f32 %v3081, %v3299
    %v3350 = vmul.f32 %v3082, %v3299
    %v3351 = vmul.f32 %v3083, %v3299
    %v3352 = vmul.f32 %v3084, %v3299
    %v3353 = vmul.f32 %v3085, %v3299
    %v3354 = vmul.f32 %v3086, %v3299
    %v3355 = vmul.f32 %v3087, %v3299
    %v3356 = vmul.f32 %v3088, %v3299
    %v3357 = vmul.f32 %v3089, %v3299
    %v3358 = vmul.f32 %v3090, %v3299
    %v3359 = vmul.f32 %v3091, %v3299
    %v3360 = vmul.f32 %v3092, %v3299
    %v3361 = vmul.f32 %v3093, %v3299
    %v3362 = vmul.f32 %v3094, %v3299
    %v3363 = vmul.f32 %v3095, %v3299
    %v3364 = vadd.f32 %v3232, %v3300
    %v3365 = vadd.f32 %v3233, %v3301
    %v3366 = vadd.f32 %v3234, %v3302
    %v3367 = vadd.f32 %v3235, %v3303
    %v3368 = vadd.f32 %v3236, %v3304
    %v3369 = vadd.f32 %v3237, %v3305
    %v3370 = vadd.f32 %v3238, %v3306
    %v3371 = vadd.f32 %v3239, %v3307
    %v3372 = vadd.f32 %v3240, %v3308
    %v3373 = vadd.f32 %v3241, %v3309
    %v3374 = vadd.f32 %v3242, %v3310
    %v3375 = vadd.f32 %v3243, %v3311
    %v3376 = vadd.f32 %v3244, %v3312
    %v3377 = vadd.f32 %v3245, %v3313
    %v3378 = vadd.f32 %v3246, %v3314
    %v3379 = vadd.f32 %v3247, %v3315
    %v3380 = vadd.f32 %v3248, %v3316
    %v3381 = vadd.f32 %v3249, %v3317
    %v3382 = vadd.f32 %v3250, %v3318
    %v3383 = vadd.f32 %v3251, %v3319
    %v3384 = vadd.f32 %v3252, %v3320
    %v3385 = vadd.f32 %v3253, %v3321
    %v3386 = vadd.f32 %v3254, %v3322
    %v3387 = vadd.f32 %v3255, %v3323
    %v3388 = vadd.f32 %v3256, %v3324
    %v3389 = vadd.f32 %v3257, %v3325
    %v3390 = vadd.f32 %v3258, %v3326
    %v3391 = vadd.f32 %v3259, %v3327
    %v3392 = vadd.f32 %v3260, %v3328
    %v3393 = vadd.f32 %v3261, %v3329
    %v3394 = vadd.f32 %v3262, %v3330
    %v3395 = vadd.f32 %v3263, %v3331
    %v3396 = vadd.f32 %v3264, %v3332
    %v3397 = vadd.f32 %v3265, %v3333
    %v3398 = vadd.f32 %v3266, %v3334
    %v3399 = vadd.f32 %v3267, %v3335
    %v3400 = vadd.f32 %v3268, %v3336
    %v3401 = vadd.f32 %v3269, %v3337
    %v3402 = vadd.f32 %v3270, %v3338
    %v3403 = vadd.f32 %v3271, %v3339
    %v3404 = vadd.f32 %v3272, %v3340
    %v3405 = vadd.f32 %v3273, %v3341
    %v3406 = vadd.f32 %v3274, %v3342
    %v3407 = vadd.f32 %v3275, %v3343
    %v3408 = vadd.f32 %v3276, %v3344
    %v3409 = vadd.f32 %v3277, %v3345
    %v3410 = vadd.f32 %v3278, %v3346
    %v3411 = vadd.f32 %v3279, %v3347
    %v3412 = vadd.f32 %v3280, %v3348
    %v3413 = vadd.f32 %v3281, %v3349
    %v3414 = vadd.f32 %v3282, %v3350
    %v3415 = vadd.f32 %v3283, %v3351
    %v3416 = vadd.f32 %v3284, %v3352
    %v3417 = vadd.f32 %v3285, %v3353
    %v3418 = vadd.f32 %v3286, %v3354
    %v3419 = vadd.f32 %v3287, %v3355
    %v3420 = vadd.f32 %v3288, %v3356
    %v3421 = vadd.f32 %v3289, %v3357
    %v3422 = vadd.f32 %v3290, %v3358
    %v3423 = vadd.f32 %v3291, %v3359
    %v3424 = vadd.f32 %v3292, %v3360
    %v3425 = vadd.f32 %v3293, %v3361
    %v3426 = vadd.f32 %v3294, %v3362
    %v3427 = vadd.f32 %v3295, %v3363
    %v3428 = vadd.f32 %v2960, %v3364
    %v3429 = vadd.f32 %v2961, %v3365
    %v3430 = vadd.f32 %v2962, %v3366
    %v3431 = vadd.f32 %v2963, %v3367
    %v3432 = vadd.f32 %v2964, %v3368
    %v3433 = vadd.f32 %v2965, %v3369
    %v3434 = vadd.f32 %v2966, %v3370
    %v3435 = vadd.f32 %v2967, %v3371
    %v3436 = vadd.f32 %v2968, %v3372
    %v3437 = vadd.f32 %v2969, %v3373
    %v3438 = vadd.f32 %v2970, %v3374
    %v3439 = vadd.f32 %v2971, %v3375
    %v3440 = vadd.f32 %v2972, %v3376
    %v3441 = vadd.f32 %v2973, %v3377
    %v3442 = vadd.f32 %v2974, %v3378
    %v3443 = vadd.f32 %v2975, %v3379
    %v3444 = vadd.f32 %v2976, %v3380
    %v3445 = vadd.f32 %v2977, %v3381
    %v3446 = vadd.f32 %v2978, %v3382
    %v3447 = vadd.f32 %v2979, %v3383
    %v3448 = vadd.f32 %v2980, %v3384
    %v3449 = vadd.f32 %v2981, %v3385
    %v3450 = vadd.f32 %v2982, %v3386
    %v3451 = vadd.f32 %v2983, %v3387
    %v3452 = vadd.f32 %v2984, %v3388
    %v3453 = vadd.f32 %v2985, %v3389
    %v3454 = vadd.f32 %v2986, %v3390
    %v3455 = vadd.f32 %v2987, %v3391
    %v3456 = vadd.f32 %v2988, %v3392
    %v3457 = vadd.f32 %v2989, %v3393
    %v3458 = vadd.f32 %v2990, %v3394
    %v3459 = vadd.f32 %v2991, %v3395
    %v3460 = vadd.f32 %v2992, %v3396
    %v3461 = vadd.f32 %v2993, %v3397
    %v3462 = vadd.f32 %v2994, %v3398
    %v3463 = vadd.f32 %v2995, %v3399
    %v3464 = vadd.f32 %v2996, %v3400
    %v3465 = vadd.f32 %v2997, %v3401
    %v3466 = vadd.f32 %v2998, %v3402
    %v3467 = vadd.f32 %v2999, %v3403
    %v3468 = vadd.f32 %v3000, %v3404
    %v3469 = vadd.f32 %v3001, %v3405
    %v3470 = vadd.f32 %v3002, %v3406
    %v3471 = vadd.f32 %v3003, %v3407
    %v3472 = vadd.f32 %v3004, %v3408
    %v3473 = vadd.f32 %v3005, %v3409
    %v3474 = vadd.f32 %v3006, %v3410
    %v3475 = vadd.f32 %v3007, %v3411
    %v3476 = vadd.f32 %v3008, %v3412
    %v3477 = vadd.f32 %v3009, %v3413
    %v3478 = vadd.f32 %v3010, %v3414
    %v3479 = vadd.f32 %v3011, %v3415
    %v3480 = vadd.f32 %v3012, %v3416
    %v3481 = vadd.f32 %v3013, %v3417
    %v3482 = vadd.f32 %v3014, %v3418
    %v3483 = vadd.f32 %v3015, %v3419
    %v3484 = vadd.f32 %v3016, %v3420
    %v3485 = vadd.f32 %v3017, %v3421
    %v3486 = vadd.f32 %v3018, %v3422
    %v3487 = vadd.f32 %v3019, %v3423
    %v3488 = vadd.f32 %v3020, %v3424
    %v3489 = vadd.f32 %v3021, %v3425
    %v3490 = vadd.f32 %v3022, %v3426
    %v3491 = vadd.f32 %v3023, %v3427
    %v3492 = vld [vmem:[#allocation2 + $0x2] sm:$0xff]
    %v3493 = vld [vmem:[#allocation2 + $0xa] sm:$0xff]
    %v3494 = vld [vmem:[#allocation2 + $0x1a] sm:$0xff]
    %v3495 = vld [vmem:[#allocation2 + $0x22] sm:$0xff]
    %v3496 = vld [vmem:[#allocation2 + $0x32] sm:$0xff]
    %v3497 = vld [vmem:[#allocation2 + $0x3a] sm:$0xff]
    %v3498 = vld [vmem:[#allocation2 + $0x4a] sm:$0xff]
    %v3499 = vld [vmem:[#allocation2 + $0x52] sm:$0xff]
    %v3500 = vld [vmem:[#allocation2 + $0x62] sm:$0xff]
    %v3501 = vld [vmem:[#allocation2 + $0x6a] sm:$0xff]
    %v3502 = vld [vmem:[#allocation2 + $0x7a] sm:$0xff]
    %v3503 = vld [vmem:[#allocation2 + $0x82] sm:$0xff]
    %v3504 = vld [vmem:[#allocation2 + $0x92] sm:$0xff]
    %v3505 = vld [vmem:[#allocation2 + $0x9a] sm:$0xff]
    %v3506 = vld [vmem:[#allocation2 + $0xaa] sm:$0xff]
    %v3507 = vld [vmem:[#allocation2 + $0xb2] sm:$0xff]
    %v3508 = vld [vmem:[#allocation2 + $0xc2] sm:$0xff]
    %v3509 = vld [vmem:[#allocation2 + $0xca] sm:$0xff]
    %v3510 = vld [vmem:[#allocation2 + $0xda] sm:$0xff]
    %v3511 = vld [vmem:[#allocation2 + $0xe2] sm:$0xff]
    %v3512 = vld [vmem:[#allocation2 + $0xf2] sm:$0xff]
    %v3513 = vld [vmem:[#allocation2 + $0xfa] sm:$0xff]
    %v3514 = vld [vmem:[#allocation2 + $0x10a] sm:$0xff]
    %v3515 = vld [vmem:[#allocation2 + $0x112] sm:$0xff]
    %v3516 = vld [vmem:[#allocation2 + $0x122] sm:$0xff]
    %v3517 = vld [vmem:[#allocation2 + $0x12a] sm:$0xff]
    %v3518 = vld [vmem:[#allocation2 + $0x13a] sm:$0xff]
    %v3519 = vld [vmem:[#allocation2 + $0x142] sm:$0xff]
    %v3520 = vld [vmem:[#allocation2 + $0x152] sm:$0xff]
    %v3521 = vld [vmem:[#allocation2 + $0x15a] sm:$0xff]
    %v3522 = vld [vmem:[#allocation2 + $0x16a] sm:$0xff]
    %v3523 = vld [vmem:[#allocation2 + $0x172] sm:$0xff]
    %v3524 = vld [vmem:[#allocation2 + $0x182] sm:$0xff]
    %v3525 = vld [vmem:[#allocation2 + $0x18a] sm:$0xff]
    %v3526 = vld [vmem:[#allocation2 + $0x19a] sm:$0xff]
    %v3527 = vld [vmem:[#allocation2 + $0x1a2] sm:$0xff]
    %v3528 = vld [vmem:[#allocation2 + $0x1b2] sm:$0xff]
    %v3529 = vld [vmem:[#allocation2 + $0x1ba] sm:$0xff]
    %v3530 = vld [vmem:[#allocation2 + $0x1ca] sm:$0xff]
    %v3531 = vld [vmem:[#allocation2 + $0x1d2] sm:$0xff]
    %v3532 = vld [vmem:[#allocation2 + $0x1e2] sm:$0xff]
    %v3533 = vld [vmem:[#allocation2 + $0x1ea] sm:$0xff]
    %v3534 = vld [vmem:[#allocation2 + $0x1fa] sm:$0xff]
    %v3535 = vld [vmem:[#allocation2 + $0x202] sm:$0xff]
    %v3536 = vld [vmem:[#allocation2 + $0x212] sm:$0xff]
    %v3537 = vld [vmem:[#allocation2 + $0x21a] sm:$0xff]
    %v3538 = vld [vmem:[#allocation2 + $0x22a] sm:$0xff]
    %v3539 = vld [vmem:[#allocation2 + $0x232] sm:$0xff]
    %v3540 = vld [vmem:[#allocation2 + $0x242] sm:$0xff]
    %v3541 = vld [vmem:[#allocation2 + $0x24a] sm:$0xff]
    %v3542 = vld [vmem:[#allocation2 + $0x25a] sm:$0xff]
    %v3543 = vld [vmem:[#allocation2 + $0x262] sm:$0xff]
    %v3544 = vld [vmem:[#allocation2 + $0x272] sm:$0xff]
    %v3545 = vld [vmem:[#allocation2 + $0x27a] sm:$0xff]
    %v3546 = vld [vmem:[#allocation2 + $0x28a] sm:$0xff]
    %v3547 = vld [vmem:[#allocation2 + $0x292] sm:$0xff]
    %v3548 = vld [vmem:[#allocation2 + $0x2a2] sm:$0xff]
    %v3549 = vld [vmem:[#allocation2 + $0x2aa] sm:$0xff]
    %v3550 = vld [vmem:[#allocation2 + $0x2ba] sm:$0xff]
    %v3551 = vld [vmem:[#allocation2 + $0x2c2] sm:$0xff]
    %v3552 = vld [vmem:[#allocation2 + $0x2d2] sm:$0xff]
    %v3553 = vld [vmem:[#allocation2 + $0x2da] sm:$0xff]
    %v3554 = vld [vmem:[#allocation2 + $0x2ea] sm:$0xff]
    %v3555 = vld [vmem:[#allocation2 + $0x2f2] sm:$0xff]
    %v3556 = vld [vmem:[#allocation2 + $0x302] sm:$0xff]
    %v3557 = vld [vmem:[#allocation2 + $0x30a] sm:$0xff]
    %v3558 = vld [vmem:[#allocation2 + $0x31a] sm:$0xff]
    %v3559 = vld [vmem:[#allocation2 + $0x322] sm:$0xff]
    %v3560 = vld [vmem:[#allocation2 + $0x332] sm:$0xff]
    %v3561 = vld [vmem:[#allocation2 + $0x33a] sm:$0xff]
    %v3562 = vld [vmem:[#allocation2 + $0x34a] sm:$0xff]
    %v3563 = vld [vmem:[#allocation2 + $0x352] sm:$0xff]
    %v3564 = vlaneseq
    %v3565 = vshrl.u32 %v3564, 7
    %v3566 = vsub.s32 2, %v3565
    %v3567 = vrot.slane %v2618, %v3566
    %v3568 = vmul.f32 %v3492, %v3567
    %v3569 = vmul.f32 %v3493, %v3567
    %v3570 = vmul.f32 %v3494, %v3567
    %v3571 = vmul.f32 %v3495, %v3567
    %v3572 = vmul.f32 %v3496, %v3567
    %v3573 = vmul.f32 %v3497, %v3567
    %v3574 = vmul.f32 %v3498, %v3567
    %v3575 = vmul.f32 %v3499, %v3567
    %v3576 = vmul.f32 %v3500, %v3567
    %v3577 = vmul.f32 %v3501, %v3567
    %v3578 = vmul.f32 %v3502, %v3567
    %v3579 = vmul.f32 %v3503, %v3567
    %v3580 = vmul.f32 %v3504, %v3567
    %v3581 = vmul.f32 %v3505, %v3567
    %v3582 = vmul.f32 %v3506, %v3567
    %v3583 = vmul.f32 %v3507, %v3567
    %v3584 = vmul.f32 %v3508, %v3567
    %v3585 = vmul.f32 %v3509, %v3567
    %v3586 = vmul.f32 %v3510, %v3567
    %v3587 = vmul.f32 %v3511, %v3567
    %v3588 = vmul.f32 %v3512, %v3567
    %v3589 = vmul.f32 %v3513, %v3567
    %v3590 = vmul.f32 %v3514, %v3567
    %v3591 = vmul.f32 %v3515, %v3567
    %v3592 = vmul.f32 %v3516, %v3567
    %v3593 = vmul.f32 %v3517, %v3567
    %v3594 = vmul.f32 %v3518, %v3567
    %v3595 = vmul.f32 %v3519, %v3567
    %v3596 = vmul.f32 %v3520, %v3567
    %v3597 = vmul.f32 %v3521, %v3567
    %v3598 = vmul.f32 %v3522, %v3567
    %v3599 = vmul.f32 %v3523, %v3567
    %v3600 = vmul.f32 %v3528, %v3567
    %v3601 = vmul.f32 %v3529, %v3567
    %v3602 = vmul.f32 %v3530, %v3567
    %v3603 = vmul.f32 %v3531, %v3567
    %v3604 = vmul.f32 %v3532, %v3567
    %v3605 = vmul.f32 %v3533, %v3567
    %v3606 = vmul.f32 %v3534, %v3567
    %v3607 = vmul.f32 %v3535, %v3567
    %v3608 = vmul.f32 %v3536, %v3567
    %v3609 = vmul.f32 %v3537, %v3567
    %v3610 = vmul.f32 %v3538, %v3567
    %v3611 = vmul.f32 %v3539, %v3567
    %v3612 = vmul.f32 %v3540, %v3567
    %v3613 = vmul.f32 %v3541, %v3567
    %v3614 = vmul.f32 %v3542, %v3567
    %v3615 = vmul.f32 %v3543, %v3567
    %v3616 = vmul.f32 %v3544, %v3567
    %v3617 = vmul.f32 %v3545, %v3567
    %v3618 = vmul.f32 %v3546, %v3567
    %v3619 = vmul.f32 %v3547, %v3567
    %v3620 = vmul.f32 %v3548, %v3567
    %v3621 = vmul.f32 %v3549, %v3567
    %v3622 = vmul.f32 %v3550, %v3567
    %v3623 = vmul.f32 %v3551, %v3567
    %v3624 = vmul.f32 %v3552, %v3567
    %v3625 = vmul.f32 %v3553, %v3567
    %v3626 = vmul.f32 %v3554, %v3567
    %v3627 = vmul.f32 %v3555, %v3567
    %v3628 = vmul.f32 %v3556, %v3567
    %v3629 = vmul.f32 %v3557, %v3567
    %v3630 = vmul.f32 %v3558, %v3567
    %v3631 = vmul.f32 %v3559, %v3567
    %v3632 = vlaneseq
    %v3633 = vshrl.u32 %v3632, 7
    %v3634 = vsub.s32 5, %v3633
    %v3635 = vrot.slane %v2618, %v3634
    %v3636 = vmul.f32 %v3494, %v3635
    %v3637 = vmul.f32 %v3495, %v3635
    %v3638 = vmul.f32 %v3496, %v3635
    %v3639 = vmul.f32 %v3497, %v3635
    %v3640 = vmul.f32 %v3498, %v3635
    %v3641 = vmul.f32 %v3499, %v3635
    %v3642 = vmul.f32 %v3500, %v3635
    %v3643 = vmul.f32 %v3501, %v3635
    %v3644 = vmul.f32 %v3502, %v3635
    %v3645 = vmul.f32 %v3503, %v3635
    %v3646 = vmul.f32 %v3504, %v3635
    %v3647 = vmul.f32 %v3505, %v3635
    %v3648 = vmul.f32 %v3506, %v3635
    %v3649 = vmul.f32 %v3507, %v3635
    %v3650 = vmul.f32 %v3508, %v3635
    %v3651 = vmul.f32 %v3509, %v3635
    %v3652 = vmul.f32 %v3510, %v3635
    %v3653 = vmul.f32 %v3511, %v3635
    %v3654 = vmul.f32 %v3512, %v3635
    %v3655 = vmul.f32 %v3513, %v3635
    %v3656 = vmul.f32 %v3514, %v3635
    %v3657 = vmul.f32 %v3515, %v3635
    %v3658 = vmul.f32 %v3516, %v3635
    %v3659 = vmul.f32 %v3517, %v3635
    %v3660 = vmul.f32 %v3518, %v3635
    %v3661 = vmul.f32 %v3519, %v3635
    %v3662 = vmul.f32 %v3520, %v3635
    %v3663 = vmul.f32 %v3521, %v3635
    %v3664 = vmul.f32 %v3522, %v3635
    %v3665 = vmul.f32 %v3523, %v3635
    %v3666 = vmul.f32 %v3524, %v3635
    %v3667 = vmul.f32 %v3525, %v3635
    %v3668 = vmul.f32 %v3530, %v3635
    %v3669 = vmul.f32 %v3531, %v3635
    %v3670 = vmul.f32 %v3532, %v3635
    %v3671 = vmul.f32 %v3533, %v3635
    %v3672 = vmul.f32 %v3534, %v3635
    %v3673 = vmul.f32 %v3535, %v3635
    %v3674 = vmul.f32 %v3536, %v3635
    %v3675 = vmul.f32 %v3537, %v3635
    %v3676 = vmul.f32 %v3538, %v3635
    %v3677 = vmul.f32 %v3539, %v3635
    %v3678 = vmul.f32 %v3540, %v3635
    %v3679 = vmul.f32 %v3541, %v3635
    %v3680 = vmul.f32 %v3542, %v3635
    %v3681 = vmul.f32 %v3543, %v3635
    %v3682 = vmul.f32 %v3544, %v3635
    %v3683 = vmul.f32 %v3545, %v3635
    %v3684 = vmul.f32 %v3546, %v3635
    %v3685 = vmul.f32 %v3547, %v3635
    %v3686 = vmul.f32 %v3548, %v3635
    %v3687 = vmul.f32 %v3549, %v3635
    %v3688 = vmul.f32 %v3550, %v3635
    %v3689 = vmul.f32 %v3551, %v3635
    %v3690 = vmul.f32 %v3552, %v3635
    %v3691 = vmul.f32 %v3553, %v3635
    %v3692 = vmul.f32 %v3554, %v3635
    %v3693 = vmul.f32 %v3555, %v3635
    %v3694 = vmul.f32 %v3556, %v3635
    %v3695 = vmul.f32 %v3557, %v3635
    %v3696 = vmul.f32 %v3558, %v3635
    %v3697 = vmul.f32 %v3559, %v3635
    %v3698 = vmul.f32 %v3560, %v3635
    %v3699 = vmul.f32 %v3561, %v3635
    %v3700 = vadd.f32 %v3568, %v3636
    %v3701 = vadd.f32 %v3569, %v3637
    %v3702 = vadd.f32 %v3570, %v3638
    %v3703 = vadd.f32 %v3571, %v3639
    %v3704 = vadd.f32 %v3572, %v3640
    %v3705 = vadd.f32 %v3573, %v3641
    %v3706 = vadd.f32 %v3574, %v3642
    %v3707 = vadd.f32 %v3575, %v3643
    %v3708 = vadd.f32 %v3576, %v3644
    %v3709 = vadd.f32 %v3577, %v3645
    %v3710 = vadd.f32 %v3578, %v3646
    %v3711 = vadd.f32 %v3579, %v3647
    %v3712 = vadd.f32 %v3580, %v3648
    %v3713 = vadd.f32 %v3581, %v3649
    %v3714 = vadd.f32 %v3582, %v3650
    %v3715 = vadd.f32 %v3583, %v3651
    %v3716 = vadd.f32 %v3584, %v3652
    %v3717 = vadd.f32 %v3585, %v3653
    %v3718 = vadd.f32 %v3586, %v3654
    %v3719 = vadd.f32 %v3587, %v3655
    %v3720 = vadd.f32 %v3588, %v3656
    %v3721 = vadd.f32 %v3589, %v3657
    %v3722 = vadd.f32 %v3590, %v3658
    %v3723 = vadd.f32 %v3591, %v3659
    %v3724 = vadd.f32 %v3592, %v3660
    %v3725 = vadd.f32 %v3593, %v3661
    %v3726 = vadd.f32 %v3594, %v3662
    %v3727 = vadd.f32 %v3595, %v3663
    %v3728 = vadd.f32 %v3596, %v3664
    %v3729 = vadd.f32 %v3597, %v3665
    %v3730 = vadd.f32 %v3598, %v3666
    %v3731 = vadd.f32 %v3599, %v3667
    %v3732 = vadd.f32 %v3600, %v3668
    %v3733 = vadd.f32 %v3601, %v3669
    %v3734 = vadd.f32 %v3602, %v3670
    %v3735 = vadd.f32 %v3603, %v3671
    %v3736 = vadd.f32 %v3604, %v3672
    %v3737 = vadd.f32 %v3605, %v3673
    %v3738 = vadd.f32 %v3606, %v3674
    %v3739 = vadd.f32 %v3607, %v3675
    %v3740 = vadd.f32 %v3608, %v3676
    %v3741 = vadd.f32 %v3609, %v3677
    %v3742 = vadd.f32 %v3610, %v3678
    %v3743 = vadd.f32 %v3611, %v3679
    %v3744 = vadd.f32 %v3612, %v3680
    %v3745 = vadd.f32 %v3613, %v3681
    %v3746 = vadd.f32 %v3614, %v3682
    %v3747 = vadd.f32 %v3615, %v3683
    %v3748 = vadd.f32 %v3616, %v3684
    %v3749 = vadd.f32 %v3617, %v3685
    %v3750 = vadd.f32 %v3618, %v3686
    %v3751 = vadd.f32 %v3619, %v3687
    %v3752 = vadd.f32 %v3620, %v3688
    %v3753 = vadd.f32 %v3621, %v3689
    %v3754 = vadd.f32 %v3622, %v3690
    %v3755 = vadd.f32 %v3623, %v3691
    %v3756 = vadd.f32 %v3624, %v3692
    %v3757 = vadd.f32 %v3625, %v3693
    %v3758 = vadd.f32 %v3626, %v3694
    %v3759 = vadd.f32 %v3627, %v3695
    %v3760 = vadd.f32 %v3628, %v3696
    %v3761 = vadd.f32 %v3629, %v3697
    %v3762 = vadd.f32 %v3630, %v3698
    %v3763 = vadd.f32 %v3631, %v3699
    %v3764 = vlaneseq
    %v3765 = vshrl.u32 %v3764, 7
    %v3766 = vsub.s32 0, %v3765
    %v3767 = vrot.slane %v2619, %v3766
    %v3768 = vmul.f32 %v3496, %v3767
    %v3769 = vmul.f32 %v3497, %v3767
    %v3770 = vmul.f32 %v3498, %v3767
    %v3771 = vmul.f32 %v3499, %v3767
    %v3772 = vmul.f32 %v3500, %v3767
    %v3773 = vmul.f32 %v3501, %v3767
    %v3774 = vmul.f32 %v3502, %v3767
    %v3775 = vmul.f32 %v3503, %v3767
    %v3776 = vmul.f32 %v3504, %v3767
    %v3777 = vmul.f32 %v3505, %v3767
    %v3778 = vmul.f32 %v3506, %v3767
    %v3779 = vmul.f32 %v3507, %v3767
    %v3780 = vmul.f32 %v3508, %v3767
    %v3781 = vmul.f32 %v3509, %v3767
    %v3782 = vmul.f32 %v3510, %v3767
    %v3783 = vmul.f32 %v3511, %v3767
    %v3784 = vmul.f32 %v3512, %v3767
    %v3785 = vmul.f32 %v3513, %v3767
    %v3786 = vmul.f32 %v3514, %v3767
    %v3787 = vmul.f32 %v3515, %v3767
    %v3788 = vmul.f32 %v3516, %v3767
    %v3789 = vmul.f32 %v3517, %v3767
    %v3790 = vmul.f32 %v3518, %v3767
    %v3791 = vmul.f32 %v3519, %v3767
    %v3792 = vmul.f32 %v3520, %v3767
    %v3793 = vmul.f32 %v3521, %v3767
    %v3794 = vmul.f32 %v3522, %v3767
    %v3795 = vmul.f32 %v3523, %v3767
    %v3796 = vmul.f32 %v3524, %v3767
    %v3797 = vmul.f32 %v3525, %v3767
    %v3798 = vmul.f32 %v3526, %v3767
    %v3799 = vmul.f32 %v3527, %v3767
    %v3800 = vmul.f32 %v3532, %v3767
    %v3801 = vmul.f32 %v3533, %v3767
    %v3802 = vmul.f32 %v3534, %v3767
    %v3803 = vmul.f32 %v3535, %v3767
    %v3804 = vmul.f32 %v3536, %v3767
    %v3805 = vmul.f32 %v3537, %v3767
    %v3806 = vmul.f32 %v3538, %v3767
    %v3807 = vmul.f32 %v3539, %v3767
    %v3808 = vmul.f32 %v3540, %v3767
    %v3809 = vmul.f32 %v3541, %v3767
    %v3810 = vmul.f32 %v3542, %v3767
    %v3811 = vmul.f32 %v3543, %v3767
    %v3812 = vmul.f32 %v3544, %v3767
    %v3813 = vmul.f32 %v3545, %v3767
    %v3814 = vmul.f32 %v3546, %v3767
    %v3815 = vmul.f32 %v3547, %v3767
    %v3816 = vmul.f32 %v3548, %v3767
    %v3817 = vmul.f32 %v3549, %v3767
    %v3818 = vmul.f32 %v3550, %v3767
    %v3819 = vmul.f32 %v3551, %v3767
    %v3820 = vmul.f32 %v3552, %v3767
    %v3821 = vmul.f32 %v3553, %v3767
    %v3822 = vmul.f32 %v3554, %v3767
    %v3823 = vmul.f32 %v3555, %v3767
    %v3824 = vmul.f32 %v3556, %v3767
    %v3825 = vmul.f32 %v3557, %v3767
    %v3826 = vmul.f32 %v3558, %v3767
    %v3827 = vmul.f32 %v3559, %v3767
    %v3828 = vmul.f32 %v3560, %v3767
    %v3829 = vmul.f32 %v3561, %v3767
    %v3830 = vmul.f32 %v3562, %v3767
    %v3831 = vmul.f32 %v3563, %v3767
    %v3832 = vadd.f32 %v3700, %v3768
    %v3833 = vadd.f32 %v3701, %v3769
    %v3834 = vadd.f32 %v3702, %v3770
    %v3835 = vadd.f32 %v3703, %v3771
    %v3836 = vadd.f32 %v3704, %v3772
    %v3837 = vadd.f32 %v3705, %v3773
    %v3838 = vadd.f32 %v3706, %v3774
    %v3839 = vadd.f32 %v3707, %v3775
    %v3840 = vadd.f32 %v3708, %v3776
    %v3841 = vadd.f32 %v3709, %v3777
    %v3842 = vadd.f32 %v3710, %v3778
    %v3843 = vadd.f32 %v3711, %v3779
    %v3844 = vadd.f32 %v3712, %v3780
    %v3845 = vadd.f32 %v3713, %v3781
    %v3846 = vadd.f32 %v3714, %v3782
    %v3847 = vadd.f32 %v3715, %v3783
    %v3848 = vadd.f32 %v3716, %v3784
    %v3849 = vadd.f32 %v3717, %v3785
    %v3850 = vadd.f32 %v3718, %v3786
    %v3851 = vadd.f32 %v3719, %v3787
    %v3852 = vadd.f32 %v3720, %v3788
    %v3853 = vadd.f32 %v3721, %v3789
    %v3854 = vadd.f32 %v3722, %v3790
    %v3855 = vadd.f32 %v3723, %v3791
    %v3856 = vadd.f32 %v3724, %v3792
    %v3857 = vadd.f32 %v3725, %v3793
    %v3858 = vadd.f32 %v3726, %v3794
    %v3859 = vadd.f32 %v3727, %v3795
    %v3860 = vadd.f32 %v3728, %v3796
    %v3861 = vadd.f32 %v3729, %v3797
    %v3862 = vadd.f32 %v3730, %v3798
    %v3863 = vadd.f32 %v3731, %v3799
    %v3864 = vadd.f32 %v3732, %v3800
    %v3865 = vadd.f32 %v3733, %v3801
    %v3866 = vadd.f32 %v3734, %v3802
    %v3867 = vadd.f32 %v3735, %v3803
    %v3868 = vadd.f32 %v3736, %v3804
    %v3869 = vadd.f32 %v3737, %v3805
    %v3870 = vadd.f32 %v3738, %v3806
    %v3871 = vadd.f32 %v3739, %v3807
    %v3872 = vadd.f32 %v3740, %v3808
    %v3873 = vadd.f32 %v3741, %v3809
    %v3874 = vadd.f32 %v3742, %v3810
    %v3875 = vadd.f32 %v3743, %v3811
    %v3876 = vadd.f32 %v3744, %v3812
    %v3877 = vadd.f32 %v3745, %v3813
    %v3878 = vadd.f32 %v3746, %v3814
    %v3879 = vadd.f32 %v3747, %v3815
    %v3880 = vadd.f32 %v3748, %v3816
    %v3881 = vadd.f32 %v3749, %v3817
    %v3882 = vadd.f32 %v3750, %v3818
    %v3883 = vadd.f32 %v3751, %v3819
    %v3884 = vadd.f32 %v3752, %v3820
    %v3885 = vadd.f32 %v3753, %v3821
    %v3886 = vadd.f32 %v3754, %v3822
    %v3887 = vadd.f32 %v3755, %v3823
    %v3888 = vadd.f32 %v3756, %v3824
    %v3889 = vadd.f32 %v3757, %v3825
    %v3890 = vadd.f32 %v3758, %v3826
    %v3891 = vadd.f32 %v3759, %v3827
    %v3892 = vadd.f32 %v3760, %v3828
    %v3893 = vadd.f32 %v3761, %v3829
    %v3894 = vadd.f32 %v3762, %v3830
    %v3895 = vadd.f32 %v3763, %v3831
    %v3896 = vadd.f32 %v3428, %v3832
    %v3897 = vadd.f32 %v3429, %v3833
    %v3898 = vadd.f32 %v3430, %v3834
    %v3899 = vadd.f32 %v3431, %v3835
    %v3900 = vadd.f32 %v3432, %v3836
    %v3901 = vadd.f32 %v3433, %v3837
    %v3902 = vadd.f32 %v3434, %v3838
    %v3903 = vadd.f32 %v3435, %v3839
    %v3904 = vadd.f32 %v3436, %v3840
    %v3905 = vadd.f32 %v3437, %v3841
    %v3906 = vadd.f32 %v3438, %v3842
    %v3907 = vadd.f32 %v3439, %v3843
    %v3908 = vadd.f32 %v3440, %v3844
    %v3909 = vadd.f32 %v3441, %v3845
    %v3910 = vadd.f32 %v3442, %v3846
    %v3911 = vadd.f32 %v3443, %v3847
    %v3912 = vadd.f32 %v3444, %v3848
    %v3913 = vadd.f32 %v3445, %v3849
    %v3914 = vadd.f32 %v3446, %v3850
    %v3915 = vadd.f32 %v3447, %v3851
    %v3916 = vadd.f32 %v3448, %v3852
    %v3917 = vadd.f32 %v3449, %v3853
    %v3918 = vadd.f32 %v3450, %v3854
    %v3919 = vadd.f32 %v3451, %v3855
    %v3920 = vadd.f32 %v3452, %v3856
    %v3921 = vadd.f32 %v3453, %v3857
    %v3922 = vadd.f32 %v3454, %v3858
    %v3923 = vadd.f32 %v3455, %v3859
    %v3924 = vadd.f32 %v3456, %v3860
    %v3925 = vadd.f32 %v3457, %v3861
    %v3926 = vadd.f32 %v3458, %v3862
    %v3927 = vadd.f32 %v3459, %v3863
    %v3928 = vadd.f32 %v3460, %v3864
    %v3929 = vadd.f32 %v3461, %v3865
    %v3930 = vadd.f32 %v3462, %v3866
    %v3931 = vadd.f32 %v3463, %v3867
    %v3932 = vadd.f32 %v3464, %v3868
    %v3933 = vadd.f32 %v3465, %v3869
    %v3934 = vadd.f32 %v3466, %v3870
    %v3935 = vadd.f32 %v3467, %v3871
    %v3936 = vadd.f32 %v3468, %v3872
    %v3937 = vadd.f32 %v3469, %v3873
    %v3938 = vadd.f32 %v3470, %v3874
    %v3939 = vadd.f32 %v3471, %v3875
    %v3940 = vadd.f32 %v3472, %v3876
    %v3941 = vadd.f32 %v3473, %v3877
    %v3942 = vadd.f32 %v3474, %v3878
    %v3943 = vadd.f32 %v3475, %v3879
    %v3944 = vadd.f32 %v3476, %v3880
    %v3945 = vadd.f32 %v3477, %v3881
    %v3946 = vadd.f32 %v3478, %v3882
    %v3947 = vadd.f32 %v3479, %v3883
    %v3948 = vadd.f32 %v3480, %v3884
    %v3949 = vadd.f32 %v3481, %v3885
    %v3950 = vadd.f32 %v3482, %v3886
    %v3951 = vadd.f32 %v3483, %v3887
    %v3952 = vadd.f32 %v3484, %v3888
    %v3953 = vadd.f32 %v3485, %v3889
    %v3954 = vadd.f32 %v3486, %v3890
    %v3955 = vadd.f32 %v3487, %v3891
    %v3956 = vadd.f32 %v3488, %v3892
    %v3957 = vadd.f32 %v3489, %v3893
    %v3958 = vadd.f32 %v3490, %v3894
    %v3959 = vadd.f32 %v3491, %v3895
    %v3960 = vld [vmem:[%s6] sm:$0x1]
    %v3962 = vlaneseq
    %v3963 = vshrl.u32 %v3962, 7
    %v3964 = vsub.s32 0, %v3963
    %v3965 = vrot.slane %v3960, %v3964
    %v3967 = vadd.f32 %v3896, %v3965
    %v3968 = vadd.f32 %v3897, %v3965
    %v3969 = vadd.f32 %v3898, %v3965
    %v3970 = vadd.f32 %v3899, %v3965
    %v3971 = vadd.f32 %v3900, %v3965
    %v3972 = vadd.f32 %v3901, %v3965
    %v3973 = vadd.f32 %v3902, %v3965
    %v3974 = vadd.f32 %v3903, %v3965
    %v3975 = vadd.f32 %v3904, %v3965
    %v3976 = vadd.f32 %v3905, %v3965
    %v3977 = vadd.f32 %v3906, %v3965
    %v3978 = vadd.f32 %v3907, %v3965
    %v3979 = vadd.f32 %v3908, %v3965
    %v3980 = vadd.f32 %v3909, %v3965
    %v3981 = vadd.f32 %v3910, %v3965
    %v3982 = vadd.f32 %v3911, %v3965
    %v3983 = vadd.f32 %v3912, %v3965
    %v3984 = vadd.f32 %v3913, %v3965
    %v3985 = vadd.f32 %v3914, %v3965
    %v3986 = vadd.f32 %v3915, %v3965
    %v3987 = vadd.f32 %v3916, %v3965
    %v3988 = vadd.f32 %v3917, %v3965
    %v3989 = vadd.f32 %v3918, %v3965
    %v3990 = vadd.f32 %v3919, %v3965
    %v3991 = vadd.f32 %v3920, %v3965
    %v3992 = vadd.f32 %v3921, %v3965
    %v3993 = vadd.f32 %v3922, %v3965
    %v3994 = vadd.f32 %v3923, %v3965
    %v3995 = vadd.f32 %v3924, %v3965
    %v3996 = vadd.f32 %v3925, %v3965
    %v3997 = vadd.f32 %v3926, %v3965
    %v3998 = vadd.f32 %v3927, %v3965
    %v3999 = vadd.f32 %v3928, %v3965
    %v4000 = vadd.f32 %v3929, %v3965
    %v4001 = vadd.f32 %v3930, %v3965
    %v4002 = vadd.f32 %v3931, %v3965
    %v4003 = vadd.f32 %v3932, %v3965
    %v4004 = vadd.f32 %v3933, %v3965
    %v4005 = vadd.f32 %v3934, %v3965
    %v4006 = vadd.f32 %v3935, %v3965
    %v4007 = vadd.f32 %v3936, %v3965
    %v4008 = vadd.f32 %v3937, %v3965
    %v4009 = vadd.f32 %v3938, %v3965
    %v4010 = vadd.f32 %v3939, %v3965
    %v4011 = vadd.f32 %v3940, %v3965
    %v4012 = vadd.f32 %v3941, %v3965
    %v4013 = vadd.f32 %v3942, %v3965
    %v4014 = vadd.f32 %v3943, %v3965
    %v4015 = vadd.f32 %v3944, %v3965
    %v4016 = vadd.f32 %v3945, %v3965
    %v4017 = vadd.f32 %v3946, %v3965
    %v4018 = vadd.f32 %v3947, %v3965
    %v4019 = vadd.f32 %v3948, %v3965
    %v4020 = vadd.f32 %v3949, %v3965
    %v4021 = vadd.f32 %v3950, %v3965
    %v4022 = vadd.f32 %v3951, %v3965
    %v4023 = vadd.f32 %v3952, %v3965
    %v4024 = vadd.f32 %v3953, %v3965
    %v4025 = vadd.f32 %v3954, %v3965
    %v4026 = vadd.f32 %v3955, %v3965
    %v4027 = vadd.f32 %v3956, %v3965
    %v4028 = vadd.f32 %v3957, %v3965
    %v4029 = vadd.f32 %v3958, %v3965
    %v4030 = vadd.f32 %v3959, %v3965
    %v4031 = vmax.f32 %v3967, 0.0
    %v4032 = vmax.f32 %v3968, 0.0
    %v4033 = vmax.f32 %v3969, 0.0
    %v4034 = vmax.f32 %v3970, 0.0
    %v4035 = vmax.f32 %v3971, 0.0
    %v4036 = vmax.f32 %v3972, 0.0
    %v4037 = vmax.f32 %v3973, 0.0
    %v4038 = vmax.f32 %v3974, 0.0
    %v4039 = vmax.f32 %v3975, 0.0
    %v4040 = vmax.f32 %v3976, 0.0
    %v4041 = vmax.f32 %v3977, 0.0
    %v4042 = vmax.f32 %v3978, 0.0
    %v4043 = vmax.f32 %v3979, 0.0
    %v4044 = vmax.f32 %v3980, 0.0
    %v4045 = vmax.f32 %v3981, 0.0
    %v4046 = vmax.f32 %v3982, 0.0
    %v4047 = vmax.f32 %v3983, 0.0
    %v4048 = vmax.f32 %v3984, 0.0
    %v4049 = vmax.f32 %v3985, 0.0
    %v4050 = vmax.f32 %v3986, 0.0
    %v4051 = vmax.f32 %v3987, 0.0
    %v4052 = vmax.f32 %v3988, 0.0
    %v4053 = vmax.f32 %v3989, 0.0
    %v4054 = vmax.f32 %v3990, 0.0
    %v4055 = vmax.f32 %v3991, 0.0
    %v4056 = vmax.f32 %v3992, 0.0
    %v4057 = vmax.f32 %v3993, 0.0
    %v4058 = vmax.f32 %v3994, 0.0
    %v4059 = vmax.f32 %v3995, 0.0
    %v4060 = vmax.f32 %v3996, 0.0
    %v4061 = vmax.f32 %v3997, 0.0
    %v4062 = vmax.f32 %v3998, 0.0
    %v4063 = vmax.f32 %v3999, 0.0
    %v4064 = vmax.f32 %v4000, 0.0
    %v4065 = vmax.f32 %v4001, 0.0
    %v4066 = vmax.f32 %v4002, 0.0
    %v4067 = vmax.f32 %v4003, 0.0
    %v4068 = vmax.f32 %v4004, 0.0
    %v4069 = vmax.f32 %v4005, 0.0
    %v4070 = vmax.f32 %v4006, 0.0
    %v4071 = vmax.f32 %v4007, 0.0
    %v4072 = vmax.f32 %v4008, 0.0
    %v4073 = vmax.f32 %v4009, 0.0
    %v4074 = vmax.f32 %v4010, 0.0
    %v4075 = vmax.f32 %v4011, 0.0
    %v4076 = vmax.f32 %v4012, 0.0
    %v4077 = vmax.f32 %v4013, 0.0
    %v4078 = vmax.f32 %v4014, 0.0
    %v4079 = vmax.f32 %v4015, 0.0
    %v4080 = vmax.f32 %v4016, 0.0
    %v4081 = vmax.f32 %v4017, 0.0
    %v4082 = vmax.f32 %v4018, 0.0
    %v4083 = vmax.f32 %v4019, 0.0
    %v4084 = vmax.f32 %v4020, 0.0
    %v4085 = vmax.f32 %v4021, 0.0
    %v4086 = vmax.f32 %v4022, 0.0
    %v4087 = vmax.f32 %v4023, 0.0
    %v4088 = vmax.f32 %v4024, 0.0
    %v4089 = vmax.f32 %v4025, 0.0
    %v4090 = vmax.f32 %v4026, 0.0
    %v4091 = vmax.f32 %v4027, 0.0
    %v4092 = vmax.f32 %v4028, 0.0
    %v4093 = vmax.f32 %v4029, 0.0
    %v4094 = vmax.f32 %v4030, 0.0
    %v4095 = vmin.f32 %v4031, 6.0
    %v4096 = vmin.f32 %v4032, 6.0
    %v4097 = vmin.f32 %v4033, 6.0
    %v4098 = vmin.f32 %v4034, 6.0
    %v4099 = vmin.f32 %v4035, 6.0
    %v4100 = vmin.f32 %v4036, 6.0
    %v4101 = vmin.f32 %v4037, 6.0
    %v4102 = vmin.f32 %v4038, 6.0
    %v4103 = vmin.f32 %v4039, 6.0
    %v4104 = vmin.f32 %v4040, 6.0
    %v4105 = vmin.f32 %v4041, 6.0
    %v4106 = vmin.f32 %v4042, 6.0
    %v4107 = vmin.f32 %v4043, 6.0
    %v4108 = vmin.f32 %v4044, 6.0
    %v4109 = vmin.f32 %v4045, 6.0
    %v4110 = vmin.f32 %v4046, 6.0
    %v4111 = vmin.f32 %v4047, 6.0
    %v4112 = vmin.f32 %v4048, 6.0
    %v4113 = vmin.f32 %v4049, 6.0
    %v4114 = vmin.f32 %v4050, 6.0
    %v4115 = vmin.f32 %v4051, 6.0
    %v4116 = vmin.f32 %v4052, 6.0
    %v4117 = vmin.f32 %v4053, 6.0
    %v4118 = vmin.f32 %v4054, 6.0
    %v4119 = vmin.f32 %v4055, 6.0
    %v4120 = vmin.f32 %v4056, 6.0
    %v4121 = vmin.f32 %v4057, 6.0
    %v4122 = vmin.f32 %v4058, 6.0
    %v4123 = vmin.f32 %v4059, 6.0
    %v4124 = vmin.f32 %v4060, 6.0
    %v4125 = vmin.f32 %v4061, 6.0
    %v4126 = vmin.f32 %v4062, 6.0
    %v4127 = vmin.f32 %v4063, 6.0
    %v4128 = vmin.f32 %v4064, 6.0
    %v4129 = vmin.f32 %v4065, 6.0
    %v4130 = vmin.f32 %v4066, 6.0
    %v4131 = vmin.f32 %v4067, 6.0
    %v4132 = vmin.f32 %v4068, 6.0
    %v4133 = vmin.f32 %v4069, 6.0
    %v4134 = vmin.f32 %v4070, 6.0
    %v4135 = vmin.f32 %v4071, 6.0
    %v4136 = vmin.f32 %v4072, 6.0
    %v4137 = vmin.f32 %v4073, 6.0
    %v4138 = vmin.f32 %v4074, 6.0
    %v4139 = vmin.f32 %v4075, 6.0
    %v4140 = vmin.f32 %v4076, 6.0
    %v4141 = vmin.f32 %v4077, 6.0
    %v4142 = vmin.f32 %v4078, 6.0
    %v4143 = vmin.f32 %v4079, 6.0
    %v4144 = vmin.f32 %v4080, 6.0
    %v4145 = vmin.f32 %v4081, 6.0
    %v4146 = vmin.f32 %v4082, 6.0
    %v4147 = vmin.f32 %v4083, 6.0
    %v4148 = vmin.f32 %v4084, 6.0
    %v4149 = vmin.f32 %v4085, 6.0
    %v4150 = vmin.f32 %v4086, 6.0
    %v4151 = vmin.f32 %v4087, 6.0
    %v4152 = vmin.f32 %v4088, 6.0
    %v4153 = vmin.f32 %v4089, 6.0
    %v4154 = vmin.f32 %v4090, 6.0
    %v4155 = vmin.f32 %v4091, 6.0
    %v4156 = vmin.f32 %v4092, 6.0
    %v4157 = vmin.f32 %v4093, 6.0
    %v4158 = vmin.f32 %v4094, 6.0
    %v4159 = vld [vmem:[#allocation9] sm:$0xff]
    %v4160 = vld [vmem:[#allocation9 + $0x8] sm:$0xff]
    %v4161 = vld [vmem:[#allocation9 + $0x10] sm:$0xff]
    %v4162 = vld [vmem:[#allocation9 + $0x18] sm:$0xff]
    %v4163 = vld [vmem:[%s8] sm:$0x1]
    %v4165 = vlaneseq
    %v4166 = vshrl.u32 %v4165, 7
    %v4167 = vsub.s32 0, %v4166
    %v4168 = vrot.slane %v4163, %v4167
    %v4171 = vsel %vm88, %v4095, 0
    %v4174 = vsel %vm88, %v4096, 0
    %v4177 = vsel %vm88, %v4097, 0
    %v4180 = vsel %vm88, %v4098, 0
    %v4183 = vsel %vm88, %v4099, 0
    %v4186 = vsel %vm88, %v4100, 0
    %v4189 = vsel %vm88, %v4101, 0
    %v4192 = vsel %vm88, %v4102, 0
    %v4195 = vsel %vm88, %v4103, 0
    %v4198 = vsel %vm88, %v4104, 0
    %v4201 = vsel %vm88, %v4105, 0
    %v4204 = vsel %vm88, %v4106, 0
    %v4207 = vsel %vm88, %v4107, 0
    %v4210 = vsel %vm88, %v4108, 0
    %v4213 = vsel %vm88, %v4109, 0
    %v4216 = vsel %vm88, %v4110, 0
    %v4219 = vsel %vm88, %v4111, 0
    %v4222 = vsel %vm88, %v4112, 0
    %v4225 = vsel %vm88, %v4113, 0
    %v4228 = vsel %vm88, %v4114, 0
    %v4231 = vsel %vm88, %v4115, 0
    %v4234 = vsel %vm88, %v4116, 0
    %v4237 = vsel %vm88, %v4117, 0
    %v4240 = vsel %vm88, %v4118, 0
    %v4243 = vsel %vm88, %v4119, 0
    %v4246 = vsel %vm88, %v4120, 0
    %v4249 = vsel %vm88, %v4121, 0
    %v4252 = vsel %vm88, %v4122, 0
    %v4255 = vsel %vm88, %v4123, 0
    %v4258 = vsel %vm88, %v4124, 0
    %v4261 = vsel %vm88, %v4125, 0
    %v4264 = vsel %vm88, %v4126, 0
    %v4267 = vsel %vm88, %v4127, 0
    %v4270 = vsel %vm88, %v4128, 0
    %v4273 = vsel %vm88, %v4129, 0
    %v4276 = vsel %vm88, %v4130, 0
    %v4279 = vsel %vm88, %v4131, 0
    %v4282 = vsel %vm88, %v4132, 0
    %v4285 = vsel %vm88, %v4133, 0
    %v4288 = vsel %vm88, %v4134, 0
    %v4291 = vsel %vm88, %v4135, 0
    %v4294 = vsel %vm88, %v4136, 0
    %v4297 = vsel %vm88, %v4137, 0
    %v4300 = vsel %vm88, %v4138, 0
    %v4303 = vsel %vm88, %v4139, 0
    %v4306 = vsel %vm88, %v4140, 0
    %v4309 = vsel %vm88, %v4141, 0
    %v4312 = vsel %vm88, %v4142, 0
    %v4315 = vsel %vm88, %v4143, 0
    %v4318 = vsel %vm88, %v4144, 0
    %v4321 = vsel %vm88, %v4145, 0
    %v4324 = vsel %vm88, %v4146, 0
    %v4327 = vsel %vm88, %v4147, 0
    %v4330 = vsel %vm88, %v4148, 0
    %v4333 = vsel %vm88, %v4149, 0
    %v4336 = vsel %vm88, %v4150, 0
    %v4339 = vsel %vm88, %v4151, 0
    %v4342 = vsel %vm88, %v4152, 0
    %v4345 = vsel %vm88, %v4153, 0
    %v4348 = vsel %vm88, %v4154, 0
    %v4351 = vsel %vm88, %v4155, 0
    %v4354 = vsel %vm88, %v4156, 0
    %v4357 = vsel %vm88, %v4157, 0
    %v4360 = vsel %vm88, %v4158, 0
    %4362 = vmatprep.subr.mxu0 0.0
    %4363 = vmatpush1.msra.mxu0 %v4159
    %4364 = vmatprep.subr.mxu0 0.0
    %4365 = vmatpush1.msra.mxu0 %v4160
    %4366 = vmatprep.subr.mxu0 0.0
    %4367 = vmatpush1.msra.mxu0 %v4161
    %4368 = vmatprep.subr.mxu0 0.0
    %4369 = vmatpush1.msra.mxu0 %v4162
    %4370 = vmatprep.subr.mxu0 0.0
    %4371 = vmatpush1.msra.mxu0 0.0
    %4372 = vmatprep.subr.mxu0 0.0
    %4373 = vmatpush1.msra.mxu0 0.0
    %4374 = vmatprep.subr.mxu0 0.0
    %4375 = vmatpush1.msra.mxu0 0.0
    %4376 = vmatprep.subr.mxu0 0.0
    %4377 = vmatpush1.msra.mxu0 0.0
    %4378 = vmatprep.subr.mxu0 0.0
    %4379 = vmatpush1.msra.mxu0 0.0
    %4380 = vmatprep.subr.mxu0 0.0
    %4381 = vmatpush1.msra.mxu0 0.0
    %4382 = vmatprep.subr.mxu0 0.0
    %4383 = vmatpush1.msra.mxu0 0.0
    %4384 = vmatprep.subr.mxu0 0.0
    %4385 = vmatpush1.msra.mxu0 0.0
    %4386 = vmatprep.subr.mxu0 0.0
    %4387 = vmatpush1.msra.mxu0 0.0
    %4388 = vmatprep.subr.mxu0 0.0
    %4389 = vmatpush1.msra.mxu0 0.0
    %4390 = vmatprep.subr.mxu0 0.0
    %4391 = vmatpush1.msra.mxu0 0.0
    %4392 = vmatprep.subr.mxu0 0.0
    %4393 = vmatpush1.msra.mxu0 0.0
    %4394 = vmatprep.subr.mxu0 0.0
    %4395 = vmatpush1.msra.mxu0 0.0
    %4396 = vmatprep.subr.mxu0 0.0
    %4397 = vmatpush1.msra.mxu0 0.0
    %4398 = vmatprep.subr.mxu0 0.0
    %4399 = vmatpush1.msra.mxu0 0.0
    %4400 = vmatprep.subr.mxu0 0.0
    %4401 = vmatpush1.msra.mxu0 0.0
    %4402 = vmatprep.subr.mxu0 0.0
    %4403 = vmatpush1.msra.mxu0 0.0
    %4404 = vmatprep.subr.mxu0 0.0
    %4405 = vmatpush1.msra.mxu0 0.0
    %4406 = vmatprep.subr.mxu0 0.0
    %4407 = vmatpush1.msra.mxu0 0.0
    %4408 = vmatprep.subr.mxu0 0.0
    %4409 = vmatpush1.msra.mxu0 0.0
    %4410 = vmatprep.subr.mxu0 0.0
    %4411 = vmatpush1.msra.mxu0 0.0
    %4412 = vmatprep.subr.mxu0 0.0
    %4413 = vmatpush1.msra.mxu0 0.0
    %4414 = vmatprep.subr.mxu0 0.0
    %4415 = vmatpush1.msra.mxu0 0.0
    %4416 = vmatprep.subr.mxu0 0.0
    %4417 = vmatpush1.msra.mxu0 0.0
    %4418 = vmatprep.subr.mxu0 0.0
    %4419 = vmatpush1.msra.mxu0 0.0
    %4420 = vmatprep.subr.mxu0 0.0
    %4421 = vmatpush1.msra.mxu0 0.0
    %4422 = vmatprep.subr.mxu0 0.0
    %4423 = vmatpush1.msra.mxu0 0.0
    %4424 = vmatprep.subr.mxu0 0.0
    %4425 = vmatpush1.msra.mxu0 0.0
    %4426 = vmatprep.mubr.f32.mxu0 0.0
    %4427 = vmatmul.mubr.f32.gmra.mrb[0].mxu0 %v4171
    %v4428 = vpop.f32.mrb[0].mxu0
    %v4429 = vadd.f32 %v4168, %v4428
    %v4430 = vpop.f32.mrb[0].mxu0
    %4431 = vmatprep.mubr.f32.mxu0 0.0
    %4432 = vmatmul.mubr.f32.gmra.mrb[0].mxu0 %v4174
    %v4433 = vpop.f32.mrb[0].mxu0
    %v4434 = vadd.f32 %v4168, %v4433
    %v4435 = vpop.f32.mrb[0].mxu0
    %4436 = vmatprep.mubr.f32.mxu0 0.0
    %4437 = vmatmul.mubr.f32.gmra.mrb[0].mxu0 %v4177
    %v4438 = vpop.f32.mrb[0].mxu0
    %v4439 = vadd.f32 %v4168, %v4438
    %v4440 = vpop.f32.mrb[0].mxu0
    %4441 = vmatprep.mubr.f32.mxu0 0.0
    %4442 = vmatmul.mubr.f32.gmra.mrb[0].mxu0 %v4180
    %v4443 = vpop.f32.mrb[0].mxu0
    %v4444 = vadd.f32 %v4168, %v4443
    %v4445 = vpop.f32.mrb[0].mxu0
    %4446 = vmatprep.mubr.f32.mxu0 0.0
    %4447 = vmatmul.mubr.f32.gmra.mrb[0].mxu0 %v4183
    %v4448 = vpop.f32.mrb[0].mxu0
    %v4449 = vadd.f32 %v4168, %v4448
    %v4450 = vpop.f32.mrb[0].mxu0
    %4451 = vmatprep.mubr.f32.mxu0 0.0
    %4452 = vmatmul.mubr.f32.gmra.mrb[0].mxu0 %v4186
    %v4453 = vpop.f32.mrb[0].mxu0
    %v4454 = vadd.f32 %v4168, %v4453
    %v4455 = vpop.f32.mrb[0].mxu0
    %4456 = vmatprep.mubr.f32.mxu0 0.0
    %4457 = vmatmul.mubr.f32.gmra.mrb[0].mxu0 %v4189
    %v4458 = vpop.f32.mrb[0].mxu0
    %v4459 = vadd.f32 %v4168, %v4458
    %v4460 = vpop.f32.mrb[0].mxu0
    %4461 = vmatprep.mubr.f32.mxu0 0.0
    %4462 = vmatmul.mubr.f32.gmra.mrb[0].mxu0 %v4192
    %v4463 = vpop.f32.mrb[0].mxu0
    %v4464 = vadd.f32 %v4168, %v4463
    %v4465 = vpop.f32.mrb[0].mxu0
    %4466 = vmatprep.mubr.f32.mxu0 0.0
    %4467 = vmatmul.mubr.f32.gmra.mrb[0].mxu0 %v4195
    %v4468 = vpop.f32.mrb[0].mxu0
    %v4469 = vadd.f32 %v4168, %v4468
    %v4470 = vpop.f32.mrb[0].mxu0
    %4471 = vmatprep.mubr.f32.mxu0 0.0
    %4472 = vmatmul.mubr.f32.gmra.mrb[0].mxu0 %v4198
    %v4473 = vpop.f32.mrb[0].mxu0
    %v4474 = vadd.f32 %v4168, %v4473
    %v4475 = vpop.f32.mrb[0].mxu0
    %4476 = vmatprep.mubr.f32.mxu0 0.0
    %4477 = vmatmul.mubr.f32.gmra.mrb[0].mxu0 %v4201
    %v4478 = vpop.f32.mrb[0].mxu0
    %v4479 = vadd.f32 %v4168, %v4478
    %v4480 = vpop.f32.mrb[0].mxu0
    %4481 = vmatprep.mubr.f32.mxu0 0.0
    %4482 = vmatmul.mubr.f32.gmra.mrb[0].mxu0 %v4204
    %v4483 = vpop.f32.mrb[0].mxu0
    %v4484 = vadd.f32 %v4168, %v4483
    %v4485 = vpop.f32.mrb[0].mxu0
    %4486 = vmatprep.mubr.f32.mxu0 0.0
    %4487 = vmatmul.mubr.f32.gmra.mrb[0].mxu0 %v4207
    %v4488 = vpop.f32.mrb[0].mxu0
    %v4489 = vadd.f32 %v4168, %v4488
    %v4490 = vpop.f32.mrb[0].mxu0
    %4491 = vmatprep.mubr.f32.mxu0 0.0
    %4492 = vmatmul.mubr.f32.gmra.mrb[0].mxu0 %v4210
    %v4493 = vpop.f32.mrb[0].mxu0
    %v4494 = vadd.f32 %v4168, %v4493
    %v4495 = vpop.f32.mrb[0].mxu0
    %4496 = vmatprep.mubr.f32.mxu0 0.0
    %4497 = vmatmul.mubr.f32.gmra.mrb[0].mxu0 %v4213
    %v4498 = vpop.f32.mrb[0].mxu0
    %v4499 = vadd.f32 %v4168, %v4498
    %v4500 = vpop.f32.mrb[0].mxu0
    %4501 = vmatprep.mubr.f32.mxu0 0.0
    %4502 = vmatmul.mubr.f32.gmra.mrb[0].mxu0 %v4216
    %v4503 = vpop.f32.mrb[0].mxu0
    %v4504 = vadd.f32 %v4168, %v4503
    %v4505 = vpop.f32.mrb[0].mxu0
    %4506 = vmatprep.mubr.f32.mxu0 0.0
    %4507 = vmatmul.mubr.f32.gmra.mrb[0].mxu0 %v4219
    %v4508 = vpop.f32.mrb[0].mxu0
    %v4509 = vadd.f32 %v4168, %v4508
    %v4510 = vpop.f32.mrb[0].mxu0
    %4511 = vmatprep.mubr.f32.mxu0 0.0
    %4512 = vmatmul.mubr.f32.gmra.mrb[0].mxu0 %v4222
    %v4513 = vpop.f32.mrb[0].mxu0
    %v4514 = vadd.f32 %v4168, %v4513
    %v4515 = vpop.f32.mrb[0].mxu0
    %4516 = vmatprep.mubr.f32.mxu0 0.0
    %4517 = vmatmul.mubr.f32.gmra.mrb[0].mxu0 %v4225
    %v4518 = vpop.f32.mrb[0].mxu0
    %v4519 = vadd.f32 %v4168, %v4518
    %v4520 = vpop.f32.mrb[0].mxu0
    %4521 = vmatprep.mubr.f32.mxu0 0.0
    %4522 = vmatmul.mubr.f32.gmra.mrb[0].mxu0 %v4228
    %v4523 = vpop.f32.mrb[0].mxu0
    %v4524 = vadd.f32 %v4168, %v4523
    %v4525 = vpop.f32.mrb[0].mxu0
    %4526 = vmatprep.mubr.f32.mxu0 0.0
    %4527 = vmatmul.mubr.f32.gmra.mrb[0].mxu0 %v4231
    %v4528 = vpop.f32.mrb[0].mxu0
    %v4529 = vadd.f32 %v4168, %v4528
    %v4530 = vpop.f32.mrb[0].mxu0
    %4531 = vmatprep.mubr.f32.mxu0 0.0
    %4532 = vmatmul.mubr.f32.gmra.mrb[0].mxu0 %v4234
    %v4533 = vpop.f32.mrb[0].mxu0
    %v4534 = vadd.f32 %v4168, %v4533
    %v4535 = vpop.f32.mrb[0].mxu0
    %4536 = vmatprep.mubr.f32.mxu0 0.0
    %4537 = vmatmul.mubr.f32.gmra.mrb[0].mxu0 %v4237
    %v4538 = vpop.f32.mrb[0].mxu0
    %v4539 = vadd.f32 %v4168, %v4538
    %v4540 = vpop.f32.mrb[0].mxu0
    %4541 = vmatprep.mubr.f32.mxu0 0.0
    %4542 = vmatmul.mubr.f32.gmra.mrb[0].mxu0 %v4240
    %v4543 = vpop.f32.mrb[0].mxu0
    %v4544 = vadd.f32 %v4168, %v4543
    %v4545 = vpop.f32.mrb[0].mxu0
    %4546 = vmatprep.mubr.f32.mxu0 0.0
    %4547 = vmatmul.mubr.f32.gmra.mrb[0].mxu0 %v4243
    %v4548 = vpop.f32.mrb[0].mxu0
    %v4549 = vadd.f32 %v4168, %v4548
    %v4550 = vpop.f32.mrb[0].mxu0
    %4551 = vmatprep.mubr.f32.mxu0 0.0
    %4552 = vmatmul.mubr.f32.gmra.mrb[0].mxu0 %v4246
    %v4553 = vpop.f32.mrb[0].mxu0
    %v4554 = vadd.f32 %v4168, %v4553
    %v4555 = vpop.f32.mrb[0].mxu0
    %4556 = vmatprep.mubr.f32.mxu0 0.0
    %4557 = vmatmul.mubr.f32.gmra.mrb[0].mxu0 %v4249
    %v4558 = vpop.f32.mrb[0].mxu0
    %v4559 = vadd.f32 %v4168, %v4558
    %v4560 = vpop.f32.mrb[0].mxu0
    %4561 = vmatprep.mubr.f32.mxu0 0.0
    %4562 = vmatmul.mubr.f32.gmra.mrb[0].mxu0 %v4252
    %v4563 = vpop.f32.mrb[0].mxu0
    %v4564 = vadd.f32 %v4168, %v4563
    %v4565 = vpop.f32.mrb[0].mxu0
    %4566 = vmatprep.mubr.f32.mxu0 0.0
    %4567 = vmatmul.mubr.f32.gmra.mrb[0].mxu0 %v4255
    %v4568 = vpop.f32.mrb[0].mxu0
    %v4569 = vadd.f32 %v4168, %v4568
    %v4570 = vpop.f32.mrb[0].mxu0
    %4571 = vmatprep.mubr.f32.mxu0 0.0
    %4572 = vmatmul.mubr.f32.gmra.mrb[0].mxu0 %v4258
    %v4573 = vpop.f32.mrb[0].mxu0
    %v4574 = vadd.f32 %v4168, %v4573
    %v4575 = vpop.f32.mrb[0].mxu0
    %4576 = vmatprep.mubr.f32.mxu0 0.0
    %4577 = vmatmul.mubr.f32.gmra.mrb[0].mxu0 %v4261
    %v4578 = vpop.f32.mrb[0].mxu0
    %v4579 = vadd.f32 %v4168, %v4578
    %v4580 = vpop.f32.mrb[0].mxu0
    %4581 = vmatprep.mubr.f32.mxu0 0.0
    %4582 = vmatmul.mubr.f32.gmra.mrb[0].mxu0 %v4264
    %v4583 = vpop.f32.mrb[0].mxu0
    %v4584 = vadd.f32 %v4168, %v4583
    %v4585 = vpop.f32.mrb[0].mxu0
    %4586 = vmatprep.mubr.f32.mxu0 0.0
    %4587 = vmatmul.mubr.f32.gmra.mrb[0].mxu0 %v4267
    %v4588 = vpop.f32.mrb[0].mxu0
    %v4589 = vadd.f32 %v4168, %v4588
    %v4590 = vpop.f32.mrb[0].mxu0
    %4591 = vmatprep.mubr.f32.mxu0 0.0
    %4592 = vmatmul.mubr.f32.gmra.mrb[0].mxu0 %v4270
    %v4593 = vpop.f32.mrb[0].mxu0
    %v4594 = vadd.f32 %v4168, %v4593
    %v4595 = vpop.f32.mrb[0].mxu0
    %4596 = vmatprep.mubr.f32.mxu0 0.0
    %4597 = vmatmul.mubr.f32.gmra.mrb[0].mxu0 %v4273
    %v4598 = vpop.f32.mrb[0].mxu0
    %v4599 = vadd.f32 %v4168, %v4598
    %v4600 = vpop.f32.mrb[0].mxu0
    %4601 = vmatprep.mubr.f32.mxu0 0.0
    %4602 = vmatmul.mubr.f32.gmra.mrb[0].mxu0 %v4276
    %v4603 = vpop.f32.mrb[0].mxu0
    %v4604 = vadd.f32 %v4168, %v4603
    %v4605 = vpop.f32.mrb[0].mxu0
    %4606 = vmatprep.mubr.f32.mxu0 0.0
    %4607 = vmatmul.mubr.f32.gmra.mrb[0].mxu0 %v4279
    %v4608 = vpop.f32.mrb[0].mxu0
    %v4609 = vadd.f32 %v4168, %v4608
    %v4610 = vpop.f32.mrb[0].mxu0
    %4611 = vmatprep.mubr.f32.mxu0 0.0
    %4612 = vmatmul.mubr.f32.gmra.mrb[0].mxu0 %v4282
    %v4613 = vpop.f32.mrb[0].mxu0
    %v4614 = vadd.f32 %v4168, %v4613
    %v4615 = vpop.f32.mrb[0].mxu0
    %4616 = vmatprep.mubr.f32.mxu0 0.0
    %4617 = vmatmul.mubr.f32.gmra.mrb[0].mxu0 %v4285
    %v4618 = vpop.f32.mrb[0].mxu0
    %v4619 = vadd.f32 %v4168, %v4618
    %v4620 = vpop.f32.mrb[0].mxu0
    %4621 = vmatprep.mubr.f32.mxu0 0.0
    %4622 = vmatmul.mubr.f32.gmra.mrb[0].mxu0 %v4288
    %v4623 = vpop.f32.mrb[0].mxu0
    %v4624 = vadd.f32 %v4168, %v4623
    %v4625 = vpop.f32.mrb[0].mxu0
    %4626 = vmatprep.mubr.f32.mxu0 0.0
    %4627 = vmatmul.mubr.f32.gmra.mrb[0].mxu0 %v4291
    %v4628 = vpop.f32.mrb[0].mxu0
    %v4629 = vadd.f32 %v4168, %v4628
    %v4630 = vpop.f32.mrb[0].mxu0
    %4631 = vmatprep.mubr.f32.mxu0 0.0
    %4632 = vmatmul.mubr.f32.gmra.mrb[0].mxu0 %v4294
    %v4633 = vpop.f32.mrb[0].mxu0
    %v4634 = vadd.f32 %v4168, %v4633
    %v4635 = vpop.f32.mrb[0].mxu0
    %4636 = vmatprep.mubr.f32.mxu0 0.0
    %4637 = vmatmul.mubr.f32.gmra.mrb[0].mxu0 %v4297
    %v4638 = vpop.f32.mrb[0].mxu0
    %v4639 = vadd.f32 %v4168, %v4638
    %v4640 = vpop.f32.mrb[0].mxu0
    %4641 = vmatprep.mubr.f32.mxu0 0.0
    %4642 = vmatmul.mubr.f32.gmra.mrb[0].mxu0 %v4300
    %v4643 = vpop.f32.mrb[0].mxu0
    %v4644 = vadd.f32 %v4168, %v4643
    %v4645 = vpop.f32.mrb[0].mxu0
    %4646 = vmatprep.mubr.f32.mxu0 0.0
    %4647 = vmatmul.mubr.f32.gmra.mrb[0].mxu0 %v4303
    %v4648 = vpop.f32.mrb[0].mxu0
    %v4649 = vadd.f32 %v4168, %v4648
    %v4650 = vpop.f32.mrb[0].mxu0
    %4651 = vmatprep.mubr.f32.mxu0 0.0
    %4652 = vmatmul.mubr.f32.gmra.mrb[0].mxu0 %v4306
    %v4653 = vpop.f32.mrb[0].mxu0
    %v4654 = vadd.f32 %v4168, %v4653
    %v4655 = vpop.f32.mrb[0].mxu0
    %4656 = vmatprep.mubr.f32.mxu0 0.0
    %4657 = vmatmul.mubr.f32.gmra.mrb[0].mxu0 %v4309
    %v4658 = vpop.f32.mrb[0].mxu0
    %v4659 = vadd.f32 %v4168, %v4658
    %v4660 = vpop.f32.mrb[0].mxu0
    %4661 = vmatprep.mubr.f32.mxu0 0.0
    %4662 = vmatmul.mubr.f32.gmra.mrb[0].mxu0 %v4312
    %v4663 = vpop.f32.mrb[0].mxu0
    %v4664 = vadd.f32 %v4168, %v4663
    %v4665 = vpop.f32.mrb[0].mxu0
    %4666 = vmatprep.mubr.f32.mxu0 0.0
    %4667 = vmatmul.mubr.f32.gmra.mrb[0].mxu0 %v4315
    %v4668 = vpop.f32.mrb[0].mxu0
    %v4669 = vadd.f32 %v4168, %v4668
    %v4670 = vpop.f32.mrb[0].mxu0
    %4671 = vmatprep.mubr.f32.mxu0 0.0
    %4672 = vmatmul.mubr.f32.gmra.mrb[0].mxu0 %v4318
    %v4673 = vpop.f32.mrb[0].mxu0
    %v4674 = vadd.f32 %v4168, %v4673
    %v4675 = vpop.f32.mrb[0].mxu0
    %4676 = vmatprep.mubr.f32.mxu0 0.0
    %4677 = vmatmul.mubr.f32.gmra.mrb[0].mxu0 %v4321
    %v4678 = vpop.f32.mrb[0].mxu0
    %v4679 = vadd.f32 %v4168, %v4678
    %v4680 = vpop.f32.mrb[0].mxu0
    %4681 = vmatprep.mubr.f32.mxu0 0.0
    %4682 = vmatmul.mubr.f32.gmra.mrb[0].mxu0 %v4324
    %v4683 = vpop.f32.mrb[0].mxu0
    %v4684 = vadd.f32 %v4168, %v4683
    %v4685 = vpop.f32.mrb[0].mxu0
    %4686 = vmatprep.mubr.f32.mxu0 0.0
    %4687 = vmatmul.mubr.f32.gmra.mrb[0].mxu0 %v4327
    %v4688 = vpop.f32.mrb[0].mxu0
    %v4689 = vadd.f32 %v4168, %v4688
    %v4690 = vpop.f32.mrb[0].mxu0
    %4691 = vmatprep.mubr.f32.mxu0 0.0
    %4692 = vmatmul.mubr.f32.gmra.mrb[0].mxu0 %v4330
    %v4693 = vpop.f32.mrb[0].mxu0
    %v4694 = vadd.f32 %v4168, %v4693
    %v4695 = vpop.f32.mrb[0].mxu0
    %4696 = vmatprep.mubr.f32.mxu0 0.0
    %4697 = vmatmul.mubr.f32.gmra.mrb[0].mxu0 %v4333
    %v4698 = vpop.f32.mrb[0].mxu0
    %v4699 = vadd.f32 %v4168, %v4698
    %v4700 = vpop.f32.mrb[0].mxu0
    %4701 = vmatprep.mubr.f32.mxu0 0.0
    %4702 = vmatmul.mubr.f32.gmra.mrb[0].mxu0 %v4336
    %v4703 = vpop.f32.mrb[0].mxu0
    %v4704 = vadd.f32 %v4168, %v4703
    %v4705 = vpop.f32.mrb[0].mxu0
    %4706 = vmatprep.mubr.f32.mxu0 0.0
    %4707 = vmatmul.mubr.f32.gmra.mrb[0].mxu0 %v4339
    %v4708 = vpop.f32.mrb[0].mxu0
    %v4709 = vadd.f32 %v4168, %v4708
    %v4710 = vpop.f32.mrb[0].mxu0
    %4711 = vmatprep.mubr.f32.mxu0 0.0
    %4712 = vmatmul.mubr.f32.gmra.mrb[0].mxu0 %v4342
    %v4713 = vpop.f32.mrb[0].mxu0
    %v4714 = vadd.f32 %v4168, %v4713
    %v4715 = vpop.f32.mrb[0].mxu0
    %4716 = vmatprep.mubr.f32.mxu0 0.0
    %4717 = vmatmul.mubr.f32.gmra.mrb[0].mxu0 %v4345
    %v4718 = vpop.f32.mrb[0].mxu0
    %v4719 = vadd.f32 %v4168, %v4718
    %v4720 = vpop.f32.mrb[0].mxu0
    %4721 = vmatprep.mubr.f32.mxu0 0.0
    %4722 = vmatmul.mubr.f32.gmra.mrb[0].mxu0 %v4348
    %v4723 = vpop.f32.mrb[0].mxu0
    %v4724 = vadd.f32 %v4168, %v4723
    %v4725 = vpop.f32.mrb[0].mxu0
    %4726 = vmatprep.mubr.f32.mxu0 0.0
    %4727 = vmatmul.mubr.f32.gmra.mrb[0].mxu0 %v4351
    %v4728 = vpop.f32.mrb[0].mxu0
    %v4729 = vadd.f32 %v4168, %v4728
    %v4730 = vpop.f32.mrb[0].mxu0
    %4731 = vmatprep.mubr.f32.mxu0 0.0
    %4732 = vmatmul.mubr.f32.gmra.mrb[0].mxu0 %v4354
    %v4733 = vpop.f32.mrb[0].mxu0
    %v4734 = vadd.f32 %v4168, %v4733
    %v4735 = vpop.f32.mrb[0].mxu0
    %4736 = vmatprep.mubr.f32.mxu0 0.0
    %4737 = vmatmul.mubr.f32.gmra.mrb[0].mxu0 %v4357
    %v4738 = vpop.f32.mrb[0].mxu0
    %v4739 = vadd.f32 %v4168, %v4738
    %v4740 = vpop.f32.mrb[0].mxu0
    %4741 = vmatprep.mubr.f32.mxu0 0.0
    %4742 = vmatmul.mubr.f32.gmra.mrb[0].mxu0 %v4360
    %v4743 = vpop.f32.mrb[0].mxu0
    %v4744 = vadd.f32 %v4168, %v4743
    %v4745 = vpop.f32.mrb[0].mxu0
    %4746 = vdwg.mxu0
    %v4747 = vadd.f32 %v4429, %v169
    %v4748 = vadd.f32 %v4434, %v170
    %v4749 = vadd.f32 %v4439, %v171
    %v4750 = vadd.f32 %v4444, %v172
    %v4751 = vadd.f32 %v4449, %v173
    %v4752 = vadd.f32 %v4454, %v174
    %v4753 = vadd.f32 %v4459, %v175
    %v4754 = vadd.f32 %v4464, %v176
    %v4755 = vadd.f32 %v4469, %v177
    %v4756 = vadd.f32 %v4474, %v178
    %v4757 = vadd.f32 %v4479, %v179
    %v4758 = vadd.f32 %v4484, %v180
    %v4759 = vadd.f32 %v4489, %v181
    %v4760 = vadd.f32 %v4494, %v182
    %v4761 = vadd.f32 %v4499, %v183
    %v4762 = vadd.f32 %v4504, %v184
    %v4763 = vadd.f32 %v4509, %v185
    %v4764 = vadd.f32 %v4514, %v186
    %v4765 = vadd.f32 %v4519, %v187
    %v4766 = vadd.f32 %v4524, %v188
    %v4767 = vadd.f32 %v4529, %v189
    %v4768 = vadd.f32 %v4534, %v190
    %v4769 = vadd.f32 %v4539, %v191
    %v4770 = vadd.f32 %v4544, %v192
    %v4771 = vadd.f32 %v4549, %v193
    %v4772 = vadd.f32 %v4554, %v194
    %v4773 = vadd.f32 %v4559, %v195
    %v4774 = vadd.f32 %v4564, %v196
    %v4775 = vadd.f32 %v4569, %v197
    %v4776 = vadd.f32 %v4574, %v198
    %v4777 = vadd.f32 %v4579, %v199
    %v4778 = vadd.f32 %v4584, %v200
    %v4779 = vadd.f32 %v4589, %v201
    %v4780 = vadd.f32 %v4594, %v202
    %v4781 = vadd.f32 %v4599, %v203
    %v4782 = vadd.f32 %v4604, %v204
    %v4783 = vadd.f32 %v4609, %v205
    %v4784 = vadd.f32 %v4614, %v206
    %v4785 = vadd.f32 %v4619, %v207
    %v4786 = vadd.f32 %v4624, %v208
    %v4787 = vadd.f32 %v4629, %v209
    %v4788 = vadd.f32 %v4634, %v210
    %v4789 = vadd.f32 %v4639, %v211
    %v4790 = vadd.f32 %v4644, %v212
    %v4791 = vadd.f32 %v4649, %v213
    %v4792 = vadd.f32 %v4654, %v214
    %v4793 = vadd.f32 %v4659, %v215
    %v4794 = vadd.f32 %v4664, %v216
    %v4795 = vadd.f32 %v4669, %v217
    %v4796 = vadd.f32 %v4674, %v218
    %v4797 = vadd.f32 %v4679, %v219
    %v4798 = vadd.f32 %v4684, %v220
    %v4799 = vadd.f32 %v4689, %v221
    %v4800 = vadd.f32 %v4694, %v222
    %v4801 = vadd.f32 %v4699, %v223
    %v4802 = vadd.f32 %v4704, %v224
    %v4803 = vadd.f32 %v4709, %v225
    %v4804 = vadd.f32 %v4714, %v226
    %v4805 = vadd.f32 %v4719, %v227
    %v4806 = vadd.f32 %v4724, %v228
    %v4807 = vadd.f32 %v4729, %v229
    %v4808 = vadd.f32 %v4734, %v230
    %v4809 = vadd.f32 %v4739, %v231
    %v4810 = vadd.f32 %v4744, %v232
    %4811 = vst.msk [vmem:[#allocation11] sm:$0xff] %vm88, %v4747
    %4812 = vst.msk [vmem:[#allocation11 + $0x8] sm:$0xff] %vm88, %v4748
    %4813 = vst.msk [vmem:[#allocation11 + $0x10] sm:$0xff] %vm88, %v4749
    %4814 = vst.msk [vmem:[#allocation11 + $0x18] sm:$0xff] %vm88, %v4750
    %4815 = vst.msk [vmem:[#allocation11 + $0x20] sm:$0xff] %vm88, %v4751
    %4816 = vst.msk [vmem:[#allocation11 + $0x28] sm:$0xff] %vm88, %v4752
    %4817 = vst.msk [vmem:[#allocation11 + $0x30] sm:$0xff] %vm88, %v4753
    %4818 = vst.msk [vmem:[#allocation11 + $0x38] sm:$0xff] %vm88, %v4754
    %4819 = vst.msk [vmem:[#allocation11 + $0x40] sm:$0xff] %vm88, %v4755
    %4820 = vst.msk [vmem:[#allocation11 + $0x48] sm:$0xff] %vm88, %v4756
    %4821 = vst.msk [vmem:[#allocation11 + $0x50] sm:$0xff] %vm88, %v4757
    %4822 = vst.msk [vmem:[#allocation11 + $0x58] sm:$0xff] %vm88, %v4758
    %4823 = vst.msk [vmem:[#allocation11 + $0x60] sm:$0xff] %vm88, %v4759
    %4824 = vst.msk [vmem:[#allocation11 + $0x68] sm:$0xff] %vm88, %v4760
    %4825 = vst.msk [vmem:[#allocation11 + $0x70] sm:$0xff] %vm88, %v4761
    %4826 = vst.msk [vmem:[#allocation11 + $0x78] sm:$0xff] %vm88, %v4762
    %4827 = vst.msk [vmem:[#allocation11 + $0x80] sm:$0xff] %vm88, %v4763
    %4828 = vst.msk [vmem:[#allocation11 + $0x88] sm:$0xff] %vm88, %v4764
    %4829 = vst.msk [vmem:[#allocation11 + $0x90] sm:$0xff] %vm88, %v4765
    %4830 = vst.msk [vmem:[#allocation11 + $0x98] sm:$0xff] %vm88, %v4766
    %4831 = vst.msk [vmem:[#allocation11 + $0xa0] sm:$0xff] %vm88, %v4767
    %4832 = vst.msk [vmem:[#allocation11 + $0xa8] sm:$0xff] %vm88, %v4768
    %4833 = vst.msk [vmem:[#allocation11 + $0xb0] sm:$0xff] %vm88, %v4769
    %4834 = vst.msk [vmem:[#allocation11 + $0xb8] sm:$0xff] %vm88, %v4770
    %4835 = vst.msk [vmem:[#allocation11 + $0xc0] sm:$0xff] %vm88, %v4771
    %4836 = vst.msk [vmem:[#allocation11 + $0xc8] sm:$0xff] %vm88, %v4772
    %4837 = vst.msk [vmem:[#allocation11 + $0xd0] sm:$0xff] %vm88, %v4773
    %4838 = vst.msk [vmem:[#allocation11 + $0xd8] sm:$0xff] %vm88, %v4774
    %4839 = vst.msk [vmem:[#allocation11 + $0xe0] sm:$0xff] %vm88, %v4775
    %4840 = vst.msk [vmem:[#allocation11 + $0xe8] sm:$0xff] %vm88, %v4776
    %4841 = vst.msk [vmem:[#allocation11 + $0xf0] sm:$0xff] %vm88, %v4777
    %4842 = vst.msk [vmem:[#allocation11 + $0xf8] sm:$0xff] %vm88, %v4778
    %4843 = vst.msk [vmem:[#allocation11 + $0x100] sm:$0xff] %vm88, %v4779
    %4844 = vst.msk [vmem:[#allocation11 + $0x108] sm:$0xff] %vm88, %v4780
    %4845 = vst.msk [vmem:[#allocation11 + $0x110] sm:$0xff] %vm88, %v4781
    %4846 = vst.msk [vmem:[#allocation11 + $0x118] sm:$0xff] %vm88, %v4782
    %4847 = vst.msk [vmem:[#allocation11 + $0x120] sm:$0xff] %vm88, %v4783
    %4848 = vst.msk [vmem:[#allocation11 + $0x128] sm:$0xff] %vm88, %v4784
    %4849 = vst.msk [vmem:[#allocation11 + $0x130] sm:$0xff] %vm88, %v4785
    %4850 = vst.msk [vmem:[#allocation11 + $0x138] sm:$0xff] %vm88, %v4786
    %4851 = vst.msk [vmem:[#allocation11 + $0x140] sm:$0xff] %vm88, %v4787
    %4852 = vst.msk [vmem:[#allocation11 + $0x148] sm:$0xff] %vm88, %v4788
    %4853 = vst.msk [vmem:[#allocation11 + $0x150] sm:$0xff] %vm88, %v4789
    %4854 = vst.msk [vmem:[#allocation11 + $0x158] sm:$0xff] %vm88, %v4790
    %4855 = vst.msk [vmem:[#allocation11 + $0x160] sm:$0xff] %vm88, %v4791
    %4856 = vst.msk [vmem:[#allocation11 + $0x168] sm:$0xff] %vm88, %v4792
    %4857 = vst.msk [vmem:[#allocation11 + $0x170] sm:$0xff] %vm88, %v4793
    %4858 = vst.msk [vmem:[#allocation11 + $0x178] sm:$0xff] %vm88, %v4794
    %4859 = vst.msk [vmem:[#allocation11 + $0x180] sm:$0xff] %vm88, %v4795
    %4860 = vst.msk [vmem:[#allocation11 + $0x188] sm:$0xff] %vm88, %v4796
    %4861 = vst.msk [vmem:[#allocation11 + $0x190] sm:$0xff] %vm88, %v4797
    %4862 = vst.msk [vmem:[#allocation11 + $0x198] sm:$0xff] %vm88, %v4798
    %4863 = vst.msk [vmem:[#allocation11 + $0x1a0] sm:$0xff] %vm88, %v4799
    %4864 = vst.msk [vmem:[#allocation11 + $0x1a8] sm:$0xff] %vm88, %v4800
    %4865 = vst.msk [vmem:[#allocation11 + $0x1b0] sm:$0xff] %vm88, %v4801
    %4866 = vst.msk [vmem:[#allocation11 + $0x1b8] sm:$0xff] %vm88, %v4802
    %4867 = vst.msk [vmem:[#allocation11 + $0x1c0] sm:$0xff] %vm88, %v4803
    %4868 = vst.msk [vmem:[#allocation11 + $0x1c8] sm:$0xff] %vm88, %v4804
    %4869 = vst.msk [vmem:[#allocation11 + $0x1d0] sm:$0xff] %vm88, %v4805
    %4870 = vst.msk [vmem:[#allocation11 + $0x1d8] sm:$0xff] %vm88, %v4806
    %4871 = vst.msk [vmem:[#allocation11 + $0x1e0] sm:$0xff] %vm88, %v4807
    %4872 = vst.msk [vmem:[#allocation11 + $0x1e8] sm:$0xff] %vm88, %v4808
    %4873 = vst.msk [vmem:[#allocation11 + $0x1f0] sm:$0xff] %vm88, %v4809
    %4874 = vst.msk [vmem:[#allocation11 + $0x1f8] sm:$0xff] %vm88, %v4810
    // Predicated region
    $region54: #{tpu_custom_call.1} parent=1 // pred_check
      _
    $region55: #{tpu_custom_call.1} parent=1 // pred_check_branch
      %4876 = sbr.rel (0) target = $region57
    $region56: #{tpu_custom_call.1} parent=1 // pred_region
      %s4878 = ssub.s32 8192, 8192
      %4879 = vsyncadd [#allocation5], %s4878
      %s4880 = sshll.u32 [#allocation11], 4
      %s4881 = int_to_ptr.vmem [resolvable:$true] %s4880
      %4886 = dma.vmem_to_hbm [thread:$0]  %s4881, 8192, %s9, [#allocation5], 128, 128, 8
    $region57: #{tpu_custom_call.1} parent=1 // pred_fallthru
      _
    // Predicated region
    $region58: #{tpu_custom_call.1} parent=1 // pred_check
      _
    $region59: #{tpu_custom_call.1} parent=1 // pred_check_branch
      %4888 = sbr.rel (0) target = $region61
    $region60: #{tpu_custom_call.1} parent=1 // pred_region
      %4889 = dma.done [#allocation5], 8192
    $region61: #{tpu_custom_call.1} parent=1 // pred_fallthru
      _
    %4890 = vsyncpa [#allocation4], 1
    %4891 = vsyncpa [#allocation7], 1
    %4892 = vsyncpa [#allocation10], 1
    %4893 = vsyncpa [#allocation5], 1

</llo_original>
